<compile_context>
chip_gen: v5e
topology: v5e:2x2
jax: 0.10.0
libtpu: 0.0.40
codegen_flags: <defaults>
</compile_context>

<pallas_src>
import math
import numpy as np
import jax
import jax.numpy as jnp
from jax.experimental import pallas as pl
from jax.experimental.pallas import tpu as pltpu  # noqa: F401  (kept for the v7x TODO above)

# ---- config (mirrors the argparse args the module reads) -------------------
TOKEN_D_SIZE = 3        # D: number of independent variates / channels
TOKEN_T_SIZE = 16       # token_size == d_model
TOKEN_T_OVERLAP = 8
SEQ_LEN = 32
NHEAD = 4
NUM_LAYERS = 2

D_MODEL = TOKEN_T_SIZE
HEAD_DIM = D_MODEL // NHEAD
STRIDE = TOKEN_T_SIZE - TOKEN_T_OVERLAP
NUM_PATCHES = (SEQ_LEN - TOKEN_T_SIZE) // STRIDE + 1   # (L - T) // (T - overlap) + 1


def _layernorm(x, gamma, beta, eps=1e-5):
    mu = jnp.mean(x, axis=-1, keepdims=True)
    var = jnp.mean(jnp.square(x - mu), axis=-1, keepdims=True)
    return (x - mu) * jax.lax.rsqrt(var + eps) * gamma + beta


# ---- Pallas kernel (single invocation, everything resident in VMEM) ---------
def _kernel(rows_ref, w48_ref, wqkv_ref, wrec_ref, vec48_ref, vec144_ref, out_ref):
    dm, H, hd, P, D, NL, S = (D_MODEL, NHEAD, HEAD_DIM, NUM_PATCHES,
                              TOKEN_D_SIZE, NUM_LAYERS, SEQ_LEN)
    R = rows_ref.shape[0]            # B*P rows, ordered patch-major / batch-minor
    B = R // P
    C = D * dm                       # packed lane width (48)
    scale = 1.0 / math.sqrt(hd)

    a_avg = w48_ref[1]               # (C, C) block-averaging matrix (per-channel LN stats)

    def blocknorm(x, gamma, beta):
        # per-channel (16-lane block) LayerNorm via block-averaging matmuls
        mu = jnp.dot(x, a_avg, preferred_element_type=jnp.float32)
        c = x - mu
        var = jnp.dot(c * c, a_avg, preferred_element_type=jnp.float32)
        return c * jax.lax.rsqrt(var + 1e-5) * gamma + beta

    # ---- patch embedding; positional encoding + bias folded into per-row bias slab ----
    h = jnp.dot(rows_ref[...], w48_ref[0], preferred_element_type=jnp.float32)
    h = h + vec48_ref[pl.ds(0, R), :]                                   # (R, C)

    # precomputed additive cross-batch attention mask (0 / -1e30), (R, R)
    attn_mask = vec144_ref[pl.ds(NL + 1, R), :][:, 0:R]

    for l in range(NL):                                                 # static unroll
        voff = R + 7 * l
        woff = 2 + 3 * l

        # --- fused QKV projection for all channels & heads: (R,C) @ (C,3C) ---
        qkv = jnp.dot(h, wqkv_ref[l], preferred_element_type=jnp.float32)
        qkv = qkv + vec144_ref[pl.ds(l, 1), :]

        # --- per-(channel, head) attention on tiny tiles (static lane slices) ---
        ctx_parts = []
        for d in range(D):
            base = d * 3 * dm
            for hh in range(H):
                qh = qkv[:, base + hh * hd:base + (hh + 1) * hd]
                kh = qkv[:, base + dm + hh * hd:base + dm + (hh + 1) * hd]
                vh = qkv[:, base + 2 * dm + hh * hd:base + 2 * dm + (hh + 1) * hd]
                s = jnp.einsum('qe,ke->qk', qh, kh,
                               preferred_element_type=jnp.float32) * scale + attn_mask
                m = jnp.max(s, axis=-1, keepdims=True)
                p = jnp.exp(s - m)
                denom = jnp.sum(p, axis=-1, keepdims=True)
                p = p * pl.reciprocal(denom, approx=True)
                ctx_parts.append(jnp.dot(p, vh, preferred_element_type=jnp.float32))
        ctx = jnp.concatenate(ctx_parts, axis=-1)                       # (R, C)

        # --- fused out-projection (block-diag over channels) + residual + norm1 ---
        attn = jnp.dot(ctx, w48_ref[woff + 0], preferred_element_type=jnp.float32)
        attn = attn + vec48_ref[pl.ds(voff + 0, 1), :]
        h1 = blocknorm(h + attn,
                       vec48_ref[pl.ds(voff + 3, 1), :],
                       vec48_ref[pl.ds(voff + 4, 1), :])

        # --- feed-forward (block-diag) + residual + norm2 ---
        ff = jnp.dot(h1, w48_ref[woff + 1], preferred_element_type=jnp.float32)
        ff = jnp.maximum(ff + vec48_ref[pl.ds(voff + 1, 1), :], 0.0)
        ff = jnp.dot(ff, w48_ref[woff + 2], preferred_element_type=jnp.float32)
        ff = ff + vec48_ref[pl.ds(voff + 2, 1), :]
        h = blocknorm(h1 + ff,
                      vec48_ref[pl.ds(voff + 5, 1), :],
                      vec48_ref[pl.ds(voff + 6, 1), :])

    # ---- reconstructor: sum over patches of (B,C)@(C,D*S); single lane-dense store ----
    out = vec144_ref[pl.ds(NL, 1), :][:, 0:D * S]                       # (1, D*S) bias
    for p in range(P):
        out = out + jnp.dot(h[p * B:(p + 1) * B, :], wrec_ref[p],
                            preferred_element_type=jnp.float32)
    out_ref[...] = out                                                  # (B, D*S)


# ---- wrapper-side parameter packing (tiny JAX glue, traced under jit) -------
def _pack_params(params, batch_size):
    D, NL, dm, T, P, S = (TOKEN_D_SIZE, NUM_LAYERS, D_MODEL, TOKEN_T_SIZE,
                          NUM_PATCHES, SEQ_LEN)
    B = batch_size
    R = B * P
    C = D * dm

    def bdiag(blocks):
        rr = sum(b.shape[0] for b in blocks)
        cc = sum(b.shape[1] for b in blocks)
        out = jnp.zeros((rr, cc), jnp.float32)
        ro = co = 0
        for b in blocks:
            out = out.at[ro:ro + b.shape[0], co:co + b.shape[1]].set(b)
            ro += b.shape[0]
            co += b.shape[1]
        return out

    # (C,C) slab: [Wemb, A_avg, per layer: Wo, W1, W2]
    a_avg = jnp.asarray(np.kron(np.eye(D, dtype=np.float32),
                                np.full((dm, dm), 1.0 / dm, np.float32)))
    w48 = [bdiag([params['we'][d].T for d in range(D)]), a_avg]
    wqkv, vec48, bqkv_rows = [], [], []
    for l in range(NL):
        w48 += [bdiag([params['ow'][d, l].T for d in range(D)]),
                bdiag([params['l1w'][d, l].T for d in range(D)]),
                bdiag([params['l2w'][d, l].T for d in range(D)])]
        wqkv.append(bdiag([params['inw'][d, l].T for d in range(D)]))
        bqkv_rows.append(jnp.concatenate([params['inb'][d, l] for d in range(D)]))
        vec48 += [jnp.concatenate([params[k][d, l] for d in range(D)])
                  for k in ('ob', 'l1b', 'l2b', 'n1g', 'n1b', 'n2g', 'n2b')]
    w48 = jnp.stack(w48)                                    # (2+3*NL, C, C)
    wqkv = jnp.stack(wqkv)                                  # (NL, C, 3C)

    # embedding bias rows: lane-packed bias + positional encoding, row = p*B + b
    be = jnp.concatenate([params['be'][d] for d in range(D)])           # (C,)
    pe_lanes = jnp.tile(params['pe'], (1, D))                           # (P, C)
    emb_bias = jnp.repeat(pe_lanes, B, axis=0) + be[None, :]            # (R, C)
    vec48 = jnp.concatenate([emb_bias, jnp.stack(vec48)], axis=0)       # (R + 7*NL, C)

    # reconstructor: per-patch (C, D*S) block-diagonal weights
    full = jnp.zeros((P, D, dm, D, S), jnp.float32)
    for d in range(D):
        full = full.at[:, d, :, d, :].set(params['wr'][d].reshape(P, dm, S))
    wrec = full.reshape(P, C, D * S)                                    # (P, C, D*S)

    # 144-wide slab: [bqkv per layer, brec (padded), additive attention-mask rows]
    brec = jnp.concatenate([params['br'][d] for d in range(D)])         # (D*S,)
    brec_pad = jnp.concatenate([brec, jnp.zeros((3 * C - D * S,), jnp.float32)])
    bmask = np.full((R, 3 * C), 0.0, np.float32)
    batch_of_row = np.arange(R) % B
    bmask[:, :R] = np.where(batch_of_row[:, None] == batch_of_row[None, :],
                            0.0, -1e30).astype(np.float32)
    vec144 = jnp.concatenate([jnp.stack(bqkv_rows), brec_pad[None, :],
                              jnp.asarray(bmask)], axis=0)              # (NL+1+R, 3C)

    return w48, wqkv, wrec, vec48, vec144


def forward(x, params, mask=None):
    """Pallas implementation of IndependentTransformerEncoder.forward."""
    B, D_, L = x.shape
    T, P, S = TOKEN_T_SIZE, NUM_PATCHES, SEQ_LEN

    # mask / mask_token (glue)
    xm = x if mask is None else jnp.where(mask, x, params['mask_token'][0])

    # unfold via static strided slices (no gather); rows ordered p-major / b-minor
    patches = jnp.stack([xm[:, :, p * STRIDE:p * STRIDE + T] for p in range(P)],
                        axis=0)                                         # (P, B, D, T)
    rows = patches.reshape(P * B, D_ * T)                               # (B*P, D*T)

    w48, wqkv, wrec, vec48, vec144 = _pack_params(params, B)

    out_flat = pl.pallas_call(
        _kernel,
        out_shape=jax.ShapeDtypeStruct((B, D_ * S), jnp.float32),
    )(rows, w48, wqkv, wrec, vec48, vec144)

    return out_flat.reshape(B, D_, S)                                   # (B, D, seq_len)


# ---- independent pure-JAX reference (standard per-channel MHA formulation) ---
def ref_forward(x, params, mask=None):
    B, D_, L = x.shape
    dm, T, P, S, NL_, H, hd = (D_MODEL, TOKEN_T_SIZE, NUM_PATCHES, SEQ_LEN,
                               NUM_LAYERS, NHEAD, HEAD_DIM)
    xm = x if mask is None else jnp.where(mask, x, params['mask_token'][0])
    idx = (np.arange(P) * STRIDE)[:, None] + np.arange(T)[None, :]
    patches = xm[:, :, idx]                                # (B, D, P, T)

    outs = []
    for d in range(D_):
        h = patches[:, d] @ params['we'][d].T + params['be'][d]
        h = h + params['pe']
        for l in range(NL_):
            inw, inb = params['inw'][d, l], params['inb'][d, l]
            q = h @ inw[:dm].T + inb[:dm]
            k = h @ inw[dm:2 * dm].T + inb[dm:2 * dm]
            v = h @ inw[2 * dm:].T + inb[2 * dm:]
            qh = q.reshape(B, P, H, hd).transpose(0, 2, 1, 3)
            kh = k.reshape(B, P, H, hd).transpose(0, 2, 1, 3)
            vh = v.reshape(B, P, H, hd).transpose(0, 2, 1, 3)
            s = jnp.einsum('bhqe,bhke->bhqk', qh, kh) / math.sqrt(hd)
            a = jax.nn.softmax(s, axis=-1)
            ctx = jnp.einsum('bhqk,bhke->bhqe', a, vh).transpose(0, 2, 1, 3).reshape(B, P, dm)
            attn = ctx @ params['ow'][d, l].T + params['ob'][d, l]
            h1 = _layernorm(h + attn, params['n1g'][d, l], params['n1b'][d, l])
            ff = jnp.maximum(h1 @ params['l1w'][d, l].T + params['l1b'][d, l], 0.0)
            ff = ff @ params['l2w'][d, l].T + params['l2b'][d, l]
            h = _layernorm(h1 + ff, params['n2g'][d, l], params['n2b'][d, l])
        out_d = h.reshape(B, P * dm) @ params['wr'][d] + params['br'][d]
        outs.append(out_d[:, None, :])
    return jnp.concatenate(outs, axis=1)


# ---- deterministic parameter construction ------------------------------------
def init_params(key):
    D_, dm, T, P, S, NL_ = (TOKEN_D_SIZE, D_MODEL, TOKEN_T_SIZE, NUM_PATCHES,
                            SEQ_LEN, NUM_LAYERS)
    keys = jax.random.split(key, 13)
    scale = 0.1

    def rnd(k, shape):
        return (scale * jax.random.normal(k, shape)).astype(jnp.float32)

    # sinusoidal positional-encoding table (deterministic; identical for all channels)
    pos = np.arange(P, dtype=np.float32)[:, None]
    div = np.exp(np.arange(0, dm, 2, dtype=np.float32) * (-np.log(10000.0) / dm))
    pe = np.zeros((P, dm), np.float32)
    pe[:, 0::2] = np.sin(pos * div)
    pe[:, 1::2] = np.cos(pos * div)

    return dict(
        we=rnd(keys[0], (D_, dm, T)),               # IndependentPatchEmbedding.linear.weight
        be=rnd(keys[1], (D_, dm)),                  # ...bias
        pe=jnp.asarray(pe),                         # PositionalEncoding table (P, dm)
        inw=rnd(keys[2], (D_, NL_, 3 * dm, dm)),    # MHA in_proj_weight
        inb=rnd(keys[3], (D_, NL_, 3 * dm)),        # MHA in_proj_bias
        ow=rnd(keys[4], (D_, NL_, dm, dm)),         # MHA out_proj.weight
        ob=rnd(keys[5], (D_, NL_, dm)),             # MHA out_proj.bias
        l1w=rnd(keys[6], (D_, NL_, dm, dm)),        # linear1.weight
        l1b=rnd(keys[7], (D_, NL_, dm)),            # linear1.bias
        l2w=rnd(keys[8], (D_, NL_, dm, dm)),        # linear2.weight
        l2b=rnd(keys[9], (D_, NL_, dm)),            # linear2.bias
        n1g=jnp.ones((D_, NL_, dm), jnp.float32),   # norm1.weight
        n1b=jnp.zeros((D_, NL_, dm), jnp.float32),  # norm1.bias
        n2g=jnp.ones((D_, NL_, dm), jnp.float32),   # norm2.weight
        n2b=jnp.zeros((D_, NL_, dm), jnp.float32),  # norm2.bias
        wr=rnd(keys[10], (D_, P * dm, S)),          # reconstructor weight (= W.T, (P*dm, S))
        br=rnd(keys[11], (D_, S)),                  # reconstructor bias
        mask_token=jax.random.normal(keys[12], (1,), jnp.float32),
    )


if __name__ == "__main__":
    key = jax.random.PRNGKey(0)
    pkey, xkey = jax.random.split(key)
    params = init_params(pkey)

    # x: (B, D, L) = (batch, variates, seq_len), matching the PyTorch forward
    x = jax.random.normal(xkey, (2, TOKEN_D_SIZE, SEQ_LEN), dtype=jnp.float32)

    out = jax.jit(forward)(x, params)    # mask=None -> all-True mask (mask_token unused)
    out = jax.block_until_ready(out)
    assert out.shape == (2, TOKEN_D_SIZE, SEQ_LEN), out.shape

    ref = jax.block_until_ready(ref_forward(x, params))
    # f32 path; tolerance sized for the approx-reciprocal softmax normalization
    np.testing.assert_allclose(np.asarray(out), np.asarray(ref), rtol=1e-3, atol=1e-3)

    print("KERNEL_OK")
</pallas_src>

<mosaic_0001>
module attributes {stable_mosaic.version = 11 : i64} {
  func.func @_kernel(%arg0: memref<6x48xf32, #tpu.memory_space<vmem>>, %arg1: memref<8x48x48xf32, #tpu.memory_space<vmem>>, %arg2: memref<2x48x144xf32, #tpu.memory_space<vmem>>, %arg3: memref<3x48x96xf32, #tpu.memory_space<vmem>>, %arg4: memref<20x48xf32, #tpu.memory_space<vmem>>, %arg5: memref<9x144xf32, #tpu.memory_space<vmem>>, %arg6: memref<2x96xf32, #tpu.memory_space<vmem>>) attributes {dimension_semantics = [], scalar_prefetch = 0 : i64, scratch_operands = 0 : i64, tpu.core_type = #tpu.core_type<tc>} {
    %c1 = arith.constant 1 : index
    %c0 = arith.constant 0 : index
    %c0_0 = arith.constant 0 : index
    %0 = vector.load %arg1[%c1, %c0, %c0_0] : memref<8x48x48xf32, #tpu.memory_space<vmem>>, vector<1x48x48xf32>
    %1 = vector.shape_cast %0 : vector<1x48x48xf32> to vector<48x48xf32>
    %c0_1 = arith.constant 0 : index
    %c0_2 = arith.constant 0 : index
    %2 = vector.load %arg0[%c0_1, %c0_2] : memref<6x48xf32, #tpu.memory_space<vmem>>, vector<6x48xf32>
    %c0_3 = arith.constant 0 : index
    %c0_4 = arith.constant 0 : index
    %c0_5 = arith.constant 0 : index
    %3 = vector.load %arg1[%c0_3, %c0_4, %c0_5] : memref<8x48x48xf32, #tpu.memory_space<vmem>>, vector<1x48x48xf32>
    %4 = vector.shape_cast %3 : vector<1x48x48xf32> to vector<48x48xf32>
    %cst = arith.constant dense<0.000000e+00> : vector<6x48xf32>
    %5 = tpu.matmul %2, %4, %cst {dimension_numbers = #tpu.dot_dimension_numbers<[1], [0], [0], [1], [0, 0, 1, 1], [], []>} : vector<6x48xf32>, vector<48x48xf32>, vector<6x48xf32> -> vector<6x48xf32>
    %c0_6 = arith.constant 0 : index
    %c0_7 = arith.constant 0 : index
    %6 = vector.load %arg4[%c0_6, %c0_7] : memref<20x48xf32, #tpu.memory_space<vmem>>, vector<6x48xf32>
    %7 = arith.addf %5, %6 : vector<6x48xf32>
    %c3 = arith.constant 3 : index
    %c0_8 = arith.constant 0 : index
    %8 = vector.load %arg5[%c3, %c0_8] : memref<9x144xf32, #tpu.memory_space<vmem>>, vector<6x144xf32>
    %9 = vector.extract_strided_slice %8 {offsets = [0, 0], sizes = [6, 6], strides = [1, 1]} : vector<6x144xf32> to vector<6x6xf32>
    %c0_9 = arith.constant 0 : index
    %c0_10 = arith.constant 0 : index
    %c0_11 = arith.constant 0 : index
    %10 = vector.load %arg2[%c0_9, %c0_10, %c0_11] : memref<2x48x144xf32, #tpu.memory_space<vmem>>, vector<1x48x144xf32>
    %11 = vector.shape_cast %10 : vector<1x48x144xf32> to vector<48x144xf32>
    %cst_12 = arith.constant dense<0.000000e+00> : vector<6x144xf32>
    %12 = tpu.matmul %7, %11, %cst_12 {dimension_numbers = #tpu.dot_dimension_numbers<[1], [0], [0], [1], [0, 0, 1, 1], [], []>} : vector<6x48xf32>, vector<48x144xf32>, vector<6x144xf32> -> vector<6x144xf32>
    %c0_13 = arith.constant 0 : index
    %c0_14 = arith.constant 0 : index
    %13 = vector.load %arg5[%c0_13, %c0_14] : memref<9x144xf32, #tpu.memory_space<vmem>>, vector<1x144xf32>
    %14 = vector.broadcast %13 : vector<1x144xf32> to vector<6x144xf32>
    %15 = arith.addf %12, %14 : vector<6x144xf32>
    %16 = vector.extract_strided_slice %15 {offsets = [0, 0], sizes = [6, 4], strides = [1, 1]} : vector<6x144xf32> to vector<6x4xf32>
    %17 = vector.extract_strided_slice %15 {offsets = [0, 16], sizes = [6, 4], strides = [1, 1]} : vector<6x144xf32> to vector<6x4xf32>
    %18 = vector.extract_strided_slice %15 {offsets = [0, 32], sizes = [6, 4], strides = [1, 1]} : vector<6x144xf32> to vector<6x4xf32>
    "tpu.trace_start"() <{level = 10 : i32, message = "qe,ke->qk"}> : () -> ()
    %cst_15 = arith.constant dense<0.000000e+00> : vector<6x6xf32>
    %19 = tpu.matmul %16, %17, %cst_15 {dimension_numbers = #tpu.dot_dimension_numbers<[1], [1], [0], [0], [0, 0, 1, 0], [], []>} : vector<6x4xf32>, vector<6x4xf32>, vector<6x6xf32> -> vector<6x6xf32>
    "tpu.trace_stop"() : () -> ()
    %cst_16 = arith.constant 5.000000e-01 : f32
    %20 = vector.broadcast %cst_16 : f32 to vector<6x6xf32>
    %21 = arith.mulf %19, %20 : vector<6x6xf32>
    %22 = arith.addf %21, %9 : vector<6x6xf32>
    %cst_17 = arith.constant dense<0xFF800000> : vector<6xf32>
    %23 = vector.multi_reduction <maximumf>, %22, %cst_17 [1] : vector<6x6xf32> to vector<6xf32>
    %24 = vector.shape_cast %23 : vector<6xf32> to vector<6x1xf32>
    %25 = vector.broadcast %24 : vector<6x1xf32> to vector<6x6xf32>
    %26 = arith.subf %22, %25 : vector<6x6xf32>
    %27 = math.exp %26 : vector<6x6xf32>
    %cst_18 = arith.constant dense<0.000000e+00> : vector<6xf32>
    %28 = vector.multi_reduction <add>, %27, %cst_18 [1] : vector<6x6xf32> to vector<6xf32>
    %29 = vector.shape_cast %28 : vector<6xf32> to vector<6x1xf32>
    %30 = tpu.reciprocal %29 {approx = true} : vector<6x1xf32> -> vector<6x1xf32>
    %31 = vector.broadcast %30 : vector<6x1xf32> to vector<6x6xf32>
    %32 = arith.mulf %27, %31 : vector<6x6xf32>
    %cst_19 = arith.constant dense<0.000000e+00> : vector<6x4xf32>
    %33 = tpu.matmul %32, %18, %cst_19 {dimension_numbers = #tpu.dot_dimension_numbers<[1], [0], [0], [1], [0, 0, 1, 1], [], []>} : vector<6x6xf32>, vector<6x4xf32>, vector<6x4xf32> -> vector<6x4xf32>
    %34 = vector.extract_strided_slice %15 {offsets = [0, 4], sizes = [6, 4], strides = [1, 1]} : vector<6x144xf32> to vector<6x4xf32>
    %35 = vector.extract_strided_slice %15 {offsets = [0, 20], sizes = [6, 4], strides = [1, 1]} : vector<6x144xf32> to vector<6x4xf32>
    %36 = vector.extract_strided_slice %15 {offsets = [0, 36], sizes = [6, 4], strides = [1, 1]} : vector<6x144xf32> to vector<6x4xf32>
    "tpu.trace_start"() <{level = 10 : i32, message = "qe,ke->qk"}> : () -> ()
    %cst_20 = arith.constant dense<0.000000e+00> : vector<6x6xf32>
    %37 = tpu.matmul %34, %35, %cst_20 {dimension_numbers = #tpu.dot_dimension_numbers<[1], [1], [0], [0], [0, 0, 1, 0], [], []>} : vector<6x4xf32>, vector<6x4xf32>, vector<6x6xf32> -> vector<6x6xf32>
    "tpu.trace_stop"() : () -> ()
    %cst_21 = arith.constant 5.000000e-01 : f32
    %38 = vector.broadcast %cst_21 : f32 to vector<6x6xf32>
    %39 = arith.mulf %37, %38 : vector<6x6xf32>
    %40 = arith.addf %39, %9 : vector<6x6xf32>
    %cst_22 = arith.constant dense<0xFF800000> : vector<6xf32>
    %41 = vector.multi_reduction <maximumf>, %40, %cst_22 [1] : vector<6x6xf32> to vector<6xf32>
    %42 = vector.shape_cast %41 : vector<6xf32> to vector<6x1xf32>
    %43 = vector.broadcast %42 : vector<6x1xf32> to vector<6x6xf32>
    %44 = arith.subf %40, %43 : vector<6x6xf32>
    %45 = math.exp %44 : vector<6x6xf32>
    %cst_23 = arith.constant dense<0.000000e+00> : vector<6xf32>
    %46 = vector.multi_reduction <add>, %45, %cst_23 [1] : vector<6x6xf32> to vector<6xf32>
    %47 = vector.shape_cast %46 : vector<6xf32> to vector<6x1xf32>
    %48 = tpu.reciprocal %47 {approx = true} : vector<6x1xf32> -> vector<6x1xf32>
    %49 = vector.broadcast %48 : vector<6x1xf32> to vector<6x6xf32>
    %50 = arith.mulf %45, %49 : vector<6x6xf32>
    %cst_24 = arith.constant dense<0.000000e+00> : vector<6x4xf32>
    %51 = tpu.matmul %50, %36, %cst_24 {dimension_numbers = #tpu.dot_dimension_numbers<[1], [0], [0], [1], [0, 0, 1, 1], [], []>} : vector<6x6xf32>, vector<6x4xf32>, vector<6x4xf32> -> vector<6x4xf32>
    %52 = vector.extract_strided_slice %15 {offsets = [0, 8], sizes = [6, 4], strides = [1, 1]} : vector<6x144xf32> to vector<6x4xf32>
    %53 = vector.extract_strided_slice %15 {offsets = [0, 24], sizes = [6, 4], strides = [1, 1]} : vector<6x144xf32> to vector<6x4xf32>
    %54 = vector.extract_strided_slice %15 {offsets = [0, 40], sizes = [6, 4], strides = [1, 1]} : vector<6x144xf32> to vector<6x4xf32>
    "tpu.trace_start"() <{level = 10 : i32, message = "qe,ke->qk"}> : () -> ()
    %cst_25 = arith.constant dense<0.000000e+00> : vector<6x6xf32>
    %55 = tpu.matmul %52, %53, %cst_25 {dimension_numbers = #tpu.dot_dimension_numbers<[1], [1], [0], [0], [0, 0, 1, 0], [], []>} : vector<6x4xf32>, vector<6x4xf32>, vector<6x6xf32> -> vector<6x6xf32>
    "tpu.trace_stop"() : () -> ()
    %cst_26 = arith.constant 5.000000e-01 : f32
    %56 = vector.broadcast %cst_26 : f32 to vector<6x6xf32>
    %57 = arith.mulf %55, %56 : vector<6x6xf32>
    %58 = arith.addf %57, %9 : vector<6x6xf32>
    %cst_27 = arith.constant dense<0xFF800000> : vector<6xf32>
    %59 = vector.multi_reduction <maximumf>, %58, %cst_27 [1] : vector<6x6xf32> to vector<6xf32>
    %60 = vector.shape_cast %59 : vector<6xf32> to vector<6x1xf32>
    %61 = vector.broadcast %60 : vector<6x1xf32> to vector<6x6xf32>
    %62 = arith.subf %58, %61 : vector<6x6xf32>
    %63 = math.exp %62 : vector<6x6xf32>
    %cst_28 = arith.constant dense<0.000000e+00> : vector<6xf32>
    %64 = vector.multi_reduction <add>, %63, %cst_28 [1] : vector<6x6xf32> to vector<6xf32>
    %65 = vector.shape_cast %64 : vector<6xf32> to vector<6x1xf32>
    %66 = tpu.reciprocal %65 {approx = true} : vector<6x1xf32> -> vector<6x1xf32>
    %67 = vector.broadcast %66 : vector<6x1xf32> to vector<6x6xf32>
    %68 = arith.mulf %63, %67 : vector<6x6xf32>
    %cst_29 = arith.constant dense<0.000000e+00> : vector<6x4xf32>
    %69 = tpu.matmul %68, %54, %cst_29 {dimension_numbers = #tpu.dot_dimension_numbers<[1], [0], [0], [1], [0, 0, 1, 1], [], []>} : vector<6x6xf32>, vector<6x4xf32>, vector<6x4xf32> -> vector<6x4xf32>
    %70 = vector.extract_strided_slice %15 {offsets = [0, 12], sizes = [6, 4], strides = [1, 1]} : vector<6x144xf32> to vector<6x4xf32>
    %71 = vector.extract_strided_slice %15 {offsets = [0, 28], sizes = [6, 4], strides = [1, 1]} : vector<6x144xf32> to vector<6x4xf32>
    %72 = vector.extract_strided_slice %15 {offsets = [0, 44], sizes = [6, 4], strides = [1, 1]} : vector<6x144xf32> to vector<6x4xf32>
    "tpu.trace_start"() <{level = 10 : i32, message = "qe,ke->qk"}> : () -> ()
    %cst_30 = arith.constant dense<0.000000e+00> : vector<6x6xf32>
    %73 = tpu.matmul %70, %71, %cst_30 {dimension_numbers = #tpu.dot_dimension_numbers<[1], [1], [0], [0], [0, 0, 1, 0], [], []>} : vector<6x4xf32>, vector<6x4xf32>, vector<6x6xf32> -> vector<6x6xf32>
    "tpu.trace_stop"() : () -> ()
    %cst_31 = arith.constant 5.000000e-01 : f32
    %74 = vector.broadcast %cst_31 : f32 to vector<6x6xf32>
    %75 = arith.mulf %73, %74 : vector<6x6xf32>
    %76 = arith.addf %75, %9 : vector<6x6xf32>
    %cst_32 = arith.constant dense<0xFF800000> : vector<6xf32>
    %77 = vector.multi_reduction <maximumf>, %76, %cst_32 [1] : vector<6x6xf32> to vector<6xf32>
    %78 = vector.shape_cast %77 : vector<6xf32> to vector<6x1xf32>
    %79 = vector.broadcast %78 : vector<6x1xf32> to vector<6x6xf32>
    %80 = arith.subf %76, %79 : vector<6x6xf32>
    %81 = math.exp %80 : vector<6x6xf32>
    %cst_33 = arith.constant dense<0.000000e+00> : vector<6xf32>
    %82 = vector.multi_reduction <add>, %81, %cst_33 [1] : vector<6x6xf32> to vector<6xf32>
    %83 = vector.shape_cast %82 : vector<6xf32> to vector<6x1xf32>
    %84 = tpu.reciprocal %83 {approx = true} : vector<6x1xf32> -> vector<6x1xf32>
    %85 = vector.broadcast %84 : vector<6x1xf32> to vector<6x6xf32>
    %86 = arith.mulf %81, %85 : vector<6x6xf32>
    %cst_34 = arith.constant dense<0.000000e+00> : vector<6x4xf32>
    %87 = tpu.matmul %86, %72, %cst_34 {dimension_numbers = #tpu.dot_dimension_numbers<[1], [0], [0], [1], [0, 0, 1, 1], [], []>} : vector<6x6xf32>, vector<6x4xf32>, vector<6x4xf32> -> vector<6x4xf32>
    %88 = vector.extract_strided_slice %15 {offsets = [0, 48], sizes = [6, 4], strides = [1, 1]} : vector<6x144xf32> to vector<6x4xf32>
    %89 = vector.extract_strided_slice %15 {offsets = [0, 64], sizes = [6, 4], strides = [1, 1]} : vector<6x144xf32> to vector<6x4xf32>
    %90 = vector.extract_strided_slice %15 {offsets = [0, 80], sizes = [6, 4], strides = [1, 1]} : vector<6x144xf32> to vector<6x4xf32>
    "tpu.trace_start"() <{level = 10 : i32, message = "qe,ke->qk"}> : () -> ()
    %cst_35 = arith.constant dense<0.000000e+00> : vector<6x6xf32>
    %91 = tpu.matmul %88, %89, %cst_35 {dimension_numbers = #tpu.dot_dimension_numbers<[1], [1], [0], [0], [0, 0, 1, 0], [], []>} : vector<6x4xf32>, vector<6x4xf32>, vector<6x6xf32> -> vector<6x6xf32>
    "tpu.trace_stop"() : () -> ()
    %cst_36 = arith.constant 5.000000e-01 : f32
    %92 = vector.broadcast %cst_36 : f32 to vector<6x6xf32>
    %93 = arith.mulf %91, %92 : vector<6x6xf32>
    %94 = arith.addf %93, %9 : vector<6x6xf32>
    %cst_37 = arith.constant dense<0xFF800000> : vector<6xf32>
    %95 = vector.multi_reduction <maximumf>, %94, %cst_37 [1] : vector<6x6xf32> to vector<6xf32>
    %96 = vector.shape_cast %95 : vector<6xf32> to vector<6x1xf32>
    %97 = vector.broadcast %96 : vector<6x1xf32> to vector<6x6xf32>
    %98 = arith.subf %94, %97 : vector<6x6xf32>
    %99 = math.exp %98 : vector<6x6xf32>
    %cst_38 = arith.constant dense<0.000000e+00> : vector<6xf32>
    %100 = vector.multi_reduction <add>, %99, %cst_38 [1] : vector<6x6xf32> to vector<6xf32>
    %101 = vector.shape_cast %100 : vector<6xf32> to vector<6x1xf32>
    %102 = tpu.reciprocal %101 {approx = true} : vector<6x1xf32> -> vector<6x1xf32>
    %103 = vector.broadcast %102 : vector<6x1xf32> to vector<6x6xf32>
    %104 = arith.mulf %99, %103 : vector<6x6xf32>
    %cst_39 = arith.constant dense<0.000000e+00> : vector<6x4xf32>
    %105 = tpu.matmul %104, %90, %cst_39 {dimension_numbers = #tpu.dot_dimension_numbers<[1], [0], [0], [1], [0, 0, 1, 1], [], []>} : vector<6x6xf32>, vector<6x4xf32>, vector<6x4xf32> -> vector<6x4xf32>
    %106 = vector.extract_strided_slice %15 {offsets = [0, 52], sizes = [6, 4], strides = [1, 1]} : vector<6x144xf32> to vector<6x4xf32>
    %107 = vector.extract_strided_slice %15 {offsets = [0, 68], sizes = [6, 4], strides = [1, 1]} : vector<6x144xf32> to vector<6x4xf32>
    %108 = vector.extract_strided_slice %15 {offsets = [0, 84], sizes = [6, 4], strides = [1, 1]} : vector<6x144xf32> to vector<6x4xf32>
    "tpu.trace_start"() <{level = 10 : i32, message = "qe,ke->qk"}> : () -> ()
    %cst_40 = arith.constant dense<0.000000e+00> : vector<6x6xf32>
    %109 = tpu.matmul %106, %107, %cst_40 {dimension_numbers = #tpu.dot_dimension_numbers<[1], [1], [0], [0], [0, 0, 1, 0], [], []>} : vector<6x4xf32>, vector<6x4xf32>, vector<6x6xf32> -> vector<6x6xf32>
    "tpu.trace_stop"() : () -> ()
    %cst_41 = arith.constant 5.000000e-01 : f32
    %110 = vector.broadcast %cst_41 : f32 to vector<6x6xf32>
    %111 = arith.mulf %109, %110 : vector<6x6xf32>
    %112 = arith.addf %111, %9 : vector<6x6xf32>
    %cst_42 = arith.constant dense<0xFF800000> : vector<6xf32>
    %113 = vector.multi_reduction <maximumf>, %112, %cst_42 [1] : vector<6x6xf32> to vector<6xf32>
    %114 = vector.shape_cast %113 : vector<6xf32> to vector<6x1xf32>
    %115 = vector.broadcast %114 : vector<6x1xf32> to vector<6x6xf32>
    %116 = arith.subf %112, %115 : vector<6x6xf32>
    %117 = math.exp %116 : vector<6x6xf32>
    %cst_43 = arith.constant dense<0.000000e+00> : vector<6xf32>
    %118 = vector.multi_reduction <add>, %117, %cst_43 [1] : vector<6x6xf32> to vector<6xf32>
    %119 = vector.shape_cast %118 : vector<6xf32> to vector<6x1xf32>
    %120 = tpu.reciprocal %119 {approx = true} : vector<6x1xf32> -> vector<6x1xf32>
    %121 = vector.broadcast %120 : vector<6x1xf32> to vector<6x6xf32>
    %122 = arith.mulf %117, %121 : vector<6x6xf32>
    %cst_44 = arith.constant dense<0.000000e+00> : vector<6x4xf32>
    %123 = tpu.matmul %122, %108, %cst_44 {dimension_numbers = #tpu.dot_dimension_numbers<[1], [0], [0], [1], [0, 0, 1, 1], [], []>} : vector<6x6xf32>, vector<6x4xf32>, vector<6x4xf32> -> vector<6x4xf32>
    %124 = vector.extract_strided_slice %15 {offsets = [0, 56], sizes = [6, 4], strides = [1, 1]} : vector<6x144xf32> to vector<6x4xf32>
    %125 = vector.extract_strided_slice %15 {offsets = [0, 72], sizes = [6, 4], strides = [1, 1]} : vector<6x144xf32> to vector<6x4xf32>
    %126 = vector.extract_strided_slice %15 {offsets = [0, 88], sizes = [6, 4], strides = [1, 1]} : vector<6x144xf32> to vector<6x4xf32>
    "tpu.trace_start"() <{level = 10 : i32, message = "qe,ke->qk"}> : () -> ()
    %cst_45 = arith.constant dense<0.000000e+00> : vector<6x6xf32>
    %127 = tpu.matmul %124, %125, %cst_45 {dimension_numbers = #tpu.dot_dimension_numbers<[1], [1], [0], [0], [0, 0, 1, 0], [], []>} : vector<6x4xf32>, vector<6x4xf32>, vector<6x6xf32> -> vector<6x6xf32>
    "tpu.trace_stop"() : () -> ()
    %cst_46 = arith.constant 5.000000e-01 : f32
    %128 = vector.broadcast %cst_46 : f32 to vector<6x6xf32>
    %129 = arith.mulf %127, %128 : vector<6x6xf32>
    %130 = arith.addf %129, %9 : vector<6x6xf32>
    %cst_47 = arith.constant dense<0xFF800000> : vector<6xf32>
    %131 = vector.multi_reduction <maximumf>, %130, %cst_47 [1] : vector<6x6xf32> to vector<6xf32>
    %132 = vector.shape_cast %131 : vector<6xf32> to vector<6x1xf32>
    %133 = vector.broadcast %132 : vector<6x1xf32> to vector<6x6xf32>
    %134 = arith.subf %130, %133 : vector<6x6xf32>
    %135 = math.exp %134 : vector<6x6xf32>
    %cst_48 = arith.constant dense<0.000000e+00> : vector<6xf32>
    %136 = vector.multi_reduction <add>, %135, %cst_48 [1] : vector<6x6xf32> to vector<6xf32>
    %137 = vector.shape_cast %136 : vector<6xf32> to vector<6x1xf32>
    %138 = tpu.reciprocal %137 {approx = true} : vector<6x1xf32> -> vector<6x1xf32>
    %139 = vector.broadcast %138 : vector<6x1xf32> to vector<6x6xf32>
    %140 = arith.mulf %135, %139 : vector<6x6xf32>
    %cst_49 = arith.constant dense<0.000000e+00> : vector<6x4xf32>
    %141 = tpu.matmul %140, %126, %cst_49 {dimension_numbers = #tpu.dot_dimension_numbers<[1], [0], [0], [1], [0, 0, 1, 1], [], []>} : vector<6x6xf32>, vector<6x4xf32>, vector<6x4xf32> -> vector<6x4xf32>
    %142 = vector.extract_strided_slice %15 {offsets = [0, 60], sizes = [6, 4], strides = [1, 1]} : vector<6x144xf32> to vector<6x4xf32>
    %143 = vector.extract_strided_slice %15 {offsets = [0, 76], sizes = [6, 4], strides = [1, 1]} : vector<6x144xf32> to vector<6x4xf32>
    %144 = vector.extract_strided_slice %15 {offsets = [0, 92], sizes = [6, 4], strides = [1, 1]} : vector<6x144xf32> to vector<6x4xf32>
    "tpu.trace_start"() <{level = 10 : i32, message = "qe,ke->qk"}> : () -> ()
    %cst_50 = arith.constant dense<0.000000e+00> : vector<6x6xf32>
    %145 = tpu.matmul %142, %143, %cst_50 {dimension_numbers = #tpu.dot_dimension_numbers<[1], [1], [0], [0], [0, 0, 1, 0], [], []>} : vector<6x4xf32>, vector<6x4xf32>, vector<6x6xf32> -> vector<6x6xf32>
    "tpu.trace_stop"() : () -> ()
    %cst_51 = arith.constant 5.000000e-01 : f32
    %146 = vector.broadcast %cst_51 : f32 to vector<6x6xf32>
    %147 = arith.mulf %145, %146 : vector<6x6xf32>
    %148 = arith.addf %147, %9 : vector<6x6xf32>
    %cst_52 = arith.constant dense<0xFF800000> : vector<6xf32>
    %149 = vector.multi_reduction <maximumf>, %148, %cst_52 [1] : vector<6x6xf32> to vector<6xf32>
    %150 = vector.shape_cast %149 : vector<6xf32> to vector<6x1xf32>
    %151 = vector.broadcast %150 : vector<6x1xf32> to vector<6x6xf32>
    %152 = arith.subf %148, %151 : vector<6x6xf32>
    %153 = math.exp %152 : vector<6x6xf32>
    %cst_53 = arith.constant dense<0.000000e+00> : vector<6xf32>
    %154 = vector.multi_reduction <add>, %153, %cst_53 [1] : vector<6x6xf32> to vector<6xf32>
    %155 = vector.shape_cast %154 : vector<6xf32> to vector<6x1xf32>
    %156 = tpu.reciprocal %155 {approx = true} : vector<6x1xf32> -> vector<6x1xf32>
    %157 = vector.broadcast %156 : vector<6x1xf32> to vector<6x6xf32>
    %158 = arith.mulf %153, %157 : vector<6x6xf32>
    %cst_54 = arith.constant dense<0.000000e+00> : vector<6x4xf32>
    %159 = tpu.matmul %158, %144, %cst_54 {dimension_numbers = #tpu.dot_dimension_numbers<[1], [0], [0], [1], [0, 0, 1, 1], [], []>} : vector<6x6xf32>, vector<6x4xf32>, vector<6x4xf32> -> vector<6x4xf32>
    %160 = vector.extract_strided_slice %15 {offsets = [0, 96], sizes = [6, 4], strides = [1, 1]} : vector<6x144xf32> to vector<6x4xf32>
    %161 = vector.extract_strided_slice %15 {offsets = [0, 112], sizes = [6, 4], strides = [1, 1]} : vector<6x144xf32> to vector<6x4xf32>
    %162 = vector.extract_strided_slice %15 {offsets = [0, 128], sizes = [6, 4], strides = [1, 1]} : vector<6x144xf32> to vector<6x4xf32>
    "tpu.trace_start"() <{level = 10 : i32, message = "qe,ke->qk"}> : () -> ()
    %cst_55 = arith.constant dense<0.000000e+00> : vector<6x6xf32>
    %163 = tpu.matmul %160, %161, %cst_55 {dimension_numbers = #tpu.dot_dimension_numbers<[1], [1], [0], [0], [0, 0, 1, 0], [], []>} : vector<6x4xf32>, vector<6x4xf32>, vector<6x6xf32> -> vector<6x6xf32>
    "tpu.trace_stop"() : () -> ()
    %cst_56 = arith.constant 5.000000e-01 : f32
    %164 = vector.broadcast %cst_56 : f32 to vector<6x6xf32>
    %165 = arith.mulf %163, %164 : vector<6x6xf32>
    %166 = arith.addf %165, %9 : vector<6x6xf32>
    %cst_57 = arith.constant dense<0xFF800000> : vector<6xf32>
    %167 = vector.multi_reduction <maximumf>, %166, %cst_57 [1] : vector<6x6xf32> to vector<6xf32>
    %168 = vector.shape_cast %167 : vector<6xf32> to vector<6x1xf32>
    %169 = vector.broadcast %168 : vector<6x1xf32> to vector<6x6xf32>
    %170 = arith.subf %166, %169 : vector<6x6xf32>
    %171 = math.exp %170 : vector<6x6xf32>
    %cst_58 = arith.constant dense<0.000000e+00> : vector<6xf32>
    %172 = vector.multi_reduction <add>, %171, %cst_58 [1] : vector<6x6xf32> to vector<6xf32>
    %173 = vector.shape_cast %172 : vector<6xf32> to vector<6x1xf32>
    %174 = tpu.reciprocal %173 {approx = true} : vector<6x1xf32> -> vector<6x1xf32>
    %175 = vector.broadcast %174 : vector<6x1xf32> to vector<6x6xf32>
    %176 = arith.mulf %171, %175 : vector<6x6xf32>
    %cst_59 = arith.constant dense<0.000000e+00> : vector<6x4xf32>
    %177 = tpu.matmul %176, %162, %cst_59 {dimension_numbers = #tpu.dot_dimension_numbers<[1], [0], [0], [1], [0, 0, 1, 1], [], []>} : vector<6x6xf32>, vector<6x4xf32>, vector<6x4xf32> -> vector<6x4xf32>
    %178 = vector.extract_strided_slice %15 {offsets = [0, 100], sizes = [6, 4], strides = [1, 1]} : vector<6x144xf32> to vector<6x4xf32>
    %179 = vector.extract_strided_slice %15 {offsets = [0, 116], sizes = [6, 4], strides = [1, 1]} : vector<6x144xf32> to vector<6x4xf32>
    %180 = vector.extract_strided_slice %15 {offsets = [0, 132], sizes = [6, 4], strides = [1, 1]} : vector<6x144xf32> to vector<6x4xf32>
    "tpu.trace_start"() <{level = 10 : i32, message = "qe,ke->qk"}> : () -> ()
    %cst_60 = arith.constant dense<0.000000e+00> : vector<6x6xf32>
    %181 = tpu.matmul %178, %179, %cst_60 {dimension_numbers = #tpu.dot_dimension_numbers<[1], [1], [0], [0], [0, 0, 1, 0], [], []>} : vector<6x4xf32>, vector<6x4xf32>, vector<6x6xf32> -> vector<6x6xf32>
    "tpu.trace_stop"() : () -> ()
    %cst_61 = arith.constant 5.000000e-01 : f32
    %182 = vector.broadcast %cst_61 : f32 to vector<6x6xf32>
    %183 = arith.mulf %181, %182 : vector<6x6xf32>
    %184 = arith.addf %183, %9 : vector<6x6xf32>
    %cst_62 = arith.constant dense<0xFF800000> : vector<6xf32>
    %185 = vector.multi_reduction <maximumf>, %184, %cst_62 [1] : vector<6x6xf32> to vector<6xf32>
    %186 = vector.shape_cast %185 : vector<6xf32> to vector<6x1xf32>
    %187 = vector.broadcast %186 : vector<6x1xf32> to vector<6x6xf32>
    %188 = arith.subf %184, %187 : vector<6x6xf32>
    %189 = math.exp %188 : vector<6x6xf32>
    %cst_63 = arith.constant dense<0.000000e+00> : vector<6xf32>
    %190 = vector.multi_reduction <add>, %189, %cst_63 [1] : vector<6x6xf32> to vector<6xf32>
    %191 = vector.shape_cast %190 : vector<6xf32> to vector<6x1xf32>
    %192 = tpu.reciprocal %191 {approx = true} : vector<6x1xf32> -> vector<6x1xf32>
    %193 = vector.broadcast %192 : vector<6x1xf32> to vector<6x6xf32>
    %194 = arith.mulf %189, %193 : vector<6x6xf32>
    %cst_64 = arith.constant dense<0.000000e+00> : vector<6x4xf32>
    %195 = tpu.matmul %194, %180, %cst_64 {dimension_numbers = #tpu.dot_dimension_numbers<[1], [0], [0], [1], [0, 0, 1, 1], [], []>} : vector<6x6xf32>, vector<6x4xf32>, vector<6x4xf32> -> vector<6x4xf32>
    %196 = vector.extract_strided_slice %15 {offsets = [0, 104], sizes = [6, 4], strides = [1, 1]} : vector<6x144xf32> to vector<6x4xf32>
    %197 = vector.extract_strided_slice %15 {offsets = [0, 120], sizes = [6, 4], strides = [1, 1]} : vector<6x144xf32> to vector<6x4xf32>
    %198 = vector.extract_strided_slice %15 {offsets = [0, 136], sizes = [6, 4], strides = [1, 1]} : vector<6x144xf32> to vector<6x4xf32>
    "tpu.trace_start"() <{level = 10 : i32, message = "qe,ke->qk"}> : () -> ()
    %cst_65 = arith.constant dense<0.000000e+00> : vector<6x6xf32>
    %199 = tpu.matmul %196, %197, %cst_65 {dimension_numbers = #tpu.dot_dimension_numbers<[1], [1], [0], [0], [0, 0, 1, 0], [], []>} : vector<6x4xf32>, vector<6x4xf32>, vector<6x6xf32> -> vector<6x6xf32>
    "tpu.trace_stop"() : () -> ()
    %cst_66 = arith.constant 5.000000e-01 : f32
    %200 = vector.broadcast %cst_66 : f32 to vector<6x6xf32>
    %201 = arith.mulf %199, %200 : vector<6x6xf32>
    %202 = arith.addf %201, %9 : vector<6x6xf32>
    %cst_67 = arith.constant dense<0xFF800000> : vector<6xf32>
    %203 = vector.multi_reduction <maximumf>, %202, %cst_67 [1] : vector<6x6xf32> to vector<6xf32>
    %204 = vector.shape_cast %203 : vector<6xf32> to vector<6x1xf32>
    %205 = vector.broadcast %204 : vector<6x1xf32> to vector<6x6xf32>
    %206 = arith.subf %202, %205 : vector<6x6xf32>
    %207 = math.exp %206 : vector<6x6xf32>
    %cst_68 = arith.constant dense<0.000000e+00> : vector<6xf32>
    %208 = vector.multi_reduction <add>, %207, %cst_68 [1] : vector<6x6xf32> to vector<6xf32>
    %209 = vector.shape_cast %208 : vector<6xf32> to vector<6x1xf32>
    %210 = tpu.reciprocal %209 {approx = true} : vector<6x1xf32> -> vector<6x1xf32>
    %211 = vector.broadcast %210 : vector<6x1xf32> to vector<6x6xf32>
    %212 = arith.mulf %207, %211 : vector<6x6xf32>
    %cst_69 = arith.constant dense<0.000000e+00> : vector<6x4xf32>
    %213 = tpu.matmul %212, %198, %cst_69 {dimension_numbers = #tpu.dot_dimension_numbers<[1], [0], [0], [1], [0, 0, 1, 1], [], []>} : vector<6x6xf32>, vector<6x4xf32>, vector<6x4xf32> -> vector<6x4xf32>
    %214 = vector.extract_strided_slice %15 {offsets = [0, 108], sizes = [6, 4], strides = [1, 1]} : vector<6x144xf32> to vector<6x4xf32>
    %215 = vector.extract_strided_slice %15 {offsets = [0, 124], sizes = [6, 4], strides = [1, 1]} : vector<6x144xf32> to vector<6x4xf32>
    %216 = vector.extract_strided_slice %15 {offsets = [0, 140], sizes = [6, 4], strides = [1, 1]} : vector<6x144xf32> to vector<6x4xf32>
    "tpu.trace_start"() <{level = 10 : i32, message = "qe,ke->qk"}> : () -> ()
    %cst_70 = arith.constant dense<0.000000e+00> : vector<6x6xf32>
    %217 = tpu.matmul %214, %215, %cst_70 {dimension_numbers = #tpu.dot_dimension_numbers<[1], [1], [0], [0], [0, 0, 1, 0], [], []>} : vector<6x4xf32>, vector<6x4xf32>, vector<6x6xf32> -> vector<6x6xf32>
    "tpu.trace_stop"() : () -> ()
    %cst_71 = arith.constant 5.000000e-01 : f32
    %218 = vector.broadcast %cst_71 : f32 to vector<6x6xf32>
    %219 = arith.mulf %217, %218 : vector<6x6xf32>
    %220 = arith.addf %219, %9 : vector<6x6xf32>
    %cst_72 = arith.constant dense<0xFF800000> : vector<6xf32>
    %221 = vector.multi_reduction <maximumf>, %220, %cst_72 [1] : vector<6x6xf32> to vector<6xf32>
    %222 = vector.shape_cast %221 : vector<6xf32> to vector<6x1xf32>
    %223 = vector.broadcast %222 : vector<6x1xf32> to vector<6x6xf32>
    %224 = arith.subf %220, %223 : vector<6x6xf32>
    %225 = math.exp %224 : vector<6x6xf32>
    %cst_73 = arith.constant dense<0.000000e+00> : vector<6xf32>
    %226 = vector.multi_reduction <add>, %225, %cst_73 [1] : vector<6x6xf32> to vector<6xf32>
    %227 = vector.shape_cast %226 : vector<6xf32> to vector<6x1xf32>
    %228 = tpu.reciprocal %227 {approx = true} : vector<6x1xf32> -> vector<6x1xf32>
    %229 = vector.broadcast %228 : vector<6x1xf32> to vector<6x6xf32>
    %230 = arith.mulf %225, %229 : vector<6x6xf32>
    %cst_74 = arith.constant dense<0.000000e+00> : vector<6x4xf32>
    %231 = tpu.matmul %230, %216, %cst_74 {dimension_numbers = #tpu.dot_dimension_numbers<[1], [0], [0], [1], [0, 0, 1, 1], [], []>} : vector<6x6xf32>, vector<6x4xf32>, vector<6x4xf32> -> vector<6x4xf32>
    %232 = tpu.concatenate %33, %51, %69, %87, %105, %123, %141, %159, %177, %195, %213, %231 in 1 : vector<6x4xf32>, vector<6x4xf32>, vector<6x4xf32>, vector<6x4xf32>, vector<6x4xf32>, vector<6x4xf32>, vector<6x4xf32>, vector<6x4xf32>, vector<6x4xf32>, vector<6x4xf32>, vector<6x4xf32>, vector<6x4xf32> -> vector<6x48xf32>
    %c2 = arith.constant 2 : index
    %c0_75 = arith.constant 0 : index
    %c0_76 = arith.constant 0 : index
    %233 = vector.load %arg1[%c2, %c0_75, %c0_76] : memref<8x48x48xf32, #tpu.memory_space<vmem>>, vector<1x48x48xf32>
    %234 = vector.shape_cast %233 : vector<1x48x48xf32> to vector<48x48xf32>
    %cst_77 = arith.constant dense<0.000000e+00> : vector<6x48xf32>
    %235 = tpu.matmul %232, %234, %cst_77 {dimension_numbers = #tpu.dot_dimension_numbers<[1], [0], [0], [1], [0, 0, 1, 1], [], []>} : vector<6x48xf32>, vector<48x48xf32>, vector<6x48xf32> -> vector<6x48xf32>
    %c6 = arith.constant 6 : index
    %c0_78 = arith.constant 0 : index
    %236 = vector.load %arg4[%c6, %c0_78] : memref<20x48xf32, #tpu.memory_space<vmem>>, vector<1x48xf32>
    %237 = vector.broadcast %236 : vector<1x48xf32> to vector<6x48xf32>
    %238 = arith.addf %235, %237 : vector<6x48xf32>
    %239 = arith.addf %7, %238 : vector<6x48xf32>
    %c9 = arith.constant 9 : index
    %c0_79 = arith.constant 0 : index
    %240 = vector.load %arg4[%c9, %c0_79] : memref<20x48xf32, #tpu.memory_space<vmem>>, vector<1x48xf32>
    %c10 = arith.constant 10 : index
    %c0_80 = arith.constant 0 : index
    %241 = vector.load %arg4[%c10, %c0_80] : memref<20x48xf32, #tpu.memory_space<vmem>>, vector<1x48xf32>
    %cst_81 = arith.constant dense<0.000000e+00> : vector<6x48xf32>
    %242 = tpu.matmul %239, %1, %cst_81 {dimension_numbers = #tpu.dot_dimension_numbers<[1], [0], [0], [1], [0, 0, 1, 1], [], []>} : vector<6x48xf32>, vector<48x48xf32>, vector<6x48xf32> -> vector<6x48xf32>
    %243 = arith.subf %239, %242 : vector<6x48xf32>
    %244 = arith.mulf %243, %243 : vector<6x48xf32>
    %cst_82 = arith.constant dense<0.000000e+00> : vector<6x48xf32>
    %245 = tpu.matmul %244, %1, %cst_82 {dimension_numbers = #tpu.dot_dimension_numbers<[1], [0], [0], [1], [0, 0, 1, 1], [], []>} : vector<6x48xf32>, vector<48x48xf32>, vector<6x48xf32> -> vector<6x48xf32>
    %cst_83 = arith.constant 9.99999974E-6 : f32
    %246 = vector.broadcast %cst_83 : f32 to vector<6x48xf32>
    %247 = arith.addf %245, %246 : vector<6x48xf32>
    %248 = math.rsqrt %247 : vector<6x48xf32>
    %249 = arith.mulf %243, %248 : vector<6x48xf32>
    %250 = vector.broadcast %240 : vector<1x48xf32> to vector<6x48xf32>
    %251 = arith.mulf %249, %250 : vector<6x48xf32>
    %252 = vector.broadcast %241 : vector<1x48xf32> to vector<6x48xf32>
    %253 = arith.addf %251, %252 : vector<6x48xf32>
    %c3_84 = arith.constant 3 : index
    %c0_85 = arith.constant 0 : index
    %c0_86 = arith.constant 0 : index
    %254 = vector.load %arg1[%c3_84, %c0_85, %c0_86] : memref<8x48x48xf32, #tpu.memory_space<vmem>>, vector<1x48x48xf32>
    %255 = vector.shape_cast %254 : vector<1x48x48xf32> to vector<48x48xf32>
    %cst_87 = arith.constant dense<0.000000e+00> : vector<6x48xf32>
    %256 = tpu.matmul %253, %255, %cst_87 {dimension_numbers = #tpu.dot_dimension_numbers<[1], [0], [0], [1], [0, 0, 1, 1], [], []>} : vector<6x48xf32>, vector<48x48xf32>, vector<6x48xf32> -> vector<6x48xf32>
    %c7 = arith.constant 7 : index
    %c0_88 = arith.constant 0 : index
    %257 = vector.load %arg4[%c7, %c0_88] : memref<20x48xf32, #tpu.memory_space<vmem>>, vector<1x48xf32>
    %258 = vector.broadcast %257 : vector<1x48xf32> to vector<6x48xf32>
    %259 = arith.addf %256, %258 : vector<6x48xf32>
    %cst_89 = arith.constant 0.000000e+00 : f32
    %260 = vector.broadcast %cst_89 : f32 to vector<6x48xf32>
    %261 = arith.maximumf %259, %260 : vector<6x48xf32>
    %c4 = arith.constant 4 : index
    %c0_90 = arith.constant 0 : index
    %c0_91 = arith.constant 0 : index
    %262 = vector.load %arg1[%c4, %c0_90, %c0_91] : memref<8x48x48xf32, #tpu.memory_space<vmem>>, vector<1x48x48xf32>
    %263 = vector.shape_cast %262 : vector<1x48x48xf32> to vector<48x48xf32>
    %cst_92 = arith.constant dense<0.000000e+00> : vector<6x48xf32>
    %264 = tpu.matmul %261, %263, %cst_92 {dimension_numbers = #tpu.dot_dimension_numbers<[1], [0], [0], [1], [0, 0, 1, 1], [], []>} : vector<6x48xf32>, vector<48x48xf32>, vector<6x48xf32> -> vector<6x48xf32>
    %c8 = arith.constant 8 : index
    %c0_93 = arith.constant 0 : index
    %265 = vector.load %arg4[%c8, %c0_93] : memref<20x48xf32, #tpu.memory_space<vmem>>, vector<1x48xf32>
    %266 = vector.broadcast %265 : vector<1x48xf32> to vector<6x48xf32>
    %267 = arith.addf %264, %266 : vector<6x48xf32>
    %268 = arith.addf %253, %267 : vector<6x48xf32>
    %c11 = arith.constant 11 : index
    %c0_94 = arith.constant 0 : index
    %269 = vector.load %arg4[%c11, %c0_94] : memref<20x48xf32, #tpu.memory_space<vmem>>, vector<1x48xf32>
    %c12 = arith.constant 12 : index
    %c0_95 = arith.constant 0 : index
    %270 = vector.load %arg4[%c12, %c0_95] : memref<20x48xf32, #tpu.memory_space<vmem>>, vector<1x48xf32>
    %cst_96 = arith.constant dense<0.000000e+00> : vector<6x48xf32>
    %271 = tpu.matmul %268, %1, %cst_96 {dimension_numbers = #tpu.dot_dimension_numbers<[1], [0], [0], [1], [0, 0, 1, 1], [], []>} : vector<6x48xf32>, vector<48x48xf32>, vector<6x48xf32> -> vector<6x48xf32>
    %272 = arith.subf %268, %271 : vector<6x48xf32>
    %273 = arith.mulf %272, %272 : vector<6x48xf32>
    %cst_97 = arith.constant dense<0.000000e+00> : vector<6x48xf32>
    %274 = tpu.matmul %273, %1, %cst_97 {dimension_numbers = #tpu.dot_dimension_numbers<[1], [0], [0], [1], [0, 0, 1, 1], [], []>} : vector<6x48xf32>, vector<48x48xf32>, vector<6x48xf32> -> vector<6x48xf32>
    %cst_98 = arith.constant 9.99999974E-6 : f32
    %275 = vector.broadcast %cst_98 : f32 to vector<6x48xf32>
    %276 = arith.addf %274, %275 : vector<6x48xf32>
    %277 = math.rsqrt %276 : vector<6x48xf32>
    %278 = arith.mulf %272, %277 : vector<6x48xf32>
    %279 = vector.broadcast %269 : vector<1x48xf32> to vector<6x48xf32>
    %280 = arith.mulf %278, %279 : vector<6x48xf32>
    %281 = vector.broadcast %270 : vector<1x48xf32> to vector<6x48xf32>
    %282 = arith.addf %280, %281 : vector<6x48xf32>
    %c1_99 = arith.constant 1 : index
    %c0_100 = arith.constant 0 : index
    %c0_101 = arith.constant 0 : index
    %283 = vector.load %arg2[%c1_99, %c0_100, %c0_101] : memref<2x48x144xf32, #tpu.memory_space<vmem>>, vector<1x48x144xf32>
    %284 = vector.shape_cast %283 : vector<1x48x144xf32> to vector<48x144xf32>
    %cst_102 = arith.constant dense<0.000000e+00> : vector<6x144xf32>
    %285 = tpu.matmul %282, %284, %cst_102 {dimension_numbers = #tpu.dot_dimension_numbers<[1], [0], [0], [1], [0, 0, 1, 1], [], []>} : vector<6x48xf32>, vector<48x144xf32>, vector<6x144xf32> -> vector<6x144xf32>
    %c1_103 = arith.constant 1 : index
    %c0_104 = arith.constant 0 : index
    %286 = vector.load %arg5[%c1_103, %c0_104] : memref<9x144xf32, #tpu.memory_space<vmem>>, vector<1x144xf32>
    %287 = vector.broadcast %286 : vector<1x144xf32> to vector<6x144xf32>
    %288 = arith.addf %285, %287 : vector<6x144xf32>
    %289 = vector.extract_strided_slice %288 {offsets = [0, 0], sizes = [6, 4], strides = [1, 1]} : vector<6x144xf32> to vector<6x4xf32>
    %290 = vector.extract_strided_slice %288 {offsets = [0, 16], sizes = [6, 4], strides = [1, 1]} : vector<6x144xf32> to vector<6x4xf32>
    %291 = vector.extract_strided_slice %288 {offsets = [0, 32], sizes = [6, 4], strides = [1, 1]} : vector<6x144xf32> to vector<6x4xf32>
    "tpu.trace_start"() <{level = 10 : i32, message = "qe,ke->qk"}> : () -> ()
    %cst_105 = arith.constant dense<0.000000e+00> : vector<6x6xf32>
    %292 = tpu.matmul %289, %290, %cst_105 {dimension_numbers = #tpu.dot_dimension_numbers<[1], [1], [0], [0], [0, 0, 1, 0], [], []>} : vector<6x4xf32>, vector<6x4xf32>, vector<6x6xf32> -> vector<6x6xf32>
    "tpu.trace_stop"() : () -> ()
    %cst_106 = arith.constant 5.000000e-01 : f32
    %293 = vector.broadcast %cst_106 : f32 to vector<6x6xf32>
    %294 = arith.mulf %292, %293 : vector<6x6xf32>
    %295 = arith.addf %294, %9 : vector<6x6xf32>
    %cst_107 = arith.constant dense<0xFF800000> : vector<6xf32>
    %296 = vector.multi_reduction <maximumf>, %295, %cst_107 [1] : vector<6x6xf32> to vector<6xf32>
    %297 = vector.shape_cast %296 : vector<6xf32> to vector<6x1xf32>
    %298 = vector.broadcast %297 : vector<6x1xf32> to vector<6x6xf32>
    %299 = arith.subf %295, %298 : vector<6x6xf32>
    %300 = math.exp %299 : vector<6x6xf32>
    %cst_108 = arith.constant dense<0.000000e+00> : vector<6xf32>
    %301 = vector.multi_reduction <add>, %300, %cst_108 [1] : vector<6x6xf32> to vector<6xf32>
    %302 = vector.shape_cast %301 : vector<6xf32> to vector<6x1xf32>
    %303 = tpu.reciprocal %302 {approx = true} : vector<6x1xf32> -> vector<6x1xf32>
    %304 = vector.broadcast %303 : vector<6x1xf32> to vector<6x6xf32>
    %305 = arith.mulf %300, %304 : vector<6x6xf32>
    %cst_109 = arith.constant dense<0.000000e+00> : vector<6x4xf32>
    %306 = tpu.matmul %305, %291, %cst_109 {dimension_numbers = #tpu.dot_dimension_numbers<[1], [0], [0], [1], [0, 0, 1, 1], [], []>} : vector<6x6xf32>, vector<6x4xf32>, vector<6x4xf32> -> vector<6x4xf32>
    %307 = vector.extract_strided_slice %288 {offsets = [0, 4], sizes = [6, 4], strides = [1, 1]} : vector<6x144xf32> to vector<6x4xf32>
    %308 = vector.extract_strided_slice %288 {offsets = [0, 20], sizes = [6, 4], strides = [1, 1]} : vector<6x144xf32> to vector<6x4xf32>
    %309 = vector.extract_strided_slice %288 {offsets = [0, 36], sizes = [6, 4], strides = [1, 1]} : vector<6x144xf32> to vector<6x4xf32>
    "tpu.trace_start"() <{level = 10 : i32, message = "qe,ke->qk"}> : () -> ()
    %cst_110 = arith.constant dense<0.000000e+00> : vector<6x6xf32>
    %310 = tpu.matmul %307, %308, %cst_110 {dimension_numbers = #tpu.dot_dimension_numbers<[1], [1], [0], [0], [0, 0, 1, 0], [], []>} : vector<6x4xf32>, vector<6x4xf32>, vector<6x6xf32> -> vector<6x6xf32>
    "tpu.trace_stop"() : () -> ()
    %cst_111 = arith.constant 5.000000e-01 : f32
    %311 = vector.broadcast %cst_111 : f32 to vector<6x6xf32>
    %312 = arith.mulf %310, %311 : vector<6x6xf32>
    %313 = arith.addf %312, %9 : vector<6x6xf32>
    %cst_112 = arith.constant dense<0xFF800000> : vector<6xf32>
    %314 = vector.multi_reduction <maximumf>, %313, %cst_112 [1] : vector<6x6xf32> to vector<6xf32>
    %315 = vector.shape_cast %314 : vector<6xf32> to vector<6x1xf32>
    %316 = vector.broadcast %315 : vector<6x1xf32> to vector<6x6xf32>
    %317 = arith.subf %313, %316 : vector<6x6xf32>
    %318 = math.exp %317 : vector<6x6xf32>
    %cst_113 = arith.constant dense<0.000000e+00> : vector<6xf32>
    %319 = vector.multi_reduction <add>, %318, %cst_113 [1] : vector<6x6xf32> to vector<6xf32>
    %320 = vector.shape_cast %319 : vector<6xf32> to vector<6x1xf32>
    %321 = tpu.reciprocal %320 {approx = true} : vector<6x1xf32> -> vector<6x1xf32>
    %322 = vector.broadcast %321 : vector<6x1xf32> to vector<6x6xf32>
    %323 = arith.mulf %318, %322 : vector<6x6xf32>
    %cst_114 = arith.constant dense<0.000000e+00> : vector<6x4xf32>
    %324 = tpu.matmul %323, %309, %cst_114 {dimension_numbers = #tpu.dot_dimension_numbers<[1], [0], [0], [1], [0, 0, 1, 1], [], []>} : vector<6x6xf32>, vector<6x4xf32>, vector<6x4xf32> -> vector<6x4xf32>
    %325 = vector.extract_strided_slice %288 {offsets = [0, 8], sizes = [6, 4], strides = [1, 1]} : vector<6x144xf32> to vector<6x4xf32>
    %326 = vector.extract_strided_slice %288 {offsets = [0, 24], sizes = [6, 4], strides = [1, 1]} : vector<6x144xf32> to vector<6x4xf32>
    %327 = vector.extract_strided_slice %288 {offsets = [0, 40], sizes = [6, 4], strides = [1, 1]} : vector<6x144xf32> to vector<6x4xf32>
    "tpu.trace_start"() <{level = 10 : i32, message = "qe,ke->qk"}> : () -> ()
    %cst_115 = arith.constant dense<0.000000e+00> : vector<6x6xf32>
    %328 = tpu.matmul %325, %326, %cst_115 {dimension_numbers = #tpu.dot_dimension_numbers<[1], [1], [0], [0], [0, 0, 1, 0], [], []>} : vector<6x4xf32>, vector<6x4xf32>, vector<6x6xf32> -> vector<6x6xf32>
    "tpu.trace_stop"() : () -> ()
    %cst_116 = arith.constant 5.000000e-01 : f32
    %329 = vector.broadcast %cst_116 : f32 to vector<6x6xf32>
    %330 = arith.mulf %328, %329 : vector<6x6xf32>
    %331 = arith.addf %330, %9 : vector<6x6xf32>
    %cst_117 = arith.constant dense<0xFF800000> : vector<6xf32>
    %332 = vector.multi_reduction <maximumf>, %331, %cst_117 [1] : vector<6x6xf32> to vector<6xf32>
    %333 = vector.shape_cast %332 : vector<6xf32> to vector<6x1xf32>
    %334 = vector.broadcast %333 : vector<6x1xf32> to vector<6x6xf32>
    %335 = arith.subf %331, %334 : vector<6x6xf32>
    %336 = math.exp %335 : vector<6x6xf32>
    %cst_118 = arith.constant dense<0.000000e+00> : vector<6xf32>
    %337 = vector.multi_reduction <add>, %336, %cst_118 [1] : vector<6x6xf32> to vector<6xf32>
    %338 = vector.shape_cast %337 : vector<6xf32> to vector<6x1xf32>
    %339 = tpu.reciprocal %338 {approx = true} : vector<6x1xf32> -> vector<6x1xf32>
    %340 = vector.broadcast %339 : vector<6x1xf32> to vector<6x6xf32>
    %341 = arith.mulf %336, %340 : vector<6x6xf32>
    %cst_119 = arith.constant dense<0.000000e+00> : vector<6x4xf32>
    %342 = tpu.matmul %341, %327, %cst_119 {dimension_numbers = #tpu.dot_dimension_numbers<[1], [0], [0], [1], [0, 0, 1, 1], [], []>} : vector<6x6xf32>, vector<6x4xf32>, vector<6x4xf32> -> vector<6x4xf32>
    %343 = vector.extract_strided_slice %288 {offsets = [0, 12], sizes = [6, 4], strides = [1, 1]} : vector<6x144xf32> to vector<6x4xf32>
    %344 = vector.extract_strided_slice %288 {offsets = [0, 28], sizes = [6, 4], strides = [1, 1]} : vector<6x144xf32> to vector<6x4xf32>
    %345 = vector.extract_strided_slice %288 {offsets = [0, 44], sizes = [6, 4], strides = [1, 1]} : vector<6x144xf32> to vector<6x4xf32>
    "tpu.trace_start"() <{level = 10 : i32, message = "qe,ke->qk"}> : () -> ()
    %cst_120 = arith.constant dense<0.000000e+00> : vector<6x6xf32>
    %346 = tpu.matmul %343, %344, %cst_120 {dimension_numbers = #tpu.dot_dimension_numbers<[1], [1], [0], [0], [0, 0, 1, 0], [], []>} : vector<6x4xf32>, vector<6x4xf32>, vector<6x6xf32> -> vector<6x6xf32>
    "tpu.trace_stop"() : () -> ()
    %cst_121 = arith.constant 5.000000e-01 : f32
    %347 = vector.broadcast %cst_121 : f32 to vector<6x6xf32>
    %348 = arith.mulf %346, %347 : vector<6x6xf32>
    %349 = arith.addf %348, %9 : vector<6x6xf32>
    %cst_122 = arith.constant dense<0xFF800000> : vector<6xf32>
    %350 = vector.multi_reduction <maximumf>, %349, %cst_122 [1] : vector<6x6xf32> to vector<6xf32>
    %351 = vector.shape_cast %350 : vector<6xf32> to vector<6x1xf32>
    %352 = vector.broadcast %351 : vector<6x1xf32> to vector<6x6xf32>
    %353 = arith.subf %349, %352 : vector<6x6xf32>
    %354 = math.exp %353 : vector<6x6xf32>
    %cst_123 = arith.constant dense<0.000000e+00> : vector<6xf32>
    %355 = vector.multi_reduction <add>, %354, %cst_123 [1] : vector<6x6xf32> to vector<6xf32>
    %356 = vector.shape_cast %355 : vector<6xf32> to vector<6x1xf32>
    %357 = tpu.reciprocal %356 {approx = true} : vector<6x1xf32> -> vector<6x1xf32>
    %358 = vector.broadcast %357 : vector<6x1xf32> to vector<6x6xf32>
    %359 = arith.mulf %354, %358 : vector<6x6xf32>
    %cst_124 = arith.constant dense<0.000000e+00> : vector<6x4xf32>
    %360 = tpu.matmul %359, %345, %cst_124 {dimension_numbers = #tpu.dot_dimension_numbers<[1], [0], [0], [1], [0, 0, 1, 1], [], []>} : vector<6x6xf32>, vector<6x4xf32>, vector<6x4xf32> -> vector<6x4xf32>
    %361 = vector.extract_strided_slice %288 {offsets = [0, 48], sizes = [6, 4], strides = [1, 1]} : vector<6x144xf32> to vector<6x4xf32>
    %362 = vector.extract_strided_slice %288 {offsets = [0, 64], sizes = [6, 4], strides = [1, 1]} : vector<6x144xf32> to vector<6x4xf32>
    %363 = vector.extract_strided_slice %288 {offsets = [0, 80], sizes = [6, 4], strides = [1, 1]} : vector<6x144xf32> to vector<6x4xf32>
    "tpu.trace_start"() <{level = 10 : i32, message = "qe,ke->qk"}> : () -> ()
    %cst_125 = arith.constant dense<0.000000e+00> : vector<6x6xf32>
    %364 = tpu.matmul %361, %362, %cst_125 {dimension_numbers = #tpu.dot_dimension_numbers<[1], [1], [0], [0], [0, 0, 1, 0], [], []>} : vector<6x4xf32>, vector<6x4xf32>, vector<6x6xf32> -> vector<6x6xf32>
    "tpu.trace_stop"() : () -> ()
    %cst_126 = arith.constant 5.000000e-01 : f32
    %365 = vector.broadcast %cst_126 : f32 to vector<6x6xf32>
    %366 = arith.mulf %364, %365 : vector<6x6xf32>
    %367 = arith.addf %366, %9 : vector<6x6xf32>
    %cst_127 = arith.constant dense<0xFF800000> : vector<6xf32>
    %368 = vector.multi_reduction <maximumf>, %367, %cst_127 [1] : vector<6x6xf32> to vector<6xf32>
    %369 = vector.shape_cast %368 : vector<6xf32> to vector<6x1xf32>
    %370 = vector.broadcast %369 : vector<6x1xf32> to vector<6x6xf32>
    %371 = arith.subf %367, %370 : vector<6x6xf32>
    %372 = math.exp %371 : vector<6x6xf32>
    %cst_128 = arith.constant dense<0.000000e+00> : vector<6xf32>
    %373 = vector.multi_reduction <add>, %372, %cst_128 [1] : vector<6x6xf32> to vector<6xf32>
    %374 = vector.shape_cast %373 : vector<6xf32> to vector<6x1xf32>
    %375 = tpu.reciprocal %374 {approx = true} : vector<6x1xf32> -> vector<6x1xf32>
    %376 = vector.broadcast %375 : vector<6x1xf32> to vector<6x6xf32>
    %377 = arith.mulf %372, %376 : vector<6x6xf32>
    %cst_129 = arith.constant dense<0.000000e+00> : vector<6x4xf32>
    %378 = tpu.matmul %377, %363, %cst_129 {dimension_numbers = #tpu.dot_dimension_numbers<[1], [0], [0], [1], [0, 0, 1, 1], [], []>} : vector<6x6xf32>, vector<6x4xf32>, vector<6x4xf32> -> vector<6x4xf32>
    %379 = vector.extract_strided_slice %288 {offsets = [0, 52], sizes = [6, 4], strides = [1, 1]} : vector<6x144xf32> to vector<6x4xf32>
    %380 = vector.extract_strided_slice %288 {offsets = [0, 68], sizes = [6, 4], strides = [1, 1]} : vector<6x144xf32> to vector<6x4xf32>
    %381 = vector.extract_strided_slice %288 {offsets = [0, 84], sizes = [6, 4], strides = [1, 1]} : vector<6x144xf32> to vector<6x4xf32>
    "tpu.trace_start"() <{level = 10 : i32, message = "qe,ke->qk"}> : () -> ()
    %cst_130 = arith.constant dense<0.000000e+00> : vector<6x6xf32>
    %382 = tpu.matmul %379, %380, %cst_130 {dimension_numbers = #tpu.dot_dimension_numbers<[1], [1], [0], [0], [0, 0, 1, 0], [], []>} : vector<6x4xf32>, vector<6x4xf32>, vector<6x6xf32> -> vector<6x6xf32>
    "tpu.trace_stop"() : () -> ()
    %cst_131 = arith.constant 5.000000e-01 : f32
    %383 = vector.broadcast %cst_131 : f32 to vector<6x6xf32>
    %384 = arith.mulf %382, %383 : vector<6x6xf32>
    %385 = arith.addf %384, %9 : vector<6x6xf32>
    %cst_132 = arith.constant dense<0xFF800000> : vector<6xf32>
    %386 = vector.multi_reduction <maximumf>, %385, %cst_132 [1] : vector<6x6xf32> to vector<6xf32>
    %387 = vector.shape_cast %386 : vector<6xf32> to vector<6x1xf32>
    %388 = vector.broadcast %387 : vector<6x1xf32> to vector<6x6xf32>
    %389 = arith.subf %385, %388 : vector<6x6xf32>
    %390 = math.exp %389 : vector<6x6xf32>
    %cst_133 = arith.constant dense<0.000000e+00> : vector<6xf32>
    %391 = vector.multi_reduction <add>, %390, %cst_133 [1] : vector<6x6xf32> to vector<6xf32>
    %392 = vector.shape_cast %391 : vector<6xf32> to vector<6x1xf32>
    %393 = tpu.reciprocal %392 {approx = true} : vector<6x1xf32> -> vector<6x1xf32>
    %394 = vector.broadcast %393 : vector<6x1xf32> to vector<6x6xf32>
    %395 = arith.mulf %390, %394 : vector<6x6xf32>
    %cst_134 = arith.constant dense<0.000000e+00> : vector<6x4xf32>
    %396 = tpu.matmul %395, %381, %cst_134 {dimension_numbers = #tpu.dot_dimension_numbers<[1], [0], [0], [1], [0, 0, 1, 1], [], []>} : vector<6x6xf32>, vector<6x4xf32>, vector<6x4xf32> -> vector<6x4xf32>
    %397 = vector.extract_strided_slice %288 {offsets = [0, 56], sizes = [6, 4], strides = [1, 1]} : vector<6x144xf32> to vector<6x4xf32>
    %398 = vector.extract_strided_slice %288 {offsets = [0, 72], sizes = [6, 4], strides = [1, 1]} : vector<6x144xf32> to vector<6x4xf32>
    %399 = vector.extract_strided_slice %288 {offsets = [0, 88], sizes = [6, 4], strides = [1, 1]} : vector<6x144xf32> to vector<6x4xf32>
    "tpu.trace_start"() <{level = 10 : i32, message = "qe,ke->qk"}> : () -> ()
    %cst_135 = arith.constant dense<0.000000e+00> : vector<6x6xf32>
    %400 = tpu.matmul %397, %398, %cst_135 {dimension_numbers = #tpu.dot_dimension_numbers<[1], [1], [0], [0], [0, 0, 1, 0], [], []>} : vector<6x4xf32>, vector<6x4xf32>, vector<6x6xf32> -> vector<6x6xf32>
    "tpu.trace_stop"() : () -> ()
    %cst_136 = arith.constant 5.000000e-01 : f32
    %401 = vector.broadcast %cst_136 : f32 to vector<6x6xf32>
    %402 = arith.mulf %400, %401 : vector<6x6xf32>
    %403 = arith.addf %402, %9 : vector<6x6xf32>
    %cst_137 = arith.constant dense<0xFF800000> : vector<6xf32>
    %404 = vector.multi_reduction <maximumf>, %403, %cst_137 [1] : vector<6x6xf32> to vector<6xf32>
    %405 = vector.shape_cast %404 : vector<6xf32> to vector<6x1xf32>
    %406 = vector.broadcast %405 : vector<6x1xf32> to vector<6x6xf32>
    %407 = arith.subf %403, %406 : vector<6x6xf32>
    %408 = math.exp %407 : vector<6x6xf32>
    %cst_138 = arith.constant dense<0.000000e+00> : vector<6xf32>
    %409 = vector.multi_reduction <add>, %408, %cst_138 [1] : vector<6x6xf32> to vector<6xf32>
    %410 = vector.shape_cast %409 : vector<6xf32> to vector<6x1xf32>
    %411 = tpu.reciprocal %410 {approx = true} : vector<6x1xf32> -> vector<6x1xf32>
    %412 = vector.broadcast %411 : vector<6x1xf32> to vector<6x6xf32>
    %413 = arith.mulf %408, %412 : vector<6x6xf32>
    %cst_139 = arith.constant dense<0.000000e+00> : vector<6x4xf32>
    %414 = tpu.matmul %413, %399, %cst_139 {dimension_numbers = #tpu.dot_dimension_numbers<[1], [0], [0], [1], [0, 0, 1, 1], [], []>} : vector<6x6xf32>, vector<6x4xf32>, vector<6x4xf32> -> vector<6x4xf32>
    %415 = vector.extract_strided_slice %288 {offsets = [0, 60], sizes = [6, 4], strides = [1, 1]} : vector<6x144xf32> to vector<6x4xf32>
    %416 = vector.extract_strided_slice %288 {offsets = [0, 76], sizes = [6, 4], strides = [1, 1]} : vector<6x144xf32> to vector<6x4xf32>
    %417 = vector.extract_strided_slice %288 {offsets = [0, 92], sizes = [6, 4], strides = [1, 1]} : vector<6x144xf32> to vector<6x4xf32>
    "tpu.trace_start"() <{level = 10 : i32, message = "qe,ke->qk"}> : () -> ()
    %cst_140 = arith.constant dense<0.000000e+00> : vector<6x6xf32>
    %418 = tpu.matmul %415, %416, %cst_140 {dimension_numbers = #tpu.dot_dimension_numbers<[1], [1], [0], [0], [0, 0, 1, 0], [], []>} : vector<6x4xf32>, vector<6x4xf32>, vector<6x6xf32> -> vector<6x6xf32>
    "tpu.trace_stop"() : () -> ()
    %cst_141 = arith.constant 5.000000e-01 : f32
    %419 = vector.broadcast %cst_141 : f32 to vector<6x6xf32>
    %420 = arith.mulf %418, %419 : vector<6x6xf32>
    %421 = arith.addf %420, %9 : vector<6x6xf32>
    %cst_142 = arith.constant dense<0xFF800000> : vector<6xf32>
    %422 = vector.multi_reduction <maximumf>, %421, %cst_142 [1] : vector<6x6xf32> to vector<6xf32>
    %423 = vector.shape_cast %422 : vector<6xf32> to vector<6x1xf32>
    %424 = vector.broadcast %423 : vector<6x1xf32> to vector<6x6xf32>
    %425 = arith.subf %421, %424 : vector<6x6xf32>
    %426 = math.exp %425 : vector<6x6xf32>
    %cst_143 = arith.constant dense<0.000000e+00> : vector<6xf32>
    %427 = vector.multi_reduction <add>, %426, %cst_143 [1] : vector<6x6xf32> to vector<6xf32>
    %428 = vector.shape_cast %427 : vector<6xf32> to vector<6x1xf32>
    %429 = tpu.reciprocal %428 {approx = true} : vector<6x1xf32> -> vector<6x1xf32>
    %430 = vector.broadcast %429 : vector<6x1xf32> to vector<6x6xf32>
    %431 = arith.mulf %426, %430 : vector<6x6xf32>
    %cst_144 = arith.constant dense<0.000000e+00> : vector<6x4xf32>
    %432 = tpu.matmul %431, %417, %cst_144 {dimension_numbers = #tpu.dot_dimension_numbers<[1], [0], [0], [1], [0, 0, 1, 1], [], []>} : vector<6x6xf32>, vector<6x4xf32>, vector<6x4xf32> -> vector<6x4xf32>
    %433 = vector.extract_strided_slice %288 {offsets = [0, 96], sizes = [6, 4], strides = [1, 1]} : vector<6x144xf32> to vector<6x4xf32>
    %434 = vector.extract_strided_slice %288 {offsets = [0, 112], sizes = [6, 4], strides = [1, 1]} : vector<6x144xf32> to vector<6x4xf32>
    %435 = vector.extract_strided_slice %288 {offsets = [0, 128], sizes = [6, 4], strides = [1, 1]} : vector<6x144xf32> to vector<6x4xf32>
    "tpu.trace_start"() <{level = 10 : i32, message = "qe,ke->qk"}> : () -> ()
    %cst_145 = arith.constant dense<0.000000e+00> : vector<6x6xf32>
    %436 = tpu.matmul %433, %434, %cst_145 {dimension_numbers = #tpu.dot_dimension_numbers<[1], [1], [0], [0], [0, 0, 1, 0], [], []>} : vector<6x4xf32>, vector<6x4xf32>, vector<6x6xf32> -> vector<6x6xf32>
    "tpu.trace_stop"() : () -> ()
    %cst_146 = arith.constant 5.000000e-01 : f32
    %437 = vector.broadcast %cst_146 : f32 to vector<6x6xf32>
    %438 = arith.mulf %436, %437 : vector<6x6xf32>
    %439 = arith.addf %438, %9 : vector<6x6xf32>
    %cst_147 = arith.constant dense<0xFF800000> : vector<6xf32>
    %440 = vector.multi_reduction <maximumf>, %439, %cst_147 [1] : vector<6x6xf32> to vector<6xf32>
    %441 = vector.shape_cast %440 : vector<6xf32> to vector<6x1xf32>
    %442 = vector.broadcast %441 : vector<6x1xf32> to vector<6x6xf32>
    %443 = arith.subf %439, %442 : vector<6x6xf32>
    %444 = math.exp %443 : vector<6x6xf32>
    %cst_148 = arith.constant dense<0.000000e+00> : vector<6xf32>
    %445 = vector.multi_reduction <add>, %444, %cst_148 [1] : vector<6x6xf32> to vector<6xf32>
    %446 = vector.shape_cast %445 : vector<6xf32> to vector<6x1xf32>
    %447 = tpu.reciprocal %446 {approx = true} : vector<6x1xf32> -> vector<6x1xf32>
    %448 = vector.broadcast %447 : vector<6x1xf32> to vector<6x6xf32>
    %449 = arith.mulf %444, %448 : vector<6x6xf32>
    %cst_149 = arith.constant dense<0.000000e+00> : vector<6x4xf32>
    %450 = tpu.matmul %449, %435, %cst_149 {dimension_numbers = #tpu.dot_dimension_numbers<[1], [0], [0], [1], [0, 0, 1, 1], [], []>} : vector<6x6xf32>, vector<6x4xf32>, vector<6x4xf32> -> vector<6x4xf32>
    %451 = vector.extract_strided_slice %288 {offsets = [0, 100], sizes = [6, 4], strides = [1, 1]} : vector<6x144xf32> to vector<6x4xf32>
    %452 = vector.extract_strided_slice %288 {offsets = [0, 116], sizes = [6, 4], strides = [1, 1]} : vector<6x144xf32> to vector<6x4xf32>
    %453 = vector.extract_strided_slice %288 {offsets = [0, 132], sizes = [6, 4], strides = [1, 1]} : vector<6x144xf32> to vector<6x4xf32>
    "tpu.trace_start"() <{level = 10 : i32, message = "qe,ke->qk"}> : () -> ()
    %cst_150 = arith.constant dense<0.000000e+00> : vector<6x6xf32>
    %454 = tpu.matmul %451, %452, %cst_150 {dimension_numbers = #tpu.dot_dimension_numbers<[1], [1], [0], [0], [0, 0, 1, 0], [], []>} : vector<6x4xf32>, vector<6x4xf32>, vector<6x6xf32> -> vector<6x6xf32>
    "tpu.trace_stop"() : () -> ()
    %cst_151 = arith.constant 5.000000e-01 : f32
    %455 = vector.broadcast %cst_151 : f32 to vector<6x6xf32>
    %456 = arith.mulf %454, %455 : vector<6x6xf32>
    %457 = arith.addf %456, %9 : vector<6x6xf32>
    %cst_152 = arith.constant dense<0xFF800000> : vector<6xf32>
    %458 = vector.multi_reduction <maximumf>, %457, %cst_152 [1] : vector<6x6xf32> to vector<6xf32>
    %459 = vector.shape_cast %458 : vector<6xf32> to vector<6x1xf32>
    %460 = vector.broadcast %459 : vector<6x1xf32> to vector<6x6xf32>
    %461 = arith.subf %457, %460 : vector<6x6xf32>
    %462 = math.exp %461 : vector<6x6xf32>
    %cst_153 = arith.constant dense<0.000000e+00> : vector<6xf32>
    %463 = vector.multi_reduction <add>, %462, %cst_153 [1] : vector<6x6xf32> to vector<6xf32>
    %464 = vector.shape_cast %463 : vector<6xf32> to vector<6x1xf32>
    %465 = tpu.reciprocal %464 {approx = true} : vector<6x1xf32> -> vector<6x1xf32>
    %466 = vector.broadcast %465 : vector<6x1xf32> to vector<6x6xf32>
    %467 = arith.mulf %462, %466 : vector<6x6xf32>
    %cst_154 = arith.constant dense<0.000000e+00> : vector<6x4xf32>
    %468 = tpu.matmul %467, %453, %cst_154 {dimension_numbers = #tpu.dot_dimension_numbers<[1], [0], [0], [1], [0, 0, 1, 1], [], []>} : vector<6x6xf32>, vector<6x4xf32>, vector<6x4xf32> -> vector<6x4xf32>
    %469 = vector.extract_strided_slice %288 {offsets = [0, 104], sizes = [6, 4], strides = [1, 1]} : vector<6x144xf32> to vector<6x4xf32>
    %470 = vector.extract_strided_slice %288 {offsets = [0, 120], sizes = [6, 4], strides = [1, 1]} : vector<6x144xf32> to vector<6x4xf32>
    %471 = vector.extract_strided_slice %288 {offsets = [0, 136], sizes = [6, 4], strides = [1, 1]} : vector<6x144xf32> to vector<6x4xf32>
    "tpu.trace_start"() <{level = 10 : i32, message = "qe,ke->qk"}> : () -> ()
    %cst_155 = arith.constant dense<0.000000e+00> : vector<6x6xf32>
    %472 = tpu.matmul %469, %470, %cst_155 {dimension_numbers = #tpu.dot_dimension_numbers<[1], [1], [0], [0], [0, 0, 1, 0], [], []>} : vector<6x4xf32>, vector<6x4xf32>, vector<6x6xf32> -> vector<6x6xf32>
    "tpu.trace_stop"() : () -> ()
    %cst_156 = arith.constant 5.000000e-01 : f32
    %473 = vector.broadcast %cst_156 : f32 to vector<6x6xf32>
    %474 = arith.mulf %472, %473 : vector<6x6xf32>
    %475 = arith.addf %474, %9 : vector<6x6xf32>
    %cst_157 = arith.constant dense<0xFF800000> : vector<6xf32>
    %476 = vector.multi_reduction <maximumf>, %475, %cst_157 [1] : vector<6x6xf32> to vector<6xf32>
    %477 = vector.shape_cast %476 : vector<6xf32> to vector<6x1xf32>
    %478 = vector.broadcast %477 : vector<6x1xf32> to vector<6x6xf32>
    %479 = arith.subf %475, %478 : vector<6x6xf32>
    %480 = math.exp %479 : vector<6x6xf32>
    %cst_158 = arith.constant dense<0.000000e+00> : vector<6xf32>
    %481 = vector.multi_reduction <add>, %480, %cst_158 [1] : vector<6x6xf32> to vector<6xf32>
    %482 = vector.shape_cast %481 : vector<6xf32> to vector<6x1xf32>
    %483 = tpu.reciprocal %482 {approx = true} : vector<6x1xf32> -> vector<6x1xf32>
    %484 = vector.broadcast %483 : vector<6x1xf32> to vector<6x6xf32>
    %485 = arith.mulf %480, %484 : vector<6x6xf32>
    %cst_159 = arith.constant dense<0.000000e+00> : vector<6x4xf32>
    %486 = tpu.matmul %485, %471, %cst_159 {dimension_numbers = #tpu.dot_dimension_numbers<[1], [0], [0], [1], [0, 0, 1, 1], [], []>} : vector<6x6xf32>, vector<6x4xf32>, vector<6x4xf32> -> vector<6x4xf32>
    %487 = vector.extract_strided_slice %288 {offsets = [0, 108], sizes = [6, 4], strides = [1, 1]} : vector<6x144xf32> to vector<6x4xf32>
    %488 = vector.extract_strided_slice %288 {offsets = [0, 124], sizes = [6, 4], strides = [1, 1]} : vector<6x144xf32> to vector<6x4xf32>
    %489 = vector.extract_strided_slice %288 {offsets = [0, 140], sizes = [6, 4], strides = [1, 1]} : vector<6x144xf32> to vector<6x4xf32>
    "tpu.trace_start"() <{level = 10 : i32, message = "qe,ke->qk"}> : () -> ()
    %cst_160 = arith.constant dense<0.000000e+00> : vector<6x6xf32>
    %490 = tpu.matmul %487, %488, %cst_160 {dimension_numbers = #tpu.dot_dimension_numbers<[1], [1], [0], [0], [0, 0, 1, 0], [], []>} : vector<6x4xf32>, vector<6x4xf32>, vector<6x6xf32> -> vector<6x6xf32>
    "tpu.trace_stop"() : () -> ()
    %cst_161 = arith.constant 5.000000e-01 : f32
    %491 = vector.broadcast %cst_161 : f32 to vector<6x6xf32>
    %492 = arith.mulf %490, %491 : vector<6x6xf32>
    %493 = arith.addf %492, %9 : vector<6x6xf32>
    %cst_162 = arith.constant dense<0xFF800000> : vector<6xf32>
    %494 = vector.multi_reduction <maximumf>, %493, %cst_162 [1] : vector<6x6xf32> to vector<6xf32>
    %495 = vector.shape_cast %494 : vector<6xf32> to vector<6x1xf32>
    %496 = vector.broadcast %495 : vector<6x1xf32> to vector<6x6xf32>
    %497 = arith.subf %493, %496 : vector<6x6xf32>
    %498 = math.exp %497 : vector<6x6xf32>
    %cst_163 = arith.constant dense<0.000000e+00> : vector<6xf32>
    %499 = vector.multi_reduction <add>, %498, %cst_163 [1] : vector<6x6xf32> to vector<6xf32>
    %500 = vector.shape_cast %499 : vector<6xf32> to vector<6x1xf32>
    %501 = tpu.reciprocal %500 {approx = true} : vector<6x1xf32> -> vector<6x1xf32>
    %502 = vector.broadcast %501 : vector<6x1xf32> to vector<6x6xf32>
    %503 = arith.mulf %498, %502 : vector<6x6xf32>
    %cst_164 = arith.constant dense<0.000000e+00> : vector<6x4xf32>
    %504 = tpu.matmul %503, %489, %cst_164 {dimension_numbers = #tpu.dot_dimension_numbers<[1], [0], [0], [1], [0, 0, 1, 1], [], []>} : vector<6x6xf32>, vector<6x4xf32>, vector<6x4xf32> -> vector<6x4xf32>
    %505 = tpu.concatenate %306, %324, %342, %360, %378, %396, %414, %432, %450, %468, %486, %504 in 1 : vector<6x4xf32>, vector<6x4xf32>, vector<6x4xf32>, vector<6x4xf32>, vector<6x4xf32>, vector<6x4xf32>, vector<6x4xf32>, vector<6x4xf32>, vector<6x4xf32>, vector<6x4xf32>, vector<6x4xf32>, vector<6x4xf32> -> vector<6x48xf32>
    %c5 = arith.constant 5 : index
    %c0_165 = arith.constant 0 : index
    %c0_166 = arith.constant 0 : index
    %506 = vector.load %arg1[%c5, %c0_165, %c0_166] : memref<8x48x48xf32, #tpu.memory_space<vmem>>, vector<1x48x48xf32>
    %507 = vector.shape_cast %506 : vector<1x48x48xf32> to vector<48x48xf32>
    %cst_167 = arith.constant dense<0.000000e+00> : vector<6x48xf32>
    %508 = tpu.matmul %505, %507, %cst_167 {dimension_numbers = #tpu.dot_dimension_numbers<[1], [0], [0], [1], [0, 0, 1, 1], [], []>} : vector<6x48xf32>, vector<48x48xf32>, vector<6x48xf32> -> vector<6x48xf32>
    %c13 = arith.constant 13 : index
    %c0_168 = arith.constant 0 : index
    %509 = vector.load %arg4[%c13, %c0_168] : memref<20x48xf32, #tpu.memory_space<vmem>>, vector<1x48xf32>
    %510 = vector.broadcast %509 : vector<1x48xf32> to vector<6x48xf32>
    %511 = arith.addf %508, %510 : vector<6x48xf32>
    %512 = arith.addf %282, %511 : vector<6x48xf32>
    %c16 = arith.constant 16 : index
    %c0_169 = arith.constant 0 : index
    %513 = vector.load %arg4[%c16, %c0_169] : memref<20x48xf32, #tpu.memory_space<vmem>>, vector<1x48xf32>
    %c17 = arith.constant 17 : index
    %c0_170 = arith.constant 0 : index
    %514 = vector.load %arg4[%c17, %c0_170] : memref<20x48xf32, #tpu.memory_space<vmem>>, vector<1x48xf32>
    %cst_171 = arith.constant dense<0.000000e+00> : vector<6x48xf32>
    %515 = tpu.matmul %512, %1, %cst_171 {dimension_numbers = #tpu.dot_dimension_numbers<[1], [0], [0], [1], [0, 0, 1, 1], [], []>} : vector<6x48xf32>, vector<48x48xf32>, vector<6x48xf32> -> vector<6x48xf32>
    %516 = arith.subf %512, %515 : vector<6x48xf32>
    %517 = arith.mulf %516, %516 : vector<6x48xf32>
    %cst_172 = arith.constant dense<0.000000e+00> : vector<6x48xf32>
    %518 = tpu.matmul %517, %1, %cst_172 {dimension_numbers = #tpu.dot_dimension_numbers<[1], [0], [0], [1], [0, 0, 1, 1], [], []>} : vector<6x48xf32>, vector<48x48xf32>, vector<6x48xf32> -> vector<6x48xf32>
    %cst_173 = arith.constant 9.99999974E-6 : f32
    %519 = vector.broadcast %cst_173 : f32 to vector<6x48xf32>
    %520 = arith.addf %518, %519 : vector<6x48xf32>
    %521 = math.rsqrt %520 : vector<6x48xf32>
    %522 = arith.mulf %516, %521 : vector<6x48xf32>
    %523 = vector.broadcast %513 : vector<1x48xf32> to vector<6x48xf32>
    %524 = arith.mulf %522, %523 : vector<6x48xf32>
    %525 = vector.broadcast %514 : vector<1x48xf32> to vector<6x48xf32>
    %526 = arith.addf %524, %525 : vector<6x48xf32>
    %c6_174 = arith.constant 6 : index
    %c0_175 = arith.constant 0 : index
    %c0_176 = arith.constant 0 : index
    %527 = vector.load %arg1[%c6_174, %c0_175, %c0_176] : memref<8x48x48xf32, #tpu.memory_space<vmem>>, vector<1x48x48xf32>
    %528 = vector.shape_cast %527 : vector<1x48x48xf32> to vector<48x48xf32>
    %cst_177 = arith.constant dense<0.000000e+00> : vector<6x48xf32>
    %529 = tpu.matmul %526, %528, %cst_177 {dimension_numbers = #tpu.dot_dimension_numbers<[1], [0], [0], [1], [0, 0, 1, 1], [], []>} : vector<6x48xf32>, vector<48x48xf32>, vector<6x48xf32> -> vector<6x48xf32>
    %c14 = arith.constant 14 : index
    %c0_178 = arith.constant 0 : index
    %530 = vector.load %arg4[%c14, %c0_178] : memref<20x48xf32, #tpu.memory_space<vmem>>, vector<1x48xf32>
    %531 = vector.broadcast %530 : vector<1x48xf32> to vector<6x48xf32>
    %532 = arith.addf %529, %531 : vector<6x48xf32>
    %cst_179 = arith.constant 0.000000e+00 : f32
    %533 = vector.broadcast %cst_179 : f32 to vector<6x48xf32>
    %534 = arith.maximumf %532, %533 : vector<6x48xf32>
    %c7_180 = arith.constant 7 : index
    %c0_181 = arith.constant 0 : index
    %c0_182 = arith.constant 0 : index
    %535 = vector.load %arg1[%c7_180, %c0_181, %c0_182] : memref<8x48x48xf32, #tpu.memory_space<vmem>>, vector<1x48x48xf32>
    %536 = vector.shape_cast %535 : vector<1x48x48xf32> to vector<48x48xf32>
    %cst_183 = arith.constant dense<0.000000e+00> : vector<6x48xf32>
    %537 = tpu.matmul %534, %536, %cst_183 {dimension_numbers = #tpu.dot_dimension_numbers<[1], [0], [0], [1], [0, 0, 1, 1], [], []>} : vector<6x48xf32>, vector<48x48xf32>, vector<6x48xf32> -> vector<6x48xf32>
    %c15 = arith.constant 15 : index
    %c0_184 = arith.constant 0 : index
    %538 = vector.load %arg4[%c15, %c0_184] : memref<20x48xf32, #tpu.memory_space<vmem>>, vector<1x48xf32>
    %539 = vector.broadcast %538 : vector<1x48xf32> to vector<6x48xf32>
    %540 = arith.addf %537, %539 : vector<6x48xf32>
    %541 = arith.addf %526, %540 : vector<6x48xf32>
    %c18 = arith.constant 18 : index
    %c0_185 = arith.constant 0 : index
    %542 = vector.load %arg4[%c18, %c0_185] : memref<20x48xf32, #tpu.memory_space<vmem>>, vector<1x48xf32>
    %c19 = arith.constant 19 : index
    %c0_186 = arith.constant 0 : index
    %543 = vector.load %arg4[%c19, %c0_186] : memref<20x48xf32, #tpu.memory_space<vmem>>, vector<1x48xf32>
    %cst_187 = arith.constant dense<0.000000e+00> : vector<6x48xf32>
    %544 = tpu.matmul %541, %1, %cst_187 {dimension_numbers = #tpu.dot_dimension_numbers<[1], [0], [0], [1], [0, 0, 1, 1], [], []>} : vector<6x48xf32>, vector<48x48xf32>, vector<6x48xf32> -> vector<6x48xf32>
    %545 = arith.subf %541, %544 : vector<6x48xf32>
    %546 = arith.mulf %545, %545 : vector<6x48xf32>
    %cst_188 = arith.constant dense<0.000000e+00> : vector<6x48xf32>
    %547 = tpu.matmul %546, %1, %cst_188 {dimension_numbers = #tpu.dot_dimension_numbers<[1], [0], [0], [1], [0, 0, 1, 1], [], []>} : vector<6x48xf32>, vector<48x48xf32>, vector<6x48xf32> -> vector<6x48xf32>
    %cst_189 = arith.constant 9.99999974E-6 : f32
    %548 = vector.broadcast %cst_189 : f32 to vector<6x48xf32>
    %549 = arith.addf %547, %548 : vector<6x48xf32>
    %550 = math.rsqrt %549 : vector<6x48xf32>
    %551 = arith.mulf %545, %550 : vector<6x48xf32>
    %552 = vector.broadcast %542 : vector<1x48xf32> to vector<6x48xf32>
    %553 = arith.mulf %551, %552 : vector<6x48xf32>
    %554 = vector.broadcast %543 : vector<1x48xf32> to vector<6x48xf32>
    %555 = arith.addf %553, %554 : vector<6x48xf32>
    %c2_190 = arith.constant 2 : index
    %c0_191 = arith.constant 0 : index
    %556 = vector.load %arg5[%c2_190, %c0_191] : memref<9x144xf32, #tpu.memory_space<vmem>>, vector<1x144xf32>
    %557 = vector.extract_strided_slice %556 {offsets = [0, 0], sizes = [1, 96], strides = [1, 1]} : vector<1x144xf32> to vector<1x96xf32>
    %558 = vector.extract_strided_slice %555 {offsets = [0, 0], sizes = [2, 48], strides = [1, 1]} : vector<6x48xf32> to vector<2x48xf32>
    %c0_192 = arith.constant 0 : index
    %c0_193 = arith.constant 0 : index
    %c0_194 = arith.constant 0 : index
    %559 = vector.load %arg3[%c0_192, %c0_193, %c0_194] : memref<3x48x96xf32, #tpu.memory_space<vmem>>, vector<1x48x96xf32>
    %560 = vector.shape_cast %559 : vector<1x48x96xf32> to vector<48x96xf32>
    %cst_195 = arith.constant dense<0.000000e+00> : vector<2x96xf32>
    %561 = tpu.matmul %558, %560, %cst_195 {dimension_numbers = #tpu.dot_dimension_numbers<[1], [0], [0], [1], [0, 0, 1, 1], [], []>} : vector<2x48xf32>, vector<48x96xf32>, vector<2x96xf32> -> vector<2x96xf32>
    %562 = vector.broadcast %557 : vector<1x96xf32> to vector<2x96xf32>
    %563 = arith.addf %562, %561 : vector<2x96xf32>
    %564 = vector.extract_strided_slice %555 {offsets = [2, 0], sizes = [2, 48], strides = [1, 1]} : vector<6x48xf32> to vector<2x48xf32>
    %c1_196 = arith.constant 1 : index
    %c0_197 = arith.constant 0 : index
    %c0_198 = arith.constant 0 : index
    %565 = vector.load %arg3[%c1_196, %c0_197, %c0_198] : memref<3x48x96xf32, #tpu.memory_space<vmem>>, vector<1x48x96xf32>
    %566 = vector.shape_cast %565 : vector<1x48x96xf32> to vector<48x96xf32>
    %cst_199 = arith.constant dense<0.000000e+00> : vector<2x96xf32>
    %567 = tpu.matmul %564, %566, %cst_199 {dimension_numbers = #tpu.dot_dimension_numbers<[1], [0], [0], [1], [0, 0, 1, 1], [], []>} : vector<2x48xf32>, vector<48x96xf32>, vector<2x96xf32> -> vector<2x96xf32>
    %568 = arith.addf %563, %567 : vector<2x96xf32>
    %569 = vector.extract_strided_slice %555 {offsets = [4, 0], sizes = [2, 48], strides = [1, 1]} : vector<6x48xf32> to vector<2x48xf32>
    %c2_200 = arith.constant 2 : index
    %c0_201 = arith.constant 0 : index
    %c0_202 = arith.constant 0 : index
    %570 = vector.load %arg3[%c2_200, %c0_201, %c0_202] : memref<3x48x96xf32, #tpu.memory_space<vmem>>, vector<1x48x96xf32>
    %571 = vector.shape_cast %570 : vector<1x48x96xf32> to vector<48x96xf32>
    %cst_203 = arith.constant dense<0.000000e+00> : vector<2x96xf32>
    %572 = tpu.matmul %569, %571, %cst_203 {dimension_numbers = #tpu.dot_dimension_numbers<[1], [0], [0], [1], [0, 0, 1, 1], [], []>} : vector<2x48xf32>, vector<48x96xf32>, vector<2x96xf32> -> vector<2x96xf32>
    %573 = arith.addf %568, %572 : vector<2x96xf32>
    %c0_204 = arith.constant 0 : index
    %c0_205 = arith.constant 0 : index
    %574 = vector.load %arg6[%c0_204, %c0_205] : memref<2x96xf32, #tpu.memory_space<vmem>>, vector<2x96xf32>
    tpu.vector_store %arg6[%c0_204, %c0_205], %573 {strides = array<i32>} : memref<2x96xf32, #tpu.memory_space<vmem>>, vector<2x96xf32>,
    return
  }
}

</mosaic_0001>

<llo_original>
// kernel: tile.9
$region0: #{tile.9}
  %s0 = inlined_call_operand.vmem [shape: f32[3,3,16], index: 0, kind: input, shape index: {}]
  %s1 = inlined_call_operand.vmem [shape: f32[3,48], index: 1, kind: output, shape index: {}]
  $region1: #{tile.9} parent=0
    #allocation0 [shape = 'u8[4096]{0}', space=vmem, size = 0x1000, scoped, tag = 'scoped mem for output reshape']
    #allocation1 [shape = 'u8[12288]{0}', space=vmem, size = 0x3000, scoped, tag = 'scoped mem for input reshape']
    %s3 = ssub.s32 16, 1
    %s4 = scalar_lea.vmem %s0, 8
    %v5 = vld [vmem:[%s4] sm:%s3]
    %s6 = scalar_lea.vmem [#allocation1], 16
    %7 = vst [vmem:[%s6] sm:%s3] %v5
    %s8 = scalar_lea.vmem %s0, 4
    %v9 = vld [vmem:[%s8] sm:%s3]
    %s10 = scalar_lea.vmem [#allocation1], 8
    %11 = vst [vmem:[%s10] sm:%s3] %v9
    %v12 = vld [vmem:[%s0] sm:%s3]
    %13 = vst [vmem:[#allocation1] sm:%s3] %v12
    %v14 = vld [vmem:[#allocation1] ss:$8 sm:$0x7]
    %vm15 = vcmask 130048
    %16 = vst.msk [vmem:[#allocation0] sm:$0x7] %vm15, %v14
    %s17 = scalar_lea.vmem [#allocation1], 2
    %v18 = vld [vmem:[%s17] ss:$8 sm:$0x7]
    %19 = vrot.lane.b32.xlu0 %v18, 32
    %v20 = vpop.permute.xlu0 %19
    %vm21 = vcmask 392448
    %22 = vst.msk [vmem:[#allocation0] sm:$0x7] %vm21, %v20
    %s23 = scalar_lea.vmem [#allocation1], 1
    %v24 = vld [vmem:[%s23] ss:$8 sm:$0x7]
    %25 = vrot.lane.b32.xlu0 %v24, 16
    %v26 = vpop.permute.xlu0 %25
    %vm27 = vcmask 261248
    %28 = vst.msk [vmem:[#allocation0] sm:$0x7] %vm27, %v26
    %s30 = ssub.s32 16, 1
    %v31 = vld [vmem:[#allocation0] sm:%s30]
    %s33 = ssub.s32 16, 1
    %34 = vst [vmem:[%s1] sm:%s33] %v31

// kernel: forward.1
$region0: #{forward.1}
  #allocation0 [shape = 'u32[]', space=smem, size = 0x4, offset = 0x4, fixed_abs, tag = 'smem constant byte address 0x4 - core index']
  #allocation1 [shape = 'u32[72,128]{1,0:T(1,128)}', space=vmem, size = 0x9000, scoped, tag = 'internal scratch']
  %s0 = inlined_call_operand.vmem [shape: f32[6,48], index: 0, kind: input, shape index: {}]
  %s1 = inlined_call_operand.vmem [shape: f32[8,48,48], index: 1, kind: input, shape index: {}]
  %s2 = inlined_call_operand.vmem [shape: f32[2,48,144], index: 2, kind: input, shape index: {}]
  %s3 = inlined_call_operand.vmem [shape: f32[3,48,96], index: 3, kind: input, shape index: {}]
  %s4 = inlined_call_operand.vmem [shape: f32[20,48], index: 4, kind: input, shape index: {}]
  %s5 = inlined_call_operand.vmem [shape: f32[9,144], index: 5, kind: input, shape index: {}]
  %s6 = inlined_call_operand.vmem [shape: f32[2,96], index: 6, kind: output, shape index: {}]
  %s7 = sld [smem:[#allocation0]]
  $region34: #{forward.1} parent=0
    _
  %s9 = ssub.s32 1, %s7
  %s10 = scalar_select 0, %s9, %s7
  // Predicated region
  $region2: #{forward.1} parent=0 // pred_check
    _
  $region3: #{forward.1} parent=0 // pred_check_branch
    %12 = sbr.rel (0) target = $region5
  $region4: #{forward.1} parent=0 // pred_region
    _
  $region5: #{forward.1} parent=0 // pred_fallthru
    _
  // Predicated region
  $region6: #{forward.1} parent=0 // pred_check
    _
  $region7: #{forward.1} parent=0 // pred_check_branch
    %14 = sbr.rel (0) target = $region9
  $region8: #{forward.1} parent=0 // pred_region
    _
  $region9: #{forward.1} parent=0 // pred_fallthru
    _
  // Predicated region
  $region10: #{forward.1} parent=0 // pred_check
    _
  $region11: #{forward.1} parent=0 // pred_check_branch
    %16 = sbr.rel (0) target = $region13
  $region12: #{forward.1} parent=0 // pred_region
    _
  $region13: #{forward.1} parent=0 // pred_fallthru
    _
  // Predicated region
  $region14: #{forward.1} parent=0 // pred_check
    _
  $region15: #{forward.1} parent=0 // pred_check_branch
    %18 = sbr.rel (0) target = $region17
  $region16: #{forward.1} parent=0 // pred_region
    _
  $region17: #{forward.1} parent=0 // pred_fallthru
    _
  // Predicated region
  $region18: #{forward.1} parent=0 // pred_check
    _
  $region19: #{forward.1} parent=0 // pred_check_branch
    %20 = sbr.rel (0) target = $region21
  $region20: #{forward.1} parent=0 // pred_region
    _
  $region21: #{forward.1} parent=0 // pred_fallthru
    _
  // Predicated region
  $region22: #{forward.1} parent=0 // pred_check
    _
  $region23: #{forward.1} parent=0 // pred_check_branch
    %22 = sbr.rel (0) target = $region25
  $region24: #{forward.1} parent=0 // pred_region
    _
  $region25: #{forward.1} parent=0 // pred_fallthru
    _
  %s23 = scalar_lea.vmem %s1, 48
  %v24 = vld [vmem:[%s23] sm:$0xff]
  %v25 = vld [vmem:[%s23 + $0x8] sm:$0xff]
  %v26 = vld [vmem:[%s23 + $0x10] sm:$0xff]
  %v27 = vld [vmem:[%s23 + $0x18] sm:$0xff]
  %v28 = vld [vmem:[%s23 + $0x20] sm:$0xff]
  %v29 = vld [vmem:[%s23 + $0x28] sm:$0xff]
  %v30 = vld [vmem:[%s0] sm:$0x3f]
  %v31 = vld [vmem:[%s1] sm:$0xff]
  %v32 = vld [vmem:[%s1 + $0x8] sm:$0xff]
  %v33 = vld [vmem:[%s1 + $0x10] sm:$0xff]
  %v34 = vld [vmem:[%s1 + $0x18] sm:$0xff]
  %v35 = vld [vmem:[%s1 + $0x20] sm:$0xff]
  %v36 = vld [vmem:[%s1 + $0x28] sm:$0xff]
  %v37 = vld [vmem:[%s4] sm:$0x3f]
  %vm38 = vcmask 392192
  %v40 = vsel %vm38, %v30, 0
  %42 = vmatpush.msra.mxu0 0.0
  %43 = vmatpush.msra.mxu0 0.0
  %44 = vmatpush.msra.mxu0 0.0
  %45 = vmatpush.msra.mxu0 0.0
  %46 = vmatpush.msra.mxu0 0.0
  %47 = vmatpush.msra.mxu0 0.0
  %48 = vmatpush.msra.mxu0 0.0
  %49 = vmatpush.msra.mxu0 0.0
  %50 = vmatpush.msra.mxu0 0.0
  %51 = vmatpush.msra.mxu0 0.0
  %52 = vmatpush.msra.mxu0 %v36
  %53 = vmatpush.msra.mxu0 %v35
  %54 = vmatpush.msra.mxu0 %v34
  %55 = vmatpush.msra.mxu0 %v33
  %56 = vmatpush.msra.mxu0 %v32
  %57 = vmatpush.msra.mxu0 %v31
  %58 = vmatmul.f32.gmra.mxu0 %v40
  %v59 = vpop.f32.mrf.mxu0
  %v60 = vadd.f32 %v37, %v59
  %61 = vdwg.mxu0
  %v62 = vld [vmem:[%s5] sm:$0xf8]
  %v63 = vld [vmem:[%s5 + $0x10] sm:$0x1]
  %v64 = vld [vmem:[%s2] sm:$0xff]
  %v65 = vld [vmem:[%s2 + $0x8] sm:$0xff]
  %v66 = vld [vmem:[%s2 + $0x10] sm:$0xff]
  %v67 = vld [vmem:[%s2 + $0x18] sm:$0xff]
  %v68 = vld [vmem:[%s2 + $0x20] sm:$0xff]
  %v69 = vld [vmem:[%s2 + $0x28] sm:$0xff]
  %v70 = vld [vmem:[%s2 + $0x30] sm:$0xff]
  %v71 = vld [vmem:[%s2 + $0x38] sm:$0xff]
  %v72 = vld [vmem:[%s2 + $0x40] sm:$0xff]
  %v73 = vld [vmem:[%s2 + $0x48] sm:$0xff]
  %v74 = vld [vmem:[%s2 + $0x50] sm:$0xff]
  %v75 = vld [vmem:[%s2 + $0x58] sm:$0xff]
  %v76 = vld [vmem:[%s5] ss:$8 sm:$0x3]
  %v78 = vperm.slane %v76, 0
  %v79 = vperm.slane %v76, 1
  %v83 = vsel %vm38, %v60, 0
  %85 = vmatpush.msra.mxu0 0.0
  %86 = vmatpush.msra.mxu0 0.0
  %87 = vmatpush.msra.mxu0 0.0
  %88 = vmatpush.msra.mxu0 0.0
  %89 = vmatpush.msra.mxu0 0.0
  %90 = vmatpush.msra.mxu0 0.0
  %91 = vmatpush.msra.mxu0 0.0
  %92 = vmatpush.msra.mxu0 0.0
  %93 = vmatpush.msra.mxu0 0.0
  %94 = vmatpush.msra.mxu0 0.0
  %95 = vmatpush.msra.mxu0 %v74
  %96 = vmatpush.msra.mxu0 %v72
  %97 = vmatpush.msra.mxu0 %v70
  %98 = vmatpush.msra.mxu0 %v68
  %99 = vmatpush.msra.mxu0 %v66
  %100 = vmatpush.msra.mxu0 %v64
  %101 = vmatmul.f32.gmra.mxu0 %v83
  %v102 = vpop.f32.mrf.mxu0
  %v103 = vadd.f32 %v78, %v102
  %104 = vdwg.mxu0
  %105 = vmatpush.msra.mxu0 0.0
  %106 = vmatpush.msra.mxu0 0.0
  %107 = vmatpush.msra.mxu0 0.0
  %108 = vmatpush.msra.mxu0 0.0
  %109 = vmatpush.msra.mxu0 0.0
  %110 = vmatpush.msra.mxu0 0.0
  %111 = vmatpush.msra.mxu0 0.0
  %112 = vmatpush.msra.mxu0 0.0
  %113 = vmatpush.msra.mxu0 0.0
  %114 = vmatpush.msra.mxu0 0.0
  %115 = vmatpush.msra.mxu0 %v75
  %116 = vmatpush.msra.mxu0 %v73
  %117 = vmatpush.msra.mxu0 %v71
  %118 = vmatpush.msra.mxu0 %v69
  %119 = vmatpush.msra.mxu0 %v67
  %120 = vmatpush.msra.mxu0 %v65
  %121 = vmatmul.f32.gmra.mxu0 %v83
  %v122 = vpop.f32.mrf.mxu0
  %v123 = vadd.f32 %v79, %v122
  %124 = vdwg.mxu0
  %126 = vrot.lane.b32.xlu0 %v103, 112
  %v127 = vpop.permute.xlu0 %126
  %vm128 = vcmask 31744
  %v129 = vsel %vm128, %v103, 0
  %v131 = vsel %vm128, %v127, 0
  %133 = vmatpush.xpose.msra.mxu0 0.0
  %134 = vmatpush.xpose.msra.mxu0 0.0
  %135 = vmatpush.xpose.msra.mxu0 0.0
  %136 = vmatpush.xpose.msra.mxu0 0.0
  %137 = vmatpush.xpose.msra.mxu0 0.0
  %138 = vmatpush.xpose.msra.mxu0 0.0
  %139 = vmatpush.xpose.msra.mxu0 0.0
  %140 = vmatpush.xpose.msra.mxu0 0.0
  %141 = vmatpush.xpose.msra.mxu0 0.0
  %142 = vmatpush.xpose.msra.mxu0 0.0
  %143 = vmatpush.xpose.msra.mxu0 0.0
  %144 = vmatpush.xpose.msra.mxu0 0.0
  %145 = vmatpush.xpose.msra.mxu0 0.0
  %146 = vmatpush.xpose.msra.mxu0 0.0
  %147 = vmatpush.xpose.msra.mxu0 0.0
  %148 = vmatpush.xpose.msra.mxu0 %v131
  %149 = vmatmul.f32.gmra.mxu0 %v129
  %v150 = vpop.f32.mrf.mxu0
  %v151 = vadd.f32 0.0, %v150
  %152 = vdwg.mxu0
  %v153 = vmul.f32 %v151, 0.5
  %vm156 = vcmask 1044480
  %v157 = vrot.slane %v62, 3
  %v158 = vrot.slane %v63, 3
  %v159 = vsel %vm156, %v157, %v158
  %v161 = vadd.f32 %v153, %v159
  %vm162 = vcmask 46080
  %v163 = vsel %vm162, %v161, -inf
  %164 = vmax.xlane.f32.xlu0 %v163
  %v165 = vpop.xlane.xlu0 %164
  %v166 = vsub.f32 %v161, %v165
  %v167 = vmul.f32 %v166, 1.442695
  %v168 = vpow.pop %v167
  %v169 = vsel %vm162, %v168, 0.0
  %170 = vadd.xlane.f32.xlu0 %v169
  %v171 = vpop.xlane.xlu0 %170
  %v172 = vrcp.pop %v171
  %v173 = vmul.f32 %v168, %v172
  %174 = vrot.lane.b32.xlu0 %v103, 96
  %v175 = vpop.permute.xlu0 %174
  %vm176 = vcmask 48128
  %v178 = vsel %vm176, %v173, 0
  %vm180 = vcmask 1045504
  %v181 = vsel %vm180, %v175, 0
  %183 = vmatpush.msra.mxu0 0.0
  %184 = vmatpush.msra.mxu0 0.0
  %185 = vmatpush.msra.mxu0 0.0
  %186 = vmatpush.msra.mxu0 0.0
  %187 = vmatpush.msra.mxu0 0.0
  %188 = vmatpush.msra.mxu0 0.0
  %189 = vmatpush.msra.mxu0 0.0
  %190 = vmatpush.msra.mxu0 0.0
  %191 = vmatpush.msra.mxu0 0.0
  %192 = vmatpush.msra.mxu0 0.0
  %193 = vmatpush.msra.mxu0 0.0
  %194 = vmatpush.msra.mxu0 0.0
  %195 = vmatpush.msra.mxu0 0.0
  %196 = vmatpush.msra.mxu0 0.0
  %197 = vmatpush.msra.mxu0 0.0
  %198 = vmatpush.msra.mxu0 %v181
  %199 = vmatmul.f32.gmra.mxu0 %v178
  %v200 = vpop.f32.mrf.mxu0
  %v201 = vadd.f32 0.0, %v200
  %202 = vdwg.mxu0
  %203 = vrot.lane.b32.xlu0 %v103, 124
  %v204 = vpop.permute.xlu0 %203
  %205 = vrot.lane.b32.xlu0 %v103, 108
  %v206 = vpop.permute.xlu0 %205
  %v207 = vsel %vm128, %v204, 0
  %v209 = vsel %vm128, %v206, 0
  %211 = vmatpush.xpose.msra.mxu0 0.0
  %212 = vmatpush.xpose.msra.mxu0 0.0
  %213 = vmatpush.xpose.msra.mxu0 0.0
  %214 = vmatpush.xpose.msra.mxu0 0.0
  %215 = vmatpush.xpose.msra.mxu0 0.0
  %216 = vmatpush.xpose.msra.mxu0 0.0
  %217 = vmatpush.xpose.msra.mxu0 0.0
  %218 = vmatpush.xpose.msra.mxu0 0.0
  %219 = vmatpush.xpose.msra.mxu0 0.0
  %220 = vmatpush.xpose.msra.mxu0 0.0
  %221 = vmatpush.xpose.msra.mxu0 0.0
  %222 = vmatpush.xpose.msra.mxu0 0.0
  %223 = vmatpush.xpose.msra.mxu0 0.0
  %224 = vmatpush.xpose.msra.mxu0 0.0
  %225 = vmatpush.xpose.msra.mxu0 0.0
  %226 = vmatpush.xpose.msra.mxu0 %v209
  %227 = vmatmul.f32.gmra.mxu0 %v207
  %v228 = vpop.f32.mrf.mxu0
  %v229 = vadd.f32 0.0, %v228
  %230 = vdwg.mxu0
  %v231 = vmul.f32 %v229, 0.5
  %v232 = vadd.f32 %v231, %v159
  %v233 = vsel %vm162, %v232, -inf
  %234 = vmax.xlane.f32.xlu0 %v233
  %v235 = vpop.xlane.xlu0 %234
  %v236 = vsub.f32 %v232, %v235
  %v237 = vmul.f32 %v236, 1.442695
  %v238 = vpow.pop %v237
  %v239 = vsel %vm162, %v238, 0.0
  %240 = vadd.xlane.f32.xlu0 %v239
  %v241 = vpop.xlane.xlu0 %240
  %v242 = vrcp.pop %v241
  %v243 = vmul.f32 %v238, %v242
  %244 = vrot.lane.b32.xlu0 %v103, 92
  %v245 = vpop.permute.xlu0 %244
  %v247 = vsel %vm176, %v243, 0
  %v249 = vsel %vm180, %v245, 0
  %251 = vmatpush.msra.mxu0 0.0
  %252 = vmatpush.msra.mxu0 0.0
  %253 = vmatpush.msra.mxu0 0.0
  %254 = vmatpush.msra.mxu0 0.0
  %255 = vmatpush.msra.mxu0 0.0
  %256 = vmatpush.msra.mxu0 0.0
  %257 = vmatpush.msra.mxu0 0.0
  %258 = vmatpush.msra.mxu0 0.0
  %259 = vmatpush.msra.mxu0 0.0
  %260 = vmatpush.msra.mxu0 0.0
  %261 = vmatpush.msra.mxu0 0.0
  %262 = vmatpush.msra.mxu0 0.0
  %263 = vmatpush.msra.mxu0 0.0
  %264 = vmatpush.msra.mxu0 0.0
  %265 = vmatpush.msra.mxu0 0.0
  %266 = vmatpush.msra.mxu0 %v249
  %267 = vmatmul.f32.gmra.mxu0 %v247
  %v268 = vpop.f32.mrf.mxu0
  %v269 = vadd.f32 0.0, %v268
  %270 = vdwg.mxu0
  %271 = vrot.lane.b32.xlu0 %v103, 120
  %v272 = vpop.permute.xlu0 %271
  %273 = vrot.lane.b32.xlu0 %v103, 104
  %v274 = vpop.permute.xlu0 %273
  %v275 = vsel %vm128, %v272, 0
  %v277 = vsel %vm128, %v274, 0
  %279 = vmatpush.xpose.msra.mxu0 0.0
  %280 = vmatpush.xpose.msra.mxu0 0.0
  %281 = vmatpush.xpose.msra.mxu0 0.0
  %282 = vmatpush.xpose.msra.mxu0 0.0
  %283 = vmatpush.xpose.msra.mxu0 0.0
  %284 = vmatpush.xpose.msra.mxu0 0.0
  %285 = vmatpush.xpose.msra.mxu0 0.0
  %286 = vmatpush.xpose.msra.mxu0 0.0
  %287 = vmatpush.xpose.msra.mxu0 0.0
  %288 = vmatpush.xpose.msra.mxu0 0.0
  %289 = vmatpush.xpose.msra.mxu0 0.0
  %290 = vmatpush.xpose.msra.mxu0 0.0
  %291 = vmatpush.xpose.msra.mxu0 0.0
  %292 = vmatpush.xpose.msra.mxu0 0.0
  %293 = vmatpush.xpose.msra.mxu0 0.0
  %294 = vmatpush.xpose.msra.mxu0 %v277
  %295 = vmatmul.f32.gmra.mxu0 %v275
  %v296 = vpop.f32.mrf.mxu0
  %v297 = vadd.f32 0.0, %v296
  %298 = vdwg.mxu0
  %v299 = vmul.f32 %v297, 0.5
  %v300 = vadd.f32 %v299, %v159
  %v301 = vsel %vm162, %v300, -inf
  %302 = vmax.xlane.f32.xlu0 %v301
  %v303 = vpop.xlane.xlu0 %302
  %v304 = vsub.f32 %v300, %v303
  %v305 = vmul.f32 %v304, 1.442695
  %v306 = vpow.pop %v305
  %v307 = vsel %vm162, %v306, 0.0
  %308 = vadd.xlane.f32.xlu0 %v307
  %v309 = vpop.xlane.xlu0 %308
  %v310 = vrcp.pop %v309
  %v311 = vmul.f32 %v306, %v310
  %312 = vrot.lane.b32.xlu0 %v103, 88
  %v313 = vpop.permute.xlu0 %312
  %v315 = vsel %vm176, %v311, 0
  %v317 = vsel %vm180, %v313, 0
  %319 = vmatpush.msra.mxu0 0.0
  %320 = vmatpush.msra.mxu0 0.0
  %321 = vmatpush.msra.mxu0 0.0
  %322 = vmatpush.msra.mxu0 0.0
  %323 = vmatpush.msra.mxu0 0.0
  %324 = vmatpush.msra.mxu0 0.0
  %325 = vmatpush.msra.mxu0 0.0
  %326 = vmatpush.msra.mxu0 0.0
  %327 = vmatpush.msra.mxu0 0.0
  %328 = vmatpush.msra.mxu0 0.0
  %329 = vmatpush.msra.mxu0 0.0
  %330 = vmatpush.msra.mxu0 0.0
  %331 = vmatpush.msra.mxu0 0.0
  %332 = vmatpush.msra.mxu0 0.0
  %333 = vmatpush.msra.mxu0 0.0
  %334 = vmatpush.msra.mxu0 %v317
  %335 = vmatmul.f32.gmra.mxu0 %v315
  %v336 = vpop.f32.mrf.mxu0
  %v337 = vadd.f32 0.0, %v336
  %338 = vdwg.mxu0
  %339 = vrot.lane.b32.xlu0 %v103, 116
  %v340 = vpop.permute.xlu0 %339
  %341 = vrot.lane.b32.xlu0 %v103, 100
  %v342 = vpop.permute.xlu0 %341
  %v343 = vsel %vm128, %v340, 0
  %v345 = vsel %vm128, %v342, 0
  %347 = vmatpush.xpose.msra.mxu0 0.0
  %348 = vmatpush.xpose.msra.mxu0 0.0
  %349 = vmatpush.xpose.msra.mxu0 0.0
  %350 = vmatpush.xpose.msra.mxu0 0.0
  %351 = vmatpush.xpose.msra.mxu0 0.0
  %352 = vmatpush.xpose.msra.mxu0 0.0
  %353 = vmatpush.xpose.msra.mxu0 0.0
  %354 = vmatpush.xpose.msra.mxu0 0.0
  %355 = vmatpush.xpose.msra.mxu0 0.0
  %356 = vmatpush.xpose.msra.mxu0 0.0
  %357 = vmatpush.xpose.msra.mxu0 0.0
  %358 = vmatpush.xpose.msra.mxu0 0.0
  %359 = vmatpush.xpose.msra.mxu0 0.0
  %360 = vmatpush.xpose.msra.mxu0 0.0
  %361 = vmatpush.xpose.msra.mxu0 0.0
  %362 = vmatpush.xpose.msra.mxu0 %v345
  %363 = vmatmul.f32.gmra.mxu0 %v343
  %v364 = vpop.f32.mrf.mxu0
  %v365 = vadd.f32 0.0, %v364
  %366 = vdwg.mxu0
  %v367 = vmul.f32 %v365, 0.5
  %v368 = vadd.f32 %v367, %v159
  %v369 = vsel %vm162, %v368, -inf
  %370 = vmax.xlane.f32.xlu0 %v369
  %v371 = vpop.xlane.xlu0 %370
  %v372 = vsub.f32 %v368, %v371
  %v373 = vmul.f32 %v372, 1.442695
  %v374 = vpow.pop %v373
  %v375 = vsel %vm162, %v374, 0.0
  %376 = vadd.xlane.f32.xlu0 %v375
  %v377 = vpop.xlane.xlu0 %376
  %v378 = vrcp.pop %v377
  %v379 = vmul.f32 %v374, %v378
  %380 = vrot.lane.b32.xlu0 %v103, 84
  %v381 = vpop.permute.xlu0 %380
  %v383 = vsel %vm176, %v379, 0
  %v385 = vsel %vm180, %v381, 0
  %387 = vmatpush.msra.mxu0 0.0
  %388 = vmatpush.msra.mxu0 0.0
  %389 = vmatpush.msra.mxu0 0.0
  %390 = vmatpush.msra.mxu0 0.0
  %391 = vmatpush.msra.mxu0 0.0
  %392 = vmatpush.msra.mxu0 0.0
  %393 = vmatpush.msra.mxu0 0.0
  %394 = vmatpush.msra.mxu0 0.0
  %395 = vmatpush.msra.mxu0 0.0
  %396 = vmatpush.msra.mxu0 0.0
  %397 = vmatpush.msra.mxu0 0.0
  %398 = vmatpush.msra.mxu0 0.0
  %399 = vmatpush.msra.mxu0 0.0
  %400 = vmatpush.msra.mxu0 0.0
  %401 = vmatpush.msra.mxu0 0.0
  %402 = vmatpush.msra.mxu0 %v385
  %403 = vmatmul.f32.gmra.mxu0 %v383
  %v404 = vpop.f32.mrf.mxu0
  %v405 = vadd.f32 0.0, %v404
  %406 = vdwg.mxu0
  %407 = vrot.lane.b32.xlu0 %v103, 80
  %v408 = vpop.permute.xlu0 %407
  %409 = vrot.lane.b32.xlu0 %v103, 64
  %v410 = vpop.permute.xlu0 %409
  %v411 = vsel %vm128, %v408, 0
  %v413 = vsel %vm128, %v410, 0
  %415 = vmatpush.xpose.msra.mxu0 0.0
  %416 = vmatpush.xpose.msra.mxu0 0.0
  %417 = vmatpush.xpose.msra.mxu0 0.0
  %418 = vmatpush.xpose.msra.mxu0 0.0
  %419 = vmatpush.xpose.msra.mxu0 0.0
  %420 = vmatpush.xpose.msra.mxu0 0.0
  %421 = vmatpush.xpose.msra.mxu0 0.0
  %422 = vmatpush.xpose.msra.mxu0 0.0
  %423 = vmatpush.xpose.msra.mxu0 0.0
  %424 = vmatpush.xpose.msra.mxu0 0.0
  %425 = vmatpush.xpose.msra.mxu0 0.0
  %426 = vmatpush.xpose.msra.mxu0 0.0
  %427 = vmatpush.xpose.msra.mxu0 0.0
  %428 = vmatpush.xpose.msra.mxu0 0.0
  %429 = vmatpush.xpose.msra.mxu0 0.0
  %430 = vmatpush.xpose.msra.mxu0 %v413
  %431 = vmatmul.f32.gmra.mxu0 %v411
  %v432 = vpop.f32.mrf.mxu0
  %v433 = vadd.f32 0.0, %v432
  %434 = vdwg.mxu0
  %v435 = vmul.f32 %v433, 0.5
  %v436 = vadd.f32 %v435, %v159
  %v437 = vsel %vm162, %v436, -inf
  %438 = vmax.xlane.f32.xlu0 %v437
  %v439 = vpop.xlane.xlu0 %438
  %v440 = vsub.f32 %v436, %v439
  %v441 = vmul.f32 %v440, 1.442695
  %v442 = vpow.pop %v441
  %v443 = vsel %vm162, %v442, 0.0
  %444 = vadd.xlane.f32.xlu0 %v443
  %v445 = vpop.xlane.xlu0 %444
  %v446 = vrcp.pop %v445
  %v447 = vmul.f32 %v442, %v446
  %448 = vrot.lane.b32.xlu0 %v103, 48
  %v449 = vpop.permute.xlu0 %448
  %v451 = vsel %vm176, %v447, 0
  %v453 = vsel %vm180, %v449, 0
  %455 = vmatpush.msra.mxu0 0.0
  %456 = vmatpush.msra.mxu0 0.0
  %457 = vmatpush.msra.mxu0 0.0
  %458 = vmatpush.msra.mxu0 0.0
  %459 = vmatpush.msra.mxu0 0.0
  %460 = vmatpush.msra.mxu0 0.0
  %461 = vmatpush.msra.mxu0 0.0
  %462 = vmatpush.msra.mxu0 0.0
  %463 = vmatpush.msra.mxu0 0.0
  %464 = vmatpush.msra.mxu0 0.0
  %465 = vmatpush.msra.mxu0 0.0
  %466 = vmatpush.msra.mxu0 0.0
  %467 = vmatpush.msra.mxu0 0.0
  %468 = vmatpush.msra.mxu0 0.0
  %469 = vmatpush.msra.mxu0 0.0
  %470 = vmatpush.msra.mxu0 %v453
  %471 = vmatmul.f32.gmra.mxu0 %v451
  %v472 = vpop.f32.mrf.mxu0
  %v473 = vadd.f32 0.0, %v472
  %474 = vdwg.mxu0
  %475 = vrot.lane.b32.xlu0 %v103, 76
  %v476 = vpop.permute.xlu0 %475
  %477 = vrot.lane.b32.xlu0 %v103, 60
  %v478 = vpop.permute.xlu0 %477
  %v479 = vsel %vm128, %v476, 0
  %v481 = vsel %vm128, %v478, 0
  %483 = vmatpush.xpose.msra.mxu0 0.0
  %484 = vmatpush.xpose.msra.mxu0 0.0
  %485 = vmatpush.xpose.msra.mxu0 0.0
  %486 = vmatpush.xpose.msra.mxu0 0.0
  %487 = vmatpush.xpose.msra.mxu0 0.0
  %488 = vmatpush.xpose.msra.mxu0 0.0
  %489 = vmatpush.xpose.msra.mxu0 0.0
  %490 = vmatpush.xpose.msra.mxu0 0.0
  %491 = vmatpush.xpose.msra.mxu0 0.0
  %492 = vmatpush.xpose.msra.mxu0 0.0
  %493 = vmatpush.xpose.msra.mxu0 0.0
  %494 = vmatpush.xpose.msra.mxu0 0.0
  %495 = vmatpush.xpose.msra.mxu0 0.0
  %496 = vmatpush.xpose.msra.mxu0 0.0
  %497 = vmatpush.xpose.msra.mxu0 0.0
  %498 = vmatpush.xpose.msra.mxu0 %v481
  %499 = vmatmul.f32.gmra.mxu0 %v479
  %v500 = vpop.f32.mrf.mxu0
  %v501 = vadd.f32 0.0, %v500
  %502 = vdwg.mxu0
  %v503 = vmul.f32 %v501, 0.5
  %v504 = vadd.f32 %v503, %v159
  %v505 = vsel %vm162, %v504, -inf
  %506 = vmax.xlane.f32.xlu0 %v505
  %v507 = vpop.xlane.xlu0 %506
  %v508 = vsub.f32 %v504, %v507
  %v509 = vmul.f32 %v508, 1.442695
  %v510 = vpow.pop %v509
  %v511 = vsel %vm162, %v510, 0.0
  %512 = vadd.xlane.f32.xlu0 %v511
  %v513 = vpop.xlane.xlu0 %512
  %v514 = vrcp.pop %v513
  %v515 = vmul.f32 %v510, %v514
  %516 = vrot.lane.b32.xlu0 %v103, 44
  %v517 = vpop.permute.xlu0 %516
  %v519 = vsel %vm176, %v515, 0
  %v521 = vsel %vm180, %v517, 0
  %523 = vmatpush.msra.mxu0 0.0
  %524 = vmatpush.msra.mxu0 0.0
  %525 = vmatpush.msra.mxu0 0.0
  %526 = vmatpush.msra.mxu0 0.0
  %527 = vmatpush.msra.mxu0 0.0
  %528 = vmatpush.msra.mxu0 0.0
  %529 = vmatpush.msra.mxu0 0.0
  %530 = vmatpush.msra.mxu0 0.0
  %531 = vmatpush.msra.mxu0 0.0
  %532 = vmatpush.msra.mxu0 0.0
  %533 = vmatpush.msra.mxu0 0.0
  %534 = vmatpush.msra.mxu0 0.0
  %535 = vmatpush.msra.mxu0 0.0
  %536 = vmatpush.msra.mxu0 0.0
  %537 = vmatpush.msra.mxu0 0.0
  %538 = vmatpush.msra.mxu0 %v521
  %539 = vmatmul.f32.gmra.mxu0 %v519
  %v540 = vpop.f32.mrf.mxu0
  %v541 = vadd.f32 0.0, %v540
  %542 = vdwg.mxu0
  %543 = vrot.lane.b32.xlu0 %v103, 72
  %v544 = vpop.permute.xlu0 %543
  %545 = vrot.lane.b32.xlu0 %v103, 56
  %v546 = vpop.permute.xlu0 %545
  %v547 = vsel %vm128, %v544, 0
  %v549 = vsel %vm128, %v546, 0
  %551 = vmatpush.xpose.msra.mxu0 0.0
  %552 = vmatpush.xpose.msra.mxu0 0.0
  %553 = vmatpush.xpose.msra.mxu0 0.0
  %554 = vmatpush.xpose.msra.mxu0 0.0
  %555 = vmatpush.xpose.msra.mxu0 0.0
  %556 = vmatpush.xpose.msra.mxu0 0.0
  %557 = vmatpush.xpose.msra.mxu0 0.0
  %558 = vmatpush.xpose.msra.mxu0 0.0
  %559 = vmatpush.xpose.msra.mxu0 0.0
  %560 = vmatpush.xpose.msra.mxu0 0.0
  %561 = vmatpush.xpose.msra.mxu0 0.0
  %562 = vmatpush.xpose.msra.mxu0 0.0
  %563 = vmatpush.xpose.msra.mxu0 0.0
  %564 = vmatpush.xpose.msra.mxu0 0.0
  %565 = vmatpush.xpose.msra.mxu0 0.0
  %566 = vmatpush.xpose.msra.mxu0 %v549
  %567 = vmatmul.f32.gmra.mxu0 %v547
  %v568 = vpop.f32.mrf.mxu0
  %v569 = vadd.f32 0.0, %v568
  %570 = vdwg.mxu0
  %v571 = vmul.f32 %v569, 0.5
  %v572 = vadd.f32 %v571, %v159
  %v573 = vsel %vm162, %v572, -inf
  %574 = vmax.xlane.f32.xlu0 %v573
  %v575 = vpop.xlane.xlu0 %574
  %v576 = vsub.f32 %v572, %v575
  %v577 = vmul.f32 %v576, 1.442695
  %v578 = vpow.pop %v577
  %v579 = vsel %vm162, %v578, 0.0
  %580 = vadd.xlane.f32.xlu0 %v579
  %v581 = vpop.xlane.xlu0 %580
  %v582 = vrcp.pop %v581
  %v583 = vmul.f32 %v578, %v582
  %584 = vrot.lane.b32.xlu0 %v103, 40
  %v585 = vpop.permute.xlu0 %584
  %v587 = vsel %vm176, %v583, 0
  %v589 = vsel %vm180, %v585, 0
  %591 = vmatpush.msra.mxu0 0.0
  %592 = vmatpush.msra.mxu0 0.0
  %593 = vmatpush.msra.mxu0 0.0
  %594 = vmatpush.msra.mxu0 0.0
  %595 = vmatpush.msra.mxu0 0.0
  %596 = vmatpush.msra.mxu0 0.0
  %597 = vmatpush.msra.mxu0 0.0
  %598 = vmatpush.msra.mxu0 0.0
  %599 = vmatpush.msra.mxu0 0.0
  %600 = vmatpush.msra.mxu0 0.0
  %601 = vmatpush.msra.mxu0 0.0
  %602 = vmatpush.msra.mxu0 0.0
  %603 = vmatpush.msra.mxu0 0.0
  %604 = vmatpush.msra.mxu0 0.0
  %605 = vmatpush.msra.mxu0 0.0
  %606 = vmatpush.msra.mxu0 %v589
  %607 = vmatmul.f32.gmra.mxu0 %v587
  %v608 = vpop.f32.mrf.mxu0
  %v609 = vadd.f32 0.0, %v608
  %610 = vdwg.mxu0
  %611 = vrot.lane.b32.xlu0 %v103, 68
  %v612 = vpop.permute.xlu0 %611
  %613 = vrot.lane.b32.xlu0 %v103, 52
  %v614 = vpop.permute.xlu0 %613
  %v615 = vsel %vm128, %v612, 0
  %v617 = vsel %vm128, %v614, 0
  %619 = vmatpush.xpose.msra.mxu0 0.0
  %620 = vmatpush.xpose.msra.mxu0 0.0
  %621 = vmatpush.xpose.msra.mxu0 0.0
  %622 = vmatpush.xpose.msra.mxu0 0.0
  %623 = vmatpush.xpose.msra.mxu0 0.0
  %624 = vmatpush.xpose.msra.mxu0 0.0
  %625 = vmatpush.xpose.msra.mxu0 0.0
  %626 = vmatpush.xpose.msra.mxu0 0.0
  %627 = vmatpush.xpose.msra.mxu0 0.0
  %628 = vmatpush.xpose.msra.mxu0 0.0
  %629 = vmatpush.xpose.msra.mxu0 0.0
  %630 = vmatpush.xpose.msra.mxu0 0.0
  %631 = vmatpush.xpose.msra.mxu0 0.0
  %632 = vmatpush.xpose.msra.mxu0 0.0
  %633 = vmatpush.xpose.msra.mxu0 0.0
  %634 = vmatpush.xpose.msra.mxu0 %v617
  %635 = vmatmul.f32.gmra.mxu0 %v615
  %v636 = vpop.f32.mrf.mxu0
  %v637 = vadd.f32 0.0, %v636
  %638 = vdwg.mxu0
  %v639 = vmul.f32 %v637, 0.5
  %v640 = vadd.f32 %v639, %v159
  %v641 = vsel %vm162, %v640, -inf
  %642 = vmax.xlane.f32.xlu0 %v641
  %v643 = vpop.xlane.xlu0 %642
  %v644 = vsub.f32 %v640, %v643
  %v645 = vmul.f32 %v644, 1.442695
  %v646 = vpow.pop %v645
  %v647 = vsel %vm162, %v646, 0.0
  %648 = vadd.xlane.f32.xlu0 %v647
  %v649 = vpop.xlane.xlu0 %648
  %v650 = vrcp.pop %v649
  %v651 = vmul.f32 %v646, %v650
  %652 = vrot.lane.b32.xlu0 %v103, 36
  %v653 = vpop.permute.xlu0 %652
  %v655 = vsel %vm176, %v651, 0
  %v657 = vsel %vm180, %v653, 0
  %659 = vmatpush.msra.mxu0 0.0
  %660 = vmatpush.msra.mxu0 0.0
  %661 = vmatpush.msra.mxu0 0.0
  %662 = vmatpush.msra.mxu0 0.0
  %663 = vmatpush.msra.mxu0 0.0
  %664 = vmatpush.msra.mxu0 0.0
  %665 = vmatpush.msra.mxu0 0.0
  %666 = vmatpush.msra.mxu0 0.0
  %667 = vmatpush.msra.mxu0 0.0
  %668 = vmatpush.msra.mxu0 0.0
  %669 = vmatpush.msra.mxu0 0.0
  %670 = vmatpush.msra.mxu0 0.0
  %671 = vmatpush.msra.mxu0 0.0
  %672 = vmatpush.msra.mxu0 0.0
  %673 = vmatpush.msra.mxu0 0.0
  %674 = vmatpush.msra.mxu0 %v657
  %675 = vmatmul.f32.gmra.mxu0 %v655
  %v676 = vpop.f32.mrf.mxu0
  %v677 = vadd.f32 0.0, %v676
  %678 = vdwg.mxu0
  %679 = vrot.lane.b32.xlu0 %v103, 32
  %v680 = vpop.permute.xlu0 %679
  %681 = vrot.lane.b32.xlu0 %v103, 16
  %v682 = vpop.permute.xlu0 %681
  %v683 = vsel %vm128, %v680, 0
  %v685 = vsel %vm128, %v682, 0
  %687 = vmatpush.xpose.msra.mxu0 0.0
  %688 = vmatpush.xpose.msra.mxu0 0.0
  %689 = vmatpush.xpose.msra.mxu0 0.0
  %690 = vmatpush.xpose.msra.mxu0 0.0
  %691 = vmatpush.xpose.msra.mxu0 0.0
  %692 = vmatpush.xpose.msra.mxu0 0.0
  %693 = vmatpush.xpose.msra.mxu0 0.0
  %694 = vmatpush.xpose.msra.mxu0 0.0
  %695 = vmatpush.xpose.msra.mxu0 0.0
  %696 = vmatpush.xpose.msra.mxu0 0.0
  %697 = vmatpush.xpose.msra.mxu0 0.0
  %698 = vmatpush.xpose.msra.mxu0 0.0
  %699 = vmatpush.xpose.msra.mxu0 0.0
  %700 = vmatpush.xpose.msra.mxu0 0.0
  %701 = vmatpush.xpose.msra.mxu0 0.0
  %702 = vmatpush.xpose.msra.mxu0 %v685
  %703 = vmatmul.f32.gmra.mxu0 %v683
  %v704 = vpop.f32.mrf.mxu0
  %v705 = vadd.f32 0.0, %v704
  %706 = vdwg.mxu0
  %v707 = vmul.f32 %v705, 0.5
  %v708 = vadd.f32 %v707, %v159
  %v709 = vsel %vm162, %v708, -inf
  %710 = vmax.xlane.f32.xlu0 %v709
  %v711 = vpop.xlane.xlu0 %710
  %v712 = vsub.f32 %v708, %v711
  %v713 = vmul.f32 %v712, 1.442695
  %v714 = vpow.pop %v713
  %v715 = vsel %vm162, %v714, 0.0
  %716 = vadd.xlane.f32.xlu0 %v715
  %v717 = vpop.xlane.xlu0 %716
  %v718 = vrcp.pop %v717
  %v719 = vmul.f32 %v714, %v718
  %v721 = vsel %vm176, %v719, 0
  %v724 = vsel %vm180, %v123, 0
  %726 = vmatpush.msra.mxu0 0.0
  %727 = vmatpush.msra.mxu0 0.0
  %728 = vmatpush.msra.mxu0 0.0
  %729 = vmatpush.msra.mxu0 0.0
  %730 = vmatpush.msra.mxu0 0.0
  %731 = vmatpush.msra.mxu0 0.0
  %732 = vmatpush.msra.mxu0 0.0
  %733 = vmatpush.msra.mxu0 0.0
  %734 = vmatpush.msra.mxu0 0.0
  %735 = vmatpush.msra.mxu0 0.0
  %736 = vmatpush.msra.mxu0 0.0
  %737 = vmatpush.msra.mxu0 0.0
  %738 = vmatpush.msra.mxu0 0.0
  %739 = vmatpush.msra.mxu0 0.0
  %740 = vmatpush.msra.mxu0 0.0
  %741 = vmatpush.msra.mxu0 %v724
  %742 = vmatmul.f32.gmra.mxu0 %v721
  %v743 = vpop.f32.mrf.mxu0
  %v744 = vadd.f32 0.0, %v743
  %745 = vdwg.mxu0
  %746 = vrot.lane.b32.xlu0 %v103, 28
  %v747 = vpop.permute.xlu0 %746
  %748 = vrot.lane.b32.xlu0 %v103, 12
  %v749 = vpop.permute.xlu0 %748
  %v750 = vsel %vm128, %v747, 0
  %v752 = vsel %vm128, %v749, 0
  %754 = vmatpush.xpose.msra.mxu0 0.0
  %755 = vmatpush.xpose.msra.mxu0 0.0
  %756 = vmatpush.xpose.msra.mxu0 0.0
  %757 = vmatpush.xpose.msra.mxu0 0.0
  %758 = vmatpush.xpose.msra.mxu0 0.0
  %759 = vmatpush.xpose.msra.mxu0 0.0
  %760 = vmatpush.xpose.msra.mxu0 0.0
  %761 = vmatpush.xpose.msra.mxu0 0.0
  %762 = vmatpush.xpose.msra.mxu0 0.0
  %763 = vmatpush.xpose.msra.mxu0 0.0
  %764 = vmatpush.xpose.msra.mxu0 0.0
  %765 = vmatpush.xpose.msra.mxu0 0.0
  %766 = vmatpush.xpose.msra.mxu0 0.0
  %767 = vmatpush.xpose.msra.mxu0 0.0
  %768 = vmatpush.xpose.msra.mxu0 0.0
  %769 = vmatpush.xpose.msra.mxu0 %v752
  %770 = vmatmul.f32.gmra.mxu0 %v750
  %v771 = vpop.f32.mrf.mxu0
  %v772 = vadd.f32 0.0, %v771
  %773 = vdwg.mxu0
  %v774 = vmul.f32 %v772, 0.5
  %v775 = vadd.f32 %v774, %v159
  %v776 = vsel %vm162, %v775, -inf
  %777 = vmax.xlane.f32.xlu0 %v776
  %v778 = vpop.xlane.xlu0 %777
  %v779 = vsub.f32 %v775, %v778
  %v780 = vmul.f32 %v779, 1.442695
  %v781 = vpow.pop %v780
  %v782 = vsel %vm162, %v781, 0.0
  %783 = vadd.xlane.f32.xlu0 %v782
  %v784 = vpop.xlane.xlu0 %783
  %v785 = vrcp.pop %v784
  %v786 = vmul.f32 %v781, %v785
  %787 = vrot.lane.b32.xlu0 %v123, 124
  %v788 = vpop.permute.xlu0 %787
  %v790 = vsel %vm176, %v786, 0
  %v792 = vsel %vm180, %v788, 0
  %794 = vmatpush.msra.mxu0 0.0
  %795 = vmatpush.msra.mxu0 0.0
  %796 = vmatpush.msra.mxu0 0.0
  %797 = vmatpush.msra.mxu0 0.0
  %798 = vmatpush.msra.mxu0 0.0
  %799 = vmatpush.msra.mxu0 0.0
  %800 = vmatpush.msra.mxu0 0.0
  %801 = vmatpush.msra.mxu0 0.0
  %802 = vmatpush.msra.mxu0 0.0
  %803 = vmatpush.msra.mxu0 0.0
  %804 = vmatpush.msra.mxu0 0.0
  %805 = vmatpush.msra.mxu0 0.0
  %806 = vmatpush.msra.mxu0 0.0
  %807 = vmatpush.msra.mxu0 0.0
  %808 = vmatpush.msra.mxu0 0.0
  %809 = vmatpush.msra.mxu0 %v792
  %810 = vmatmul.f32.gmra.mxu0 %v790
  %v811 = vpop.f32.mrf.mxu0
  %v812 = vadd.f32 0.0, %v811
  %813 = vdwg.mxu0
  %814 = vrot.lane.b32.xlu0 %v103, 24
  %v815 = vpop.permute.xlu0 %814
  %816 = vrot.lane.b32.xlu0 %v103, 8
  %v817 = vpop.permute.xlu0 %816
  %v818 = vsel %vm128, %v815, 0
  %v820 = vsel %vm128, %v817, 0
  %822 = vmatpush.xpose.msra.mxu0 0.0
  %823 = vmatpush.xpose.msra.mxu0 0.0
  %824 = vmatpush.xpose.msra.mxu0 0.0
  %825 = vmatpush.xpose.msra.mxu0 0.0
  %826 = vmatpush.xpose.msra.mxu0 0.0
  %827 = vmatpush.xpose.msra.mxu0 0.0
  %828 = vmatpush.xpose.msra.mxu0 0.0
  %829 = vmatpush.xpose.msra.mxu0 0.0
  %830 = vmatpush.xpose.msra.mxu0 0.0
  %831 = vmatpush.xpose.msra.mxu0 0.0
  %832 = vmatpush.xpose.msra.mxu0 0.0
  %833 = vmatpush.xpose.msra.mxu0 0.0
  %834 = vmatpush.xpose.msra.mxu0 0.0
  %835 = vmatpush.xpose.msra.mxu0 0.0
  %836 = vmatpush.xpose.msra.mxu0 0.0
  %837 = vmatpush.xpose.msra.mxu0 %v820
  %838 = vmatmul.f32.gmra.mxu0 %v818
  %v839 = vpop.f32.mrf.mxu0
  %v840 = vadd.f32 0.0, %v839
  %841 = vdwg.mxu0
  %v842 = vmul.f32 %v840, 0.5
  %v843 = vadd.f32 %v842, %v159
  %v844 = vsel %vm162, %v843, -inf
  %845 = vmax.xlane.f32.xlu0 %v844
  %v846 = vpop.xlane.xlu0 %845
  %v847 = vsub.f32 %v843, %v846
  %v848 = vmul.f32 %v847, 1.442695
  %v849 = vpow.pop %v848
  %v850 = vsel %vm162, %v849, 0.0
  %851 = vadd.xlane.f32.xlu0 %v850
  %v852 = vpop.xlane.xlu0 %851
  %v853 = vrcp.pop %v852
  %v854 = vmul.f32 %v849, %v853
  %855 = vrot.lane.b32.xlu0 %v123, 120
  %v856 = vpop.permute.xlu0 %855
  %v858 = vsel %vm176, %v854, 0
  %v860 = vsel %vm180, %v856, 0
  %862 = vmatpush.msra.mxu0 0.0
  %863 = vmatpush.msra.mxu0 0.0
  %864 = vmatpush.msra.mxu0 0.0
  %865 = vmatpush.msra.mxu0 0.0
  %866 = vmatpush.msra.mxu0 0.0
  %867 = vmatpush.msra.mxu0 0.0
  %868 = vmatpush.msra.mxu0 0.0
  %869 = vmatpush.msra.mxu0 0.0
  %870 = vmatpush.msra.mxu0 0.0
  %871 = vmatpush.msra.mxu0 0.0
  %872 = vmatpush.msra.mxu0 0.0
  %873 = vmatpush.msra.mxu0 0.0
  %874 = vmatpush.msra.mxu0 0.0
  %875 = vmatpush.msra.mxu0 0.0
  %876 = vmatpush.msra.mxu0 0.0
  %877 = vmatpush.msra.mxu0 %v860
  %878 = vmatmul.f32.gmra.mxu0 %v858
  %v879 = vpop.f32.mrf.mxu0
  %v880 = vadd.f32 0.0, %v879
  %881 = vdwg.mxu0
  %882 = vrot.lane.b32.xlu0 %v103, 20
  %v883 = vpop.permute.xlu0 %882
  %884 = vrot.lane.b32.xlu0 %v103, 4
  %v885 = vpop.permute.xlu0 %884
  %v886 = vsel %vm128, %v883, 0
  %v888 = vsel %vm128, %v885, 0
  %890 = vmatpush.xpose.msra.mxu0 0.0
  %891 = vmatpush.xpose.msra.mxu0 0.0
  %892 = vmatpush.xpose.msra.mxu0 0.0
  %893 = vmatpush.xpose.msra.mxu0 0.0
  %894 = vmatpush.xpose.msra.mxu0 0.0
  %895 = vmatpush.xpose.msra.mxu0 0.0
  %896 = vmatpush.xpose.msra.mxu0 0.0
  %897 = vmatpush.xpose.msra.mxu0 0.0
  %898 = vmatpush.xpose.msra.mxu0 0.0
  %899 = vmatpush.xpose.msra.mxu0 0.0
  %900 = vmatpush.xpose.msra.mxu0 0.0
  %901 = vmatpush.xpose.msra.mxu0 0.0
  %902 = vmatpush.xpose.msra.mxu0 0.0
  %903 = vmatpush.xpose.msra.mxu0 0.0
  %904 = vmatpush.xpose.msra.mxu0 0.0
  %905 = vmatpush.xpose.msra.mxu0 %v888
  %906 = vmatmul.f32.gmra.mxu0 %v886
  %v907 = vpop.f32.mrf.mxu0
  %v908 = vadd.f32 0.0, %v907
  %909 = vdwg.mxu0
  %v910 = vmul.f32 %v908, 0.5
  %v911 = vadd.f32 %v910, %v159
  %v912 = vsel %vm162, %v911, -inf
  %913 = vmax.xlane.f32.xlu0 %v912
  %v914 = vpop.xlane.xlu0 %913
  %v915 = vsub.f32 %v911, %v914
  %v916 = vmul.f32 %v915, 1.442695
  %v917 = vpow.pop %v916
  %v918 = vsel %vm162, %v917, 0.0
  %919 = vadd.xlane.f32.xlu0 %v918
  %v920 = vpop.xlane.xlu0 %919
  %v921 = vrcp.pop %v920
  %v922 = vmul.f32 %v917, %v921
  %923 = vrot.lane.b32.xlu0 %v123, 116
  %v924 = vpop.permute.xlu0 %923
  %v926 = vsel %vm176, %v922, 0
  %v928 = vsel %vm180, %v924, 0
  %930 = vmatpush.msra.mxu0 0.0
  %931 = vmatpush.msra.mxu0 0.0
  %932 = vmatpush.msra.mxu0 0.0
  %933 = vmatpush.msra.mxu0 0.0
  %934 = vmatpush.msra.mxu0 0.0
  %935 = vmatpush.msra.mxu0 0.0
  %936 = vmatpush.msra.mxu0 0.0
  %937 = vmatpush.msra.mxu0 0.0
  %938 = vmatpush.msra.mxu0 0.0
  %939 = vmatpush.msra.mxu0 0.0
  %940 = vmatpush.msra.mxu0 0.0
  %941 = vmatpush.msra.mxu0 0.0
  %942 = vmatpush.msra.mxu0 0.0
  %943 = vmatpush.msra.mxu0 0.0
  %944 = vmatpush.msra.mxu0 0.0
  %945 = vmatpush.msra.mxu0 %v928
  %946 = vmatmul.f32.gmra.mxu0 %v926
  %v947 = vpop.f32.mrf.mxu0
  %v948 = vadd.f32 0.0, %v947
  %949 = vdwg.mxu0
  %951 = vrot.lane.b32.xlu0 %v269, 4
  %v952 = vpop.permute.xlu0 %951
  %955 = vrot.lane.b32.xlu0 %v337, 8
  %v956 = vpop.permute.xlu0 %955
  %959 = vrot.lane.b32.xlu0 %v405, 12
  %v960 = vpop.permute.xlu0 %959
  %963 = vrot.lane.b32.xlu0 %v473, 16
  %v964 = vpop.permute.xlu0 %963
  %967 = vrot.lane.b32.xlu0 %v541, 20
  %v968 = vpop.permute.xlu0 %967
  %971 = vrot.lane.b32.xlu0 %v609, 24
  %v972 = vpop.permute.xlu0 %971
  %975 = vrot.lane.b32.xlu0 %v677, 28
  %v976 = vpop.permute.xlu0 %975
  %979 = vrot.lane.b32.xlu0 %v744, 32
  %v980 = vpop.permute.xlu0 %979
  %983 = vrot.lane.b32.xlu0 %v812, 36
  %v984 = vpop.permute.xlu0 %983
  %987 = vrot.lane.b32.xlu0 %v880, 40
  %v988 = vpop.permute.xlu0 %987
  %991 = vrot.lane.b32.xlu0 %v948, 44
  %v992 = vpop.permute.xlu0 %991
  %v994 = vsel %vm128, %v201, %v952
  %vm995 = vcmask 64512
  %v996 = vsel %vm995, %v994, %v956
  %vm997 = vcmask 97280
  %v998 = vsel %vm997, %v996, %v960
  %vm999 = vcmask 130048
  %v1000 = vsel %vm999, %v998, %v964
  %vm1001 = vcmask 162816
  %v1002 = vsel %vm1001, %v1000, %v968
  %vm1003 = vcmask 195584
  %v1004 = vsel %vm1003, %v1002, %v972
  %vm1005 = vcmask 228352
  %v1006 = vsel %vm1005, %v1004, %v976
  %vm1007 = vcmask 261120
  %v1008 = vsel %vm1007, %v1006, %v980
  %vm1009 = vcmask 293888
  %v1010 = vsel %vm1009, %v1008, %v984
  %vm1011 = vcmask 326656
  %v1012 = vsel %vm1011, %v1010, %v988
  %vm1013 = vcmask 359424
  %v1014 = vsel %vm1013, %v1012, %v992
  %s1015 = scalar_lea.vmem %s1, 96
  %v1016 = vld [vmem:[%s1015] sm:$0xff]
  %v1017 = vld [vmem:[%s1015 + $0x8] sm:$0xff]
  %v1018 = vld [vmem:[%s1015 + $0x10] sm:$0xff]
  %v1019 = vld [vmem:[%s1015 + $0x18] sm:$0xff]
  %v1020 = vld [vmem:[%s1015 + $0x20] sm:$0xff]
  %v1021 = vld [vmem:[%s1015 + $0x28] sm:$0xff]
  %v1022 = vld [vmem:[%s4 + $0x6] sm:$0x1]
  %v1023 = vperm.slane %v1022, 0
  %v1025 = vsel %vm38, %v1014, 0
  %1027 = vmatpush.msra.mxu0 0.0
  %1028 = vmatpush.msra.mxu0 0.0
  %1029 = vmatpush.msra.mxu0 0.0
  %1030 = vmatpush.msra.mxu0 0.0
  %1031 = vmatpush.msra.mxu0 0.0
  %1032 = vmatpush.msra.mxu0 0.0
  %1033 = vmatpush.msra.mxu0 0.0
  %1034 = vmatpush.msra.mxu0 0.0
  %1035 = vmatpush.msra.mxu0 0.0
  %1036 = vmatpush.msra.mxu0 0.0
  %1037 = vmatpush.msra.mxu0 %v1021
  %1038 = vmatpush.msra.mxu0 %v1020
  %1039 = vmatpush.msra.mxu0 %v1019
  %1040 = vmatpush.msra.mxu0 %v1018
  %1041 = vmatpush.msra.mxu0 %v1017
  %1042 = vmatpush.msra.mxu0 %v1016
  %1043 = vmatmul.f32.gmra.mxu0 %v1025
  %v1044 = vpop.f32.mrf.mxu0
  %v1045 = vadd.f32 %v1023, %v1044
  %1046 = vdwg.mxu0
  %v1047 = vadd.f32 %v60, %v1045
  %v1048 = vld [vmem:[%s4 + $0x9] sm:$0x1]
  %v1049 = vld [vmem:[%s4 + $0xa] sm:$0x1]
  %v1051 = vsel %vm38, %v1047, 0
  %1053 = vmatpush.msra.mxu0 0.0
  %1054 = vmatpush.msra.mxu0 0.0
  %1055 = vmatpush.msra.mxu0 0.0
  %1056 = vmatpush.msra.mxu0 0.0
  %1057 = vmatpush.msra.mxu0 0.0
  %1058 = vmatpush.msra.mxu0 0.0
  %1059 = vmatpush.msra.mxu0 0.0
  %1060 = vmatpush.msra.mxu0 0.0
  %1061 = vmatpush.msra.mxu0 0.0
  %1062 = vmatpush.msra.mxu0 0.0
  %1063 = vmatpush.msra.mxu0 %v29
  %1064 = vmatpush.msra.mxu0 %v28
  %1065 = vmatpush.msra.mxu0 %v27
  %1066 = vmatpush.msra.mxu0 %v26
  %1067 = vmatpush.msra.mxu0 %v25
  %1068 = vmatpush.msra.mxu0 %v24
  %1069 = vmatmul.f32.gmra.mxu0 %v1051
  %v1070 = vpop.f32.mrf.mxu0
  %v1071 = vadd.f32 0.0, %v1070
  %1072 = vdwg.mxu0
  %v1073 = vsub.f32 %v1047, %v1071
  %v1074 = vmul.f32 %v1073, %v1073
  %v1076 = vsel %vm38, %v1074, 0
  %1078 = vmatpush.msra.mxu0 0.0
  %1079 = vmatpush.msra.mxu0 0.0
  %1080 = vmatpush.msra.mxu0 0.0
  %1081 = vmatpush.msra.mxu0 0.0
  %1082 = vmatpush.msra.mxu0 0.0
  %1083 = vmatpush.msra.mxu0 0.0
  %1084 = vmatpush.msra.mxu0 0.0
  %1085 = vmatpush.msra.mxu0 0.0
  %1086 = vmatpush.msra.mxu0 0.0
  %1087 = vmatpush.msra.mxu0 0.0
  %1088 = vmatpush.msra.mxu0 %v29
  %1089 = vmatpush.msra.mxu0 %v28
  %1090 = vmatpush.msra.mxu0 %v27
  %1091 = vmatpush.msra.mxu0 %v26
  %1092 = vmatpush.msra.mxu0 %v25
  %1093 = vmatpush.msra.mxu0 %v24
  %1094 = vmatmul.f32.gmra.mxu0 %v1076
  %v1095 = vpop.f32.mrf.mxu0
  %v1096 = vadd.f32 1e-05, %v1095
  %1097 = vdwg.mxu0
  %v1098 = vrsqrt.pop %v1096
  %v1099 = vmul.f32 %v1098, %v1096
  %v1100 = vmul.f32 %v1099, %v1098
  %v1101 = vmul.f32 0.5, %v1100
  %v1102 = vsub.f32 1.5, %v1101
  %v1103 = vmul.f32 %v1098, %v1102
  %vm1104 = vweird.f32 %v1096
  %vm1105 = vweird.f32 %v1098
  %vm1106 = vmor %vm1104, %vm1105
  %v1107 = vsel %vm1106, %v1098, %v1103
  %v1108 = vmul.f32 %v1073, %v1107
  %v1109 = vperm.slane %v1048, 0
  %v1110 = vmul.f32 %v1108, %v1109
  %v1111 = vperm.slane %v1049, 0
  %v1112 = vadd.f32 %v1110, %v1111
  %s1113 = scalar_lea.vmem %s1, 144
  %v1114 = vld [vmem:[%s1113] sm:$0xff]
  %v1115 = vld [vmem:[%s1113 + $0x8] sm:$0xff]
  %v1116 = vld [vmem:[%s1113 + $0x10] sm:$0xff]
  %v1117 = vld [vmem:[%s1113 + $0x18] sm:$0xff]
  %v1118 = vld [vmem:[%s1113 + $0x20] sm:$0xff]
  %v1119 = vld [vmem:[%s1113 + $0x28] sm:$0xff]
  %v1120 = vld [vmem:[%s4 + $0x7] sm:$0x1]
  %v1121 = vperm.slane %v1120, 0
  %v1123 = vsel %vm38, %v1112, 0
  %1125 = vmatpush.msra.mxu0 0.0
  %1126 = vmatpush.msra.mxu0 0.0
  %1127 = vmatpush.msra.mxu0 0.0
  %1128 = vmatpush.msra.mxu0 0.0
  %1129 = vmatpush.msra.mxu0 0.0
  %1130 = vmatpush.msra.mxu0 0.0
  %1131 = vmatpush.msra.mxu0 0.0
  %1132 = vmatpush.msra.mxu0 0.0
  %1133 = vmatpush.msra.mxu0 0.0
  %1134 = vmatpush.msra.mxu0 0.0
  %1135 = vmatpush.msra.mxu0 %v1119
  %1136 = vmatpush.msra.mxu0 %v1118
  %1137 = vmatpush.msra.mxu0 %v1117
  %1138 = vmatpush.msra.mxu0 %v1116
  %1139 = vmatpush.msra.mxu0 %v1115
  %1140 = vmatpush.msra.mxu0 %v1114
  %1141 = vmatmul.f32.gmra.mxu0 %v1123
  %v1142 = vpop.f32.mrf.mxu0
  %v1143 = vadd.f32 %v1121, %v1142
  %1144 = vdwg.mxu0
  %v1145 = vmax.f32 %v1143, 0.0
  %s1146 = scalar_lea.vmem %s1, 192
  %v1147 = vld [vmem:[%s1146] sm:$0xff]
  %v1148 = vld [vmem:[%s1146 + $0x8] sm:$0xff]
  %v1149 = vld [vmem:[%s1146 + $0x10] sm:$0xff]
  %v1150 = vld [vmem:[%s1146 + $0x18] sm:$0xff]
  %v1151 = vld [vmem:[%s1146 + $0x20] sm:$0xff]
  %v1152 = vld [vmem:[%s1146 + $0x28] sm:$0xff]
  %v1153 = vld [vmem:[%s4 + $0x8] sm:$0x1]
  %v1154 = vperm.slane %v1153, 0
  %v1156 = vsel %vm38, %v1145, 0
  %1158 = vmatpush.msra.mxu0 0.0
  %1159 = vmatpush.msra.mxu0 0.0
  %1160 = vmatpush.msra.mxu0 0.0
  %1161 = vmatpush.msra.mxu0 0.0
  %1162 = vmatpush.msra.mxu0 0.0
  %1163 = vmatpush.msra.mxu0 0.0
  %1164 = vmatpush.msra.mxu0 0.0
  %1165 = vmatpush.msra.mxu0 0.0
  %1166 = vmatpush.msra.mxu0 0.0
  %1167 = vmatpush.msra.mxu0 0.0
  %1168 = vmatpush.msra.mxu0 %v1152
  %1169 = vmatpush.msra.mxu0 %v1151
  %1170 = vmatpush.msra.mxu0 %v1150
  %1171 = vmatpush.msra.mxu0 %v1149
  %1172 = vmatpush.msra.mxu0 %v1148
  %1173 = vmatpush.msra.mxu0 %v1147
  %1174 = vmatmul.f32.gmra.mxu0 %v1156
  %v1175 = vpop.f32.mrf.mxu0
  %v1176 = vadd.f32 %v1154, %v1175
  %1177 = vdwg.mxu0
  %v1178 = vadd.f32 %v1112, %v1176
  %v1179 = vld [vmem:[%s4 + $0xb] sm:$0x1]
  %v1180 = vld [vmem:[%s4 + $0xc] sm:$0x1]
  %v1182 = vsel %vm38, %v1178, 0
  %1184 = vmatpush.msra.mxu0 0.0
  %1185 = vmatpush.msra.mxu0 0.0
  %1186 = vmatpush.msra.mxu0 0.0
  %1187 = vmatpush.msra.mxu0 0.0
  %1188 = vmatpush.msra.mxu0 0.0
  %1189 = vmatpush.msra.mxu0 0.0
  %1190 = vmatpush.msra.mxu0 0.0
  %1191 = vmatpush.msra.mxu0 0.0
  %1192 = vmatpush.msra.mxu0 0.0
  %1193 = vmatpush.msra.mxu0 0.0
  %1194 = vmatpush.msra.mxu0 %v29
  %1195 = vmatpush.msra.mxu0 %v28
  %1196 = vmatpush.msra.mxu0 %v27
  %1197 = vmatpush.msra.mxu0 %v26
  %1198 = vmatpush.msra.mxu0 %v25
  %1199 = vmatpush.msra.mxu0 %v24
  %1200 = vmatmul.f32.gmra.mxu0 %v1182
  %v1201 = vpop.f32.mrf.mxu0
  %v1202 = vadd.f32 0.0, %v1201
  %1203 = vdwg.mxu0
  %v1204 = vsub.f32 %v1178, %v1202
  %v1205 = vmul.f32 %v1204, %v1204
  %v1207 = vsel %vm38, %v1205, 0
  %1209 = vmatpush.msra.mxu0 0.0
  %1210 = vmatpush.msra.mxu0 0.0
  %1211 = vmatpush.msra.mxu0 0.0
  %1212 = vmatpush.msra.mxu0 0.0
  %1213 = vmatpush.msra.mxu0 0.0
  %1214 = vmatpush.msra.mxu0 0.0
  %1215 = vmatpush.msra.mxu0 0.0
  %1216 = vmatpush.msra.mxu0 0.0
  %1217 = vmatpush.msra.mxu0 0.0
  %1218 = vmatpush.msra.mxu0 0.0
  %1219 = vmatpush.msra.mxu0 %v29
  %1220 = vmatpush.msra.mxu0 %v28
  %1221 = vmatpush.msra.mxu0 %v27
  %1222 = vmatpush.msra.mxu0 %v26
  %1223 = vmatpush.msra.mxu0 %v25
  %1224 = vmatpush.msra.mxu0 %v24
  %1225 = vmatmul.f32.gmra.mxu0 %v1207
  %v1226 = vpop.f32.mrf.mxu0
  %v1227 = vadd.f32 1e-05, %v1226
  %1228 = vdwg.mxu0
  %v1229 = vrsqrt.pop %v1227
  %v1230 = vmul.f32 %v1229, %v1227
  %v1231 = vmul.f32 %v1230, %v1229
  %v1232 = vmul.f32 0.5, %v1231
  %v1233 = vsub.f32 1.5, %v1232
  %v1234 = vmul.f32 %v1229, %v1233
  %vm1235 = vweird.f32 %v1227
  %vm1236 = vweird.f32 %v1229
  %vm1237 = vmor %vm1235, %vm1236
  %v1238 = vsel %vm1237, %v1229, %v1234
  %v1239 = vmul.f32 %v1204, %v1238
  %v1240 = vperm.slane %v1179, 0
  %v1241 = vmul.f32 %v1239, %v1240
  %v1242 = vperm.slane %v1180, 0
  %v1243 = vadd.f32 %v1241, %v1242
  %s1244 = scalar_lea.vmem %s2, 96
  %v1245 = vld [vmem:[%s1244] sm:$0xff]
  %v1246 = vld [vmem:[%s1244 + $0x8] sm:$0xff]
  %v1247 = vld [vmem:[%s1244 + $0x10] sm:$0xff]
  %v1248 = vld [vmem:[%s1244 + $0x18] sm:$0xff]
  %v1249 = vld [vmem:[%s1244 + $0x20] sm:$0xff]
  %v1250 = vld [vmem:[%s1244 + $0x28] sm:$0xff]
  %v1251 = vld [vmem:[%s1244 + $0x30] sm:$0xff]
  %v1252 = vld [vmem:[%s1244 + $0x38] sm:$0xff]
  %v1253 = vld [vmem:[%s1244 + $0x40] sm:$0xff]
  %v1254 = vld [vmem:[%s1244 + $0x48] sm:$0xff]
  %v1255 = vld [vmem:[%s1244 + $0x50] sm:$0xff]
  %v1256 = vld [vmem:[%s1244 + $0x58] sm:$0xff]
  %s1257 = scalar_lea.vmem %s5, 1
  %v1258 = vld [vmem:[%s1257] ss:$8 sm:$0x3]
  %v1260 = vperm.slane %v1258, 0
  %v1261 = vperm.slane %v1258, 1
  %v1265 = vsel %vm38, %v1243, 0
  %1267 = vmatpush.msra.mxu0 0.0
  %1268 = vmatpush.msra.mxu0 0.0
  %1269 = vmatpush.msra.mxu0 0.0
  %1270 = vmatpush.msra.mxu0 0.0
  %1271 = vmatpush.msra.mxu0 0.0
  %1272 = vmatpush.msra.mxu0 0.0
  %1273 = vmatpush.msra.mxu0 0.0
  %1274 = vmatpush.msra.mxu0 0.0
  %1275 = vmatpush.msra.mxu0 0.0
  %1276 = vmatpush.msra.mxu0 0.0
  %1277 = vmatpush.msra.mxu0 %v1255
  %1278 = vmatpush.msra.mxu0 %v1253
  %1279 = vmatpush.msra.mxu0 %v1251
  %1280 = vmatpush.msra.mxu0 %v1249
  %1281 = vmatpush.msra.mxu0 %v1247
  %1282 = vmatpush.msra.mxu0 %v1245
  %1283 = vmatmul.f32.gmra.mxu0 %v1265
  %v1284 = vpop.f32.mrf.mxu0
  %v1285 = vadd.f32 %v1260, %v1284
  %1286 = vdwg.mxu0
  %1287 = vmatpush.msra.mxu0 0.0
  %1288 = vmatpush.msra.mxu0 0.0
  %1289 = vmatpush.msra.mxu0 0.0
  %1290 = vmatpush.msra.mxu0 0.0
  %1291 = vmatpush.msra.mxu0 0.0
  %1292 = vmatpush.msra.mxu0 0.0
  %1293 = vmatpush.msra.mxu0 0.0
  %1294 = vmatpush.msra.mxu0 0.0
  %1295 = vmatpush.msra.mxu0 0.0
  %1296 = vmatpush.msra.mxu0 0.0
  %1297 = vmatpush.msra.mxu0 %v1256
  %1298 = vmatpush.msra.mxu0 %v1254
  %1299 = vmatpush.msra.mxu0 %v1252
  %1300 = vmatpush.msra.mxu0 %v1250
  %1301 = vmatpush.msra.mxu0 %v1248
  %1302 = vmatpush.msra.mxu0 %v1246
  %1303 = vmatmul.f32.gmra.mxu0 %v1265
  %v1304 = vpop.f32.mrf.mxu0
  %v1305 = vadd.f32 %v1261, %v1304
  %1306 = vdwg.mxu0
  %1308 = vrot.lane.b32.xlu0 %v1285, 112
  %v1309 = vpop.permute.xlu0 %1308
  %v1310 = vsel %vm128, %v1285, 0
  %v1312 = vsel %vm128, %v1309, 0
  %1314 = vmatpush.xpose.msra.mxu0 0.0
  %1315 = vmatpush.xpose.msra.mxu0 0.0
  %1316 = vmatpush.xpose.msra.mxu0 0.0
  %1317 = vmatpush.xpose.msra.mxu0 0.0
  %1318 = vmatpush.xpose.msra.mxu0 0.0
  %1319 = vmatpush.xpose.msra.mxu0 0.0
  %1320 = vmatpush.xpose.msra.mxu0 0.0
  %1321 = vmatpush.xpose.msra.mxu0 0.0
  %1322 = vmatpush.xpose.msra.mxu0 0.0
  %1323 = vmatpush.xpose.msra.mxu0 0.0
  %1324 = vmatpush.xpose.msra.mxu0 0.0
  %1325 = vmatpush.xpose.msra.mxu0 0.0
  %1326 = vmatpush.xpose.msra.mxu0 0.0
  %1327 = vmatpush.xpose.msra.mxu0 0.0
  %1328 = vmatpush.xpose.msra.mxu0 0.0
  %1329 = vmatpush.xpose.msra.mxu0 %v1312
  %1330 = vmatmul.f32.gmra.mxu0 %v1310
  %v1331 = vpop.f32.mrf.mxu0
  %v1332 = vadd.f32 0.0, %v1331
  %1333 = vdwg.mxu0
  %v1334 = vmul.f32 %v1332, 0.5
  %v1335 = vadd.f32 %v1334, %v159
  %v1336 = vsel %vm162, %v1335, -inf
  %1337 = vmax.xlane.f32.xlu0 %v1336
  %v1338 = vpop.xlane.xlu0 %1337
  %v1339 = vsub.f32 %v1335, %v1338
  %v1340 = vmul.f32 %v1339, 1.442695
  %v1341 = vpow.pop %v1340
  %v1342 = vsel %vm162, %v1341, 0.0
  %1343 = vadd.xlane.f32.xlu0 %v1342
  %v1344 = vpop.xlane.xlu0 %1343
  %v1345 = vrcp.pop %v1344
  %v1346 = vmul.f32 %v1341, %v1345
  %1347 = vrot.lane.b32.xlu0 %v1285, 96
  %v1348 = vpop.permute.xlu0 %1347
  %v1350 = vsel %vm176, %v1346, 0
  %v1352 = vsel %vm180, %v1348, 0
  %1354 = vmatpush.msra.mxu0 0.0
  %1355 = vmatpush.msra.mxu0 0.0
  %1356 = vmatpush.msra.mxu0 0.0
  %1357 = vmatpush.msra.mxu0 0.0
  %1358 = vmatpush.msra.mxu0 0.0
  %1359 = vmatpush.msra.mxu0 0.0
  %1360 = vmatpush.msra.mxu0 0.0
  %1361 = vmatpush.msra.mxu0 0.0
  %1362 = vmatpush.msra.mxu0 0.0
  %1363 = vmatpush.msra.mxu0 0.0
  %1364 = vmatpush.msra.mxu0 0.0
  %1365 = vmatpush.msra.mxu0 0.0
  %1366 = vmatpush.msra.mxu0 0.0
  %1367 = vmatpush.msra.mxu0 0.0
  %1368 = vmatpush.msra.mxu0 0.0
  %1369 = vmatpush.msra.mxu0 %v1352
  %1370 = vmatmul.f32.gmra.mxu0 %v1350
  %v1371 = vpop.f32.mrf.mxu0
  %v1372 = vadd.f32 0.0, %v1371
  %1373 = vdwg.mxu0
  %1374 = vrot.lane.b32.xlu0 %v1285, 124
  %v1375 = vpop.permute.xlu0 %1374
  %1376 = vrot.lane.b32.xlu0 %v1285, 108
  %v1377 = vpop.permute.xlu0 %1376
  %v1378 = vsel %vm128, %v1375, 0
  %v1380 = vsel %vm128, %v1377, 0
  %1382 = vmatpush.xpose.msra.mxu0 0.0
  %1383 = vmatpush.xpose.msra.mxu0 0.0
  %1384 = vmatpush.xpose.msra.mxu0 0.0
  %1385 = vmatpush.xpose.msra.mxu0 0.0
  %1386 = vmatpush.xpose.msra.mxu0 0.0
  %1387 = vmatpush.xpose.msra.mxu0 0.0
  %1388 = vmatpush.xpose.msra.mxu0 0.0
  %1389 = vmatpush.xpose.msra.mxu0 0.0
  %1390 = vmatpush.xpose.msra.mxu0 0.0
  %1391 = vmatpush.xpose.msra.mxu0 0.0
  %1392 = vmatpush.xpose.msra.mxu0 0.0
  %1393 = vmatpush.xpose.msra.mxu0 0.0
  %1394 = vmatpush.xpose.msra.mxu0 0.0
  %1395 = vmatpush.xpose.msra.mxu0 0.0
  %1396 = vmatpush.xpose.msra.mxu0 0.0
  %1397 = vmatpush.xpose.msra.mxu0 %v1380
  %1398 = vmatmul.f32.gmra.mxu0 %v1378
  %v1399 = vpop.f32.mrf.mxu0
  %v1400 = vadd.f32 0.0, %v1399
  %1401 = vdwg.mxu0
  %v1402 = vmul.f32 %v1400, 0.5
  %v1403 = vadd.f32 %v1402, %v159
  %v1404 = vsel %vm162, %v1403, -inf
  %1405 = vmax.xlane.f32.xlu0 %v1404
  %v1406 = vpop.xlane.xlu0 %1405
  %v1407 = vsub.f32 %v1403, %v1406
  %v1408 = vmul.f32 %v1407, 1.442695
  %v1409 = vpow.pop %v1408
  %v1410 = vsel %vm162, %v1409, 0.0
  %1411 = vadd.xlane.f32.xlu0 %v1410
  %v1412 = vpop.xlane.xlu0 %1411
  %v1413 = vrcp.pop %v1412
  %v1414 = vmul.f32 %v1409, %v1413
  %1415 = vrot.lane.b32.xlu0 %v1285, 92
  %v1416 = vpop.permute.xlu0 %1415
  %v1418 = vsel %vm176, %v1414, 0
  %v1420 = vsel %vm180, %v1416, 0
  %1422 = vmatpush.msra.mxu0 0.0
  %1423 = vmatpush.msra.mxu0 0.0
  %1424 = vmatpush.msra.mxu0 0.0
  %1425 = vmatpush.msra.mxu0 0.0
  %1426 = vmatpush.msra.mxu0 0.0
  %1427 = vmatpush.msra.mxu0 0.0
  %1428 = vmatpush.msra.mxu0 0.0
  %1429 = vmatpush.msra.mxu0 0.0
  %1430 = vmatpush.msra.mxu0 0.0
  %1431 = vmatpush.msra.mxu0 0.0
  %1432 = vmatpush.msra.mxu0 0.0
  %1433 = vmatpush.msra.mxu0 0.0
  %1434 = vmatpush.msra.mxu0 0.0
  %1435 = vmatpush.msra.mxu0 0.0
  %1436 = vmatpush.msra.mxu0 0.0
  %1437 = vmatpush.msra.mxu0 %v1420
  %1438 = vmatmul.f32.gmra.mxu0 %v1418
  %v1439 = vpop.f32.mrf.mxu0
  %v1440 = vadd.f32 0.0, %v1439
  %1441 = vdwg.mxu0
  %1442 = vrot.lane.b32.xlu0 %v1285, 120
  %v1443 = vpop.permute.xlu0 %1442
  %1444 = vrot.lane.b32.xlu0 %v1285, 104
  %v1445 = vpop.permute.xlu0 %1444
  %v1446 = vsel %vm128, %v1443, 0
  %v1448 = vsel %vm128, %v1445, 0
  %1450 = vmatpush.xpose.msra.mxu0 0.0
  %1451 = vmatpush.xpose.msra.mxu0 0.0
  %1452 = vmatpush.xpose.msra.mxu0 0.0
  %1453 = vmatpush.xpose.msra.mxu0 0.0
  %1454 = vmatpush.xpose.msra.mxu0 0.0
  %1455 = vmatpush.xpose.msra.mxu0 0.0
  %1456 = vmatpush.xpose.msra.mxu0 0.0
  %1457 = vmatpush.xpose.msra.mxu0 0.0
  %1458 = vmatpush.xpose.msra.mxu0 0.0
  %1459 = vmatpush.xpose.msra.mxu0 0.0
  %1460 = vmatpush.xpose.msra.mxu0 0.0
  %1461 = vmatpush.xpose.msra.mxu0 0.0
  %1462 = vmatpush.xpose.msra.mxu0 0.0
  %1463 = vmatpush.xpose.msra.mxu0 0.0
  %1464 = vmatpush.xpose.msra.mxu0 0.0
  %1465 = vmatpush.xpose.msra.mxu0 %v1448
  %1466 = vmatmul.f32.gmra.mxu0 %v1446
  %v1467 = vpop.f32.mrf.mxu0
  %v1468 = vadd.f32 0.0, %v1467
  %1469 = vdwg.mxu0
  %v1470 = vmul.f32 %v1468, 0.5
  %v1471 = vadd.f32 %v1470, %v159
  %v1472 = vsel %vm162, %v1471, -inf
  %1473 = vmax.xlane.f32.xlu0 %v1472
  %v1474 = vpop.xlane.xlu0 %1473
  %v1475 = vsub.f32 %v1471, %v1474
  %v1476 = vmul.f32 %v1475, 1.442695
  %v1477 = vpow.pop %v1476
  %v1478 = vsel %vm162, %v1477, 0.0
  %1479 = vadd.xlane.f32.xlu0 %v1478
  %v1480 = vpop.xlane.xlu0 %1479
  %v1481 = vrcp.pop %v1480
  %v1482 = vmul.f32 %v1477, %v1481
  %1483 = vrot.lane.b32.xlu0 %v1285, 88
  %v1484 = vpop.permute.xlu0 %1483
  %v1486 = vsel %vm176, %v1482, 0
  %v1488 = vsel %vm180, %v1484, 0
  %1490 = vmatpush.msra.mxu0 0.0
  %1491 = vmatpush.msra.mxu0 0.0
  %1492 = vmatpush.msra.mxu0 0.0
  %1493 = vmatpush.msra.mxu0 0.0
  %1494 = vmatpush.msra.mxu0 0.0
  %1495 = vmatpush.msra.mxu0 0.0
  %1496 = vmatpush.msra.mxu0 0.0
  %1497 = vmatpush.msra.mxu0 0.0
  %1498 = vmatpush.msra.mxu0 0.0
  %1499 = vmatpush.msra.mxu0 0.0
  %1500 = vmatpush.msra.mxu0 0.0
  %1501 = vmatpush.msra.mxu0 0.0
  %1502 = vmatpush.msra.mxu0 0.0
  %1503 = vmatpush.msra.mxu0 0.0
  %1504 = vmatpush.msra.mxu0 0.0
  %1505 = vmatpush.msra.mxu0 %v1488
  %1506 = vmatmul.f32.gmra.mxu0 %v1486
  %v1507 = vpop.f32.mrf.mxu0
  %v1508 = vadd.f32 0.0, %v1507
  %1509 = vdwg.mxu0
  %1510 = vrot.lane.b32.xlu0 %v1285, 116
  %v1511 = vpop.permute.xlu0 %1510
  %1512 = vrot.lane.b32.xlu0 %v1285, 100
  %v1513 = vpop.permute.xlu0 %1512
  %v1514 = vsel %vm128, %v1511, 0
  %v1516 = vsel %vm128, %v1513, 0
  %1518 = vmatpush.xpose.msra.mxu0 0.0
  %1519 = vmatpush.xpose.msra.mxu0 0.0
  %1520 = vmatpush.xpose.msra.mxu0 0.0
  %1521 = vmatpush.xpose.msra.mxu0 0.0
  %1522 = vmatpush.xpose.msra.mxu0 0.0
  %1523 = vmatpush.xpose.msra.mxu0 0.0
  %1524 = vmatpush.xpose.msra.mxu0 0.0
  %1525 = vmatpush.xpose.msra.mxu0 0.0
  %1526 = vmatpush.xpose.msra.mxu0 0.0
  %1527 = vmatpush.xpose.msra.mxu0 0.0
  %1528 = vmatpush.xpose.msra.mxu0 0.0
  %1529 = vmatpush.xpose.msra.mxu0 0.0
  %1530 = vmatpush.xpose.msra.mxu0 0.0
  %1531 = vmatpush.xpose.msra.mxu0 0.0
  %1532 = vmatpush.xpose.msra.mxu0 0.0
  %1533 = vmatpush.xpose.msra.mxu0 %v1516
  %1534 = vmatmul.f32.gmra.mxu0 %v1514
  %v1535 = vpop.f32.mrf.mxu0
  %v1536 = vadd.f32 0.0, %v1535
  %1537 = vdwg.mxu0
  %v1538 = vmul.f32 %v1536, 0.5
  %v1539 = vadd.f32 %v1538, %v159
  %v1540 = vsel %vm162, %v1539, -inf
  %1541 = vmax.xlane.f32.xlu0 %v1540
  %v1542 = vpop.xlane.xlu0 %1541
  %v1543 = vsub.f32 %v1539, %v1542
  %v1544 = vmul.f32 %v1543, 1.442695
  %v1545 = vpow.pop %v1544
  %v1546 = vsel %vm162, %v1545, 0.0
  %1547 = vadd.xlane.f32.xlu0 %v1546
  %v1548 = vpop.xlane.xlu0 %1547
  %v1549 = vrcp.pop %v1548
  %v1550 = vmul.f32 %v1545, %v1549
  %1551 = vrot.lane.b32.xlu0 %v1285, 84
  %v1552 = vpop.permute.xlu0 %1551
  %v1554 = vsel %vm176, %v1550, 0
  %v1556 = vsel %vm180, %v1552, 0
  %1558 = vmatpush.msra.mxu0 0.0
  %1559 = vmatpush.msra.mxu0 0.0
  %1560 = vmatpush.msra.mxu0 0.0
  %1561 = vmatpush.msra.mxu0 0.0
  %1562 = vmatpush.msra.mxu0 0.0
  %1563 = vmatpush.msra.mxu0 0.0
  %1564 = vmatpush.msra.mxu0 0.0
  %1565 = vmatpush.msra.mxu0 0.0
  %1566 = vmatpush.msra.mxu0 0.0
  %1567 = vmatpush.msra.mxu0 0.0
  %1568 = vmatpush.msra.mxu0 0.0
  %1569 = vmatpush.msra.mxu0 0.0
  %1570 = vmatpush.msra.mxu0 0.0
  %1571 = vmatpush.msra.mxu0 0.0
  %1572 = vmatpush.msra.mxu0 0.0
  %1573 = vmatpush.msra.mxu0 %v1556
  %1574 = vmatmul.f32.gmra.mxu0 %v1554
  %v1575 = vpop.f32.mrf.mxu0
  %v1576 = vadd.f32 0.0, %v1575
  %1577 = vdwg.mxu0
  %1578 = vrot.lane.b32.xlu0 %v1285, 80
  %v1579 = vpop.permute.xlu0 %1578
  %1580 = vrot.lane.b32.xlu0 %v1285, 64
  %v1581 = vpop.permute.xlu0 %1580
  %v1582 = vsel %vm128, %v1579, 0
  %v1584 = vsel %vm128, %v1581, 0
  %1586 = vmatpush.xpose.msra.mxu0 0.0
  %1587 = vmatpush.xpose.msra.mxu0 0.0
  %1588 = vmatpush.xpose.msra.mxu0 0.0
  %1589 = vmatpush.xpose.msra.mxu0 0.0
  %1590 = vmatpush.xpose.msra.mxu0 0.0
  %1591 = vmatpush.xpose.msra.mxu0 0.0
  %1592 = vmatpush.xpose.msra.mxu0 0.0
  %1593 = vmatpush.xpose.msra.mxu0 0.0
  %1594 = vmatpush.xpose.msra.mxu0 0.0
  %1595 = vmatpush.xpose.msra.mxu0 0.0
  %1596 = vmatpush.xpose.msra.mxu0 0.0
  %1597 = vmatpush.xpose.msra.mxu0 0.0
  %1598 = vmatpush.xpose.msra.mxu0 0.0
  %1599 = vmatpush.xpose.msra.mxu0 0.0
  %1600 = vmatpush.xpose.msra.mxu0 0.0
  %1601 = vmatpush.xpose.msra.mxu0 %v1584
  %1602 = vmatmul.f32.gmra.mxu0 %v1582
  %v1603 = vpop.f32.mrf.mxu0
  %v1604 = vadd.f32 0.0, %v1603
  %1605 = vdwg.mxu0
  %v1606 = vmul.f32 %v1604, 0.5
  %v1607 = vadd.f32 %v1606, %v159
  %v1608 = vsel %vm162, %v1607, -inf
  %1609 = vmax.xlane.f32.xlu0 %v1608
  %v1610 = vpop.xlane.xlu0 %1609
  %v1611 = vsub.f32 %v1607, %v1610
  %v1612 = vmul.f32 %v1611, 1.442695
  %v1613 = vpow.pop %v1612
  %v1614 = vsel %vm162, %v1613, 0.0
  %1615 = vadd.xlane.f32.xlu0 %v1614
  %v1616 = vpop.xlane.xlu0 %1615
  %v1617 = vrcp.pop %v1616
  %v1618 = vmul.f32 %v1613, %v1617
  %1619 = vrot.lane.b32.xlu0 %v1285, 48
  %v1620 = vpop.permute.xlu0 %1619
  %v1622 = vsel %vm176, %v1618, 0
  %v1624 = vsel %vm180, %v1620, 0
  %1626 = vmatpush.msra.mxu0 0.0
  %1627 = vmatpush.msra.mxu0 0.0
  %1628 = vmatpush.msra.mxu0 0.0
  %1629 = vmatpush.msra.mxu0 0.0
  %1630 = vmatpush.msra.mxu0 0.0
  %1631 = vmatpush.msra.mxu0 0.0
  %1632 = vmatpush.msra.mxu0 0.0
  %1633 = vmatpush.msra.mxu0 0.0
  %1634 = vmatpush.msra.mxu0 0.0
  %1635 = vmatpush.msra.mxu0 0.0
  %1636 = vmatpush.msra.mxu0 0.0
  %1637 = vmatpush.msra.mxu0 0.0
  %1638 = vmatpush.msra.mxu0 0.0
  %1639 = vmatpush.msra.mxu0 0.0
  %1640 = vmatpush.msra.mxu0 0.0
  %1641 = vmatpush.msra.mxu0 %v1624
  %1642 = vmatmul.f32.gmra.mxu0 %v1622
  %v1643 = vpop.f32.mrf.mxu0
  %v1644 = vadd.f32 0.0, %v1643
  %1645 = vdwg.mxu0
  %1646 = vrot.lane.b32.xlu0 %v1285, 76
  %v1647 = vpop.permute.xlu0 %1646
  %1648 = vrot.lane.b32.xlu0 %v1285, 60
  %v1649 = vpop.permute.xlu0 %1648
  %v1650 = vsel %vm128, %v1647, 0
  %v1652 = vsel %vm128, %v1649, 0
  %1654 = vmatpush.xpose.msra.mxu0 0.0
  %1655 = vmatpush.xpose.msra.mxu0 0.0
  %1656 = vmatpush.xpose.msra.mxu0 0.0
  %1657 = vmatpush.xpose.msra.mxu0 0.0
  %1658 = vmatpush.xpose.msra.mxu0 0.0
  %1659 = vmatpush.xpose.msra.mxu0 0.0
  %1660 = vmatpush.xpose.msra.mxu0 0.0
  %1661 = vmatpush.xpose.msra.mxu0 0.0
  %1662 = vmatpush.xpose.msra.mxu0 0.0
  %1663 = vmatpush.xpose.msra.mxu0 0.0
  %1664 = vmatpush.xpose.msra.mxu0 0.0
  %1665 = vmatpush.xpose.msra.mxu0 0.0
  %1666 = vmatpush.xpose.msra.mxu0 0.0
  %1667 = vmatpush.xpose.msra.mxu0 0.0
  %1668 = vmatpush.xpose.msra.mxu0 0.0
  %1669 = vmatpush.xpose.msra.mxu0 %v1652
  %1670 = vmatmul.f32.gmra.mxu0 %v1650
  %v1671 = vpop.f32.mrf.mxu0
  %v1672 = vadd.f32 0.0, %v1671
  %1673 = vdwg.mxu0
  %v1674 = vmul.f32 %v1672, 0.5
  %v1675 = vadd.f32 %v1674, %v159
  %v1676 = vsel %vm162, %v1675, -inf
  %1677 = vmax.xlane.f32.xlu0 %v1676
  %v1678 = vpop.xlane.xlu0 %1677
  %v1679 = vsub.f32 %v1675, %v1678
  %v1680 = vmul.f32 %v1679, 1.442695
  %v1681 = vpow.pop %v1680
  %v1682 = vsel %vm162, %v1681, 0.0
  %1683 = vadd.xlane.f32.xlu0 %v1682
  %v1684 = vpop.xlane.xlu0 %1683
  %v1685 = vrcp.pop %v1684
  %v1686 = vmul.f32 %v1681, %v1685
  %1687 = vrot.lane.b32.xlu0 %v1285, 44
  %v1688 = vpop.permute.xlu0 %1687
  %v1690 = vsel %vm176, %v1686, 0
  %v1692 = vsel %vm180, %v1688, 0
  %1694 = vmatpush.msra.mxu0 0.0
  %1695 = vmatpush.msra.mxu0 0.0
  %1696 = vmatpush.msra.mxu0 0.0
  %1697 = vmatpush.msra.mxu0 0.0
  %1698 = vmatpush.msra.mxu0 0.0
  %1699 = vmatpush.msra.mxu0 0.0
  %1700 = vmatpush.msra.mxu0 0.0
  %1701 = vmatpush.msra.mxu0 0.0
  %1702 = vmatpush.msra.mxu0 0.0
  %1703 = vmatpush.msra.mxu0 0.0
  %1704 = vmatpush.msra.mxu0 0.0
  %1705 = vmatpush.msra.mxu0 0.0
  %1706 = vmatpush.msra.mxu0 0.0
  %1707 = vmatpush.msra.mxu0 0.0
  %1708 = vmatpush.msra.mxu0 0.0
  %1709 = vmatpush.msra.mxu0 %v1692
  %1710 = vmatmul.f32.gmra.mxu0 %v1690
  %v1711 = vpop.f32.mrf.mxu0
  %v1712 = vadd.f32 0.0, %v1711
  %1713 = vdwg.mxu0
  %1714 = vrot.lane.b32.xlu0 %v1285, 72
  %v1715 = vpop.permute.xlu0 %1714
  %1716 = vrot.lane.b32.xlu0 %v1285, 56
  %v1717 = vpop.permute.xlu0 %1716
  %v1718 = vsel %vm128, %v1715, 0
  %v1720 = vsel %vm128, %v1717, 0
  %1722 = vmatpush.xpose.msra.mxu0 0.0
  %1723 = vmatpush.xpose.msra.mxu0 0.0
  %1724 = vmatpush.xpose.msra.mxu0 0.0
  %1725 = vmatpush.xpose.msra.mxu0 0.0
  %1726 = vmatpush.xpose.msra.mxu0 0.0
  %1727 = vmatpush.xpose.msra.mxu0 0.0
  %1728 = vmatpush.xpose.msra.mxu0 0.0
  %1729 = vmatpush.xpose.msra.mxu0 0.0
  %1730 = vmatpush.xpose.msra.mxu0 0.0
  %1731 = vmatpush.xpose.msra.mxu0 0.0
  %1732 = vmatpush.xpose.msra.mxu0 0.0
  %1733 = vmatpush.xpose.msra.mxu0 0.0
  %1734 = vmatpush.xpose.msra.mxu0 0.0
  %1735 = vmatpush.xpose.msra.mxu0 0.0
  %1736 = vmatpush.xpose.msra.mxu0 0.0
  %1737 = vmatpush.xpose.msra.mxu0 %v1720
  %1738 = vmatmul.f32.gmra.mxu0 %v1718
  %v1739 = vpop.f32.mrf.mxu0
  %v1740 = vadd.f32 0.0, %v1739
  %1741 = vdwg.mxu0
  %v1742 = vmul.f32 %v1740, 0.5
  %v1743 = vadd.f32 %v1742, %v159
  %v1744 = vsel %vm162, %v1743, -inf
  %1745 = vmax.xlane.f32.xlu0 %v1744
  %v1746 = vpop.xlane.xlu0 %1745
  %v1747 = vsub.f32 %v1743, %v1746
  %v1748 = vmul.f32 %v1747, 1.442695
  %v1749 = vpow.pop %v1748
  %v1750 = vsel %vm162, %v1749, 0.0
  %1751 = vadd.xlane.f32.xlu0 %v1750
  %v1752 = vpop.xlane.xlu0 %1751
  %v1753 = vrcp.pop %v1752
  %v1754 = vmul.f32 %v1749, %v1753
  %1755 = vrot.lane.b32.xlu0 %v1285, 40
  %v1756 = vpop.permute.xlu0 %1755
  %v1758 = vsel %vm176, %v1754, 0
  %v1760 = vsel %vm180, %v1756, 0
  %1762 = vmatpush.msra.mxu0 0.0
  %1763 = vmatpush.msra.mxu0 0.0
  %1764 = vmatpush.msra.mxu0 0.0
  %1765 = vmatpush.msra.mxu0 0.0
  %1766 = vmatpush.msra.mxu0 0.0
  %1767 = vmatpush.msra.mxu0 0.0
  %1768 = vmatpush.msra.mxu0 0.0
  %1769 = vmatpush.msra.mxu0 0.0
  %1770 = vmatpush.msra.mxu0 0.0
  %1771 = vmatpush.msra.mxu0 0.0
  %1772 = vmatpush.msra.mxu0 0.0
  %1773 = vmatpush.msra.mxu0 0.0
  %1774 = vmatpush.msra.mxu0 0.0
  %1775 = vmatpush.msra.mxu0 0.0
  %1776 = vmatpush.msra.mxu0 0.0
  %1777 = vmatpush.msra.mxu0 %v1760
  %1778 = vmatmul.f32.gmra.mxu0 %v1758
  %v1779 = vpop.f32.mrf.mxu0
  %v1780 = vadd.f32 0.0, %v1779
  %1781 = vdwg.mxu0
  %1782 = vrot.lane.b32.xlu0 %v1285, 68
  %v1783 = vpop.permute.xlu0 %1782
  %1784 = vrot.lane.b32.xlu0 %v1285, 52
  %v1785 = vpop.permute.xlu0 %1784
  %v1786 = vsel %vm128, %v1783, 0
  %v1788 = vsel %vm128, %v1785, 0
  %1790 = vmatpush.xpose.msra.mxu0 0.0
  %1791 = vmatpush.xpose.msra.mxu0 0.0
  %1792 = vmatpush.xpose.msra.mxu0 0.0
  %1793 = vmatpush.xpose.msra.mxu0 0.0
  %1794 = vmatpush.xpose.msra.mxu0 0.0
  %1795 = vmatpush.xpose.msra.mxu0 0.0
  %1796 = vmatpush.xpose.msra.mxu0 0.0
  %1797 = vmatpush.xpose.msra.mxu0 0.0
  %1798 = vmatpush.xpose.msra.mxu0 0.0
  %1799 = vmatpush.xpose.msra.mxu0 0.0
  %1800 = vmatpush.xpose.msra.mxu0 0.0
  %1801 = vmatpush.xpose.msra.mxu0 0.0
  %1802 = vmatpush.xpose.msra.mxu0 0.0
  %1803 = vmatpush.xpose.msra.mxu0 0.0
  %1804 = vmatpush.xpose.msra.mxu0 0.0
  %1805 = vmatpush.xpose.msra.mxu0 %v1788
  %1806 = vmatmul.f32.gmra.mxu0 %v1786
  %v1807 = vpop.f32.mrf.mxu0
  %v1808 = vadd.f32 0.0, %v1807
  %1809 = vdwg.mxu0
  %v1810 = vmul.f32 %v1808, 0.5
  %v1811 = vadd.f32 %v1810, %v159
  %v1812 = vsel %vm162, %v1811, -inf
  %1813 = vmax.xlane.f32.xlu0 %v1812
  %v1814 = vpop.xlane.xlu0 %1813
  %v1815 = vsub.f32 %v1811, %v1814
  %v1816 = vmul.f32 %v1815, 1.442695
  %v1817 = vpow.pop %v1816
  %v1818 = vsel %vm162, %v1817, 0.0
  %1819 = vadd.xlane.f32.xlu0 %v1818
  %v1820 = vpop.xlane.xlu0 %1819
  %v1821 = vrcp.pop %v1820
  %v1822 = vmul.f32 %v1817, %v1821
  %1823 = vrot.lane.b32.xlu0 %v1285, 36
  %v1824 = vpop.permute.xlu0 %1823
  %v1826 = vsel %vm176, %v1822, 0
  %v1828 = vsel %vm180, %v1824, 0
  %1830 = vmatpush.msra.mxu0 0.0
  %1831 = vmatpush.msra.mxu0 0.0
  %1832 = vmatpush.msra.mxu0 0.0
  %1833 = vmatpush.msra.mxu0 0.0
  %1834 = vmatpush.msra.mxu0 0.0
  %1835 = vmatpush.msra.mxu0 0.0
  %1836 = vmatpush.msra.mxu0 0.0
  %1837 = vmatpush.msra.mxu0 0.0
  %1838 = vmatpush.msra.mxu0 0.0
  %1839 = vmatpush.msra.mxu0 0.0
  %1840 = vmatpush.msra.mxu0 0.0
  %1841 = vmatpush.msra.mxu0 0.0
  %1842 = vmatpush.msra.mxu0 0.0
  %1843 = vmatpush.msra.mxu0 0.0
  %1844 = vmatpush.msra.mxu0 0.0
  %1845 = vmatpush.msra.mxu0 %v1828
  %1846 = vmatmul.f32.gmra.mxu0 %v1826
  %v1847 = vpop.f32.mrf.mxu0
  %v1848 = vadd.f32 0.0, %v1847
  %1849 = vdwg.mxu0
  %1850 = vrot.lane.b32.xlu0 %v1285, 32
  %v1851 = vpop.permute.xlu0 %1850
  %1852 = vrot.lane.b32.xlu0 %v1285, 16
  %v1853 = vpop.permute.xlu0 %1852
  %v1854 = vsel %vm128, %v1851, 0
  %v1856 = vsel %vm128, %v1853, 0
  %1858 = vmatpush.xpose.msra.mxu0 0.0
  %1859 = vmatpush.xpose.msra.mxu0 0.0
  %1860 = vmatpush.xpose.msra.mxu0 0.0
  %1861 = vmatpush.xpose.msra.mxu0 0.0
  %1862 = vmatpush.xpose.msra.mxu0 0.0
  %1863 = vmatpush.xpose.msra.mxu0 0.0
  %1864 = vmatpush.xpose.msra.mxu0 0.0
  %1865 = vmatpush.xpose.msra.mxu0 0.0
  %1866 = vmatpush.xpose.msra.mxu0 0.0
  %1867 = vmatpush.xpose.msra.mxu0 0.0
  %1868 = vmatpush.xpose.msra.mxu0 0.0
  %1869 = vmatpush.xpose.msra.mxu0 0.0
  %1870 = vmatpush.xpose.msra.mxu0 0.0
  %1871 = vmatpush.xpose.msra.mxu0 0.0
  %1872 = vmatpush.xpose.msra.mxu0 0.0
  %1873 = vmatpush.xpose.msra.mxu0 %v1856
  %1874 = vmatmul.f32.gmra.mxu0 %v1854
  %v1875 = vpop.f32.mrf.mxu0
  %v1876 = vadd.f32 0.0, %v1875
  %1877 = vdwg.mxu0
  %v1878 = vmul.f32 %v1876, 0.5
  %v1879 = vadd.f32 %v1878, %v159
  %v1880 = vsel %vm162, %v1879, -inf
  %1881 = vmax.xlane.f32.xlu0 %v1880
  %v1882 = vpop.xlane.xlu0 %1881
  %v1883 = vsub.f32 %v1879, %v1882
  %v1884 = vmul.f32 %v1883, 1.442695
  %v1885 = vpow.pop %v1884
  %v1886 = vsel %vm162, %v1885, 0.0
  %1887 = vadd.xlane.f32.xlu0 %v1886
  %v1888 = vpop.xlane.xlu0 %1887
  %v1889 = vrcp.pop %v1888
  %v1890 = vmul.f32 %v1885, %v1889
  %v1892 = vsel %vm176, %v1890, 0
  %v1895 = vsel %vm180, %v1305, 0
  %1897 = vmatpush.msra.mxu0 0.0
  %1898 = vmatpush.msra.mxu0 0.0
  %1899 = vmatpush.msra.mxu0 0.0
  %1900 = vmatpush.msra.mxu0 0.0
  %1901 = vmatpush.msra.mxu0 0.0
  %1902 = vmatpush.msra.mxu0 0.0
  %1903 = vmatpush.msra.mxu0 0.0
  %1904 = vmatpush.msra.mxu0 0.0
  %1905 = vmatpush.msra.mxu0 0.0
  %1906 = vmatpush.msra.mxu0 0.0
  %1907 = vmatpush.msra.mxu0 0.0
  %1908 = vmatpush.msra.mxu0 0.0
  %1909 = vmatpush.msra.mxu0 0.0
  %1910 = vmatpush.msra.mxu0 0.0
  %1911 = vmatpush.msra.mxu0 0.0
  %1912 = vmatpush.msra.mxu0 %v1895
  %1913 = vmatmul.f32.gmra.mxu0 %v1892
  %v1914 = vpop.f32.mrf.mxu0
  %v1915 = vadd.f32 0.0, %v1914
  %1916 = vdwg.mxu0
  %1917 = vrot.lane.b32.xlu0 %v1285, 28
  %v1918 = vpop.permute.xlu0 %1917
  %1919 = vrot.lane.b32.xlu0 %v1285, 12
  %v1920 = vpop.permute.xlu0 %1919
  %v1921 = vsel %vm128, %v1918, 0
  %v1923 = vsel %vm128, %v1920, 0
  %1925 = vmatpush.xpose.msra.mxu0 0.0
  %1926 = vmatpush.xpose.msra.mxu0 0.0
  %1927 = vmatpush.xpose.msra.mxu0 0.0
  %1928 = vmatpush.xpose.msra.mxu0 0.0
  %1929 = vmatpush.xpose.msra.mxu0 0.0
  %1930 = vmatpush.xpose.msra.mxu0 0.0
  %1931 = vmatpush.xpose.msra.mxu0 0.0
  %1932 = vmatpush.xpose.msra.mxu0 0.0
  %1933 = vmatpush.xpose.msra.mxu0 0.0
  %1934 = vmatpush.xpose.msra.mxu0 0.0
  %1935 = vmatpush.xpose.msra.mxu0 0.0
  %1936 = vmatpush.xpose.msra.mxu0 0.0
  %1937 = vmatpush.xpose.msra.mxu0 0.0
  %1938 = vmatpush.xpose.msra.mxu0 0.0
  %1939 = vmatpush.xpose.msra.mxu0 0.0
  %1940 = vmatpush.xpose.msra.mxu0 %v1923
  %1941 = vmatmul.f32.gmra.mxu0 %v1921
  %v1942 = vpop.f32.mrf.mxu0
  %v1943 = vadd.f32 0.0, %v1942
  %1944 = vdwg.mxu0
  %v1945 = vmul.f32 %v1943, 0.5
  %v1946 = vadd.f32 %v1945, %v159
  %v1947 = vsel %vm162, %v1946, -inf
  %1948 = vmax.xlane.f32.xlu0 %v1947
  %v1949 = vpop.xlane.xlu0 %1948
  %v1950 = vsub.f32 %v1946, %v1949
  %v1951 = vmul.f32 %v1950, 1.442695
  %v1952 = vpow.pop %v1951
  %v1953 = vsel %vm162, %v1952, 0.0
  %1954 = vadd.xlane.f32.xlu0 %v1953
  %v1955 = vpop.xlane.xlu0 %1954
  %v1956 = vrcp.pop %v1955
  %v1957 = vmul.f32 %v1952, %v1956
  %1958 = vrot.lane.b32.xlu0 %v1305, 124
  %v1959 = vpop.permute.xlu0 %1958
  %v1961 = vsel %vm176, %v1957, 0
  %v1963 = vsel %vm180, %v1959, 0
  %1965 = vmatpush.msra.mxu0 0.0
  %1966 = vmatpush.msra.mxu0 0.0
  %1967 = vmatpush.msra.mxu0 0.0
  %1968 = vmatpush.msra.mxu0 0.0
  %1969 = vmatpush.msra.mxu0 0.0
  %1970 = vmatpush.msra.mxu0 0.0
  %1971 = vmatpush.msra.mxu0 0.0
  %1972 = vmatpush.msra.mxu0 0.0
  %1973 = vmatpush.msra.mxu0 0.0
  %1974 = vmatpush.msra.mxu0 0.0
  %1975 = vmatpush.msra.mxu0 0.0
  %1976 = vmatpush.msra.mxu0 0.0
  %1977 = vmatpush.msra.mxu0 0.0
  %1978 = vmatpush.msra.mxu0 0.0
  %1979 = vmatpush.msra.mxu0 0.0
  %1980 = vmatpush.msra.mxu0 %v1963
  %1981 = vmatmul.f32.gmra.mxu0 %v1961
  %v1982 = vpop.f32.mrf.mxu0
  %v1983 = vadd.f32 0.0, %v1982
  %1984 = vdwg.mxu0
  %1985 = vrot.lane.b32.xlu0 %v1285, 24
  %v1986 = vpop.permute.xlu0 %1985
  %1987 = vrot.lane.b32.xlu0 %v1285, 8
  %v1988 = vpop.permute.xlu0 %1987
  %v1989 = vsel %vm128, %v1986, 0
  %v1991 = vsel %vm128, %v1988, 0
  %1993 = vmatpush.xpose.msra.mxu0 0.0
  %1994 = vmatpush.xpose.msra.mxu0 0.0
  %1995 = vmatpush.xpose.msra.mxu0 0.0
  %1996 = vmatpush.xpose.msra.mxu0 0.0
  %1997 = vmatpush.xpose.msra.mxu0 0.0
  %1998 = vmatpush.xpose.msra.mxu0 0.0
  %1999 = vmatpush.xpose.msra.mxu0 0.0
  %2000 = vmatpush.xpose.msra.mxu0 0.0
  %2001 = vmatpush.xpose.msra.mxu0 0.0
  %2002 = vmatpush.xpose.msra.mxu0 0.0
  %2003 = vmatpush.xpose.msra.mxu0 0.0
  %2004 = vmatpush.xpose.msra.mxu0 0.0
  %2005 = vmatpush.xpose.msra.mxu0 0.0
  %2006 = vmatpush.xpose.msra.mxu0 0.0
  %2007 = vmatpush.xpose.msra.mxu0 0.0
  %2008 = vmatpush.xpose.msra.mxu0 %v1991
  %2009 = vmatmul.f32.gmra.mxu0 %v1989
  %v2010 = vpop.f32.mrf.mxu0
  %v2011 = vadd.f32 0.0, %v2010
  %2012 = vdwg.mxu0
  %v2013 = vmul.f32 %v2011, 0.5
  %v2014 = vadd.f32 %v2013, %v159
  %v2015 = vsel %vm162, %v2014, -inf
  %2016 = vmax.xlane.f32.xlu0 %v2015
  %v2017 = vpop.xlane.xlu0 %2016
  %v2018 = vsub.f32 %v2014, %v2017
  %v2019 = vmul.f32 %v2018, 1.442695
  %v2020 = vpow.pop %v2019
  %v2021 = vsel %vm162, %v2020, 0.0
  %2022 = vadd.xlane.f32.xlu0 %v2021
  %v2023 = vpop.xlane.xlu0 %2022
  %v2024 = vrcp.pop %v2023
  %v2025 = vmul.f32 %v2020, %v2024
  %2026 = vrot.lane.b32.xlu0 %v1305, 120
  %v2027 = vpop.permute.xlu0 %2026
  %v2029 = vsel %vm176, %v2025, 0
  %v2031 = vsel %vm180, %v2027, 0
  %2033 = vmatpush.msra.mxu0 0.0
  %2034 = vmatpush.msra.mxu0 0.0
  %2035 = vmatpush.msra.mxu0 0.0
  %2036 = vmatpush.msra.mxu0 0.0
  %2037 = vmatpush.msra.mxu0 0.0
  %2038 = vmatpush.msra.mxu0 0.0
  %2039 = vmatpush.msra.mxu0 0.0
  %2040 = vmatpush.msra.mxu0 0.0
  %2041 = vmatpush.msra.mxu0 0.0
  %2042 = vmatpush.msra.mxu0 0.0
  %2043 = vmatpush.msra.mxu0 0.0
  %2044 = vmatpush.msra.mxu0 0.0
  %2045 = vmatpush.msra.mxu0 0.0
  %2046 = vmatpush.msra.mxu0 0.0
  %2047 = vmatpush.msra.mxu0 0.0
  %2048 = vmatpush.msra.mxu0 %v2031
  %2049 = vmatmul.f32.gmra.mxu0 %v2029
  %v2050 = vpop.f32.mrf.mxu0
  %v2051 = vadd.f32 0.0, %v2050
  %2052 = vdwg.mxu0
  %2053 = vrot.lane.b32.xlu0 %v1285, 20
  %v2054 = vpop.permute.xlu0 %2053
  %2055 = vrot.lane.b32.xlu0 %v1285, 4
  %v2056 = vpop.permute.xlu0 %2055
  %v2057 = vsel %vm128, %v2054, 0
  %v2059 = vsel %vm128, %v2056, 0
  %2061 = vmatpush.xpose.msra.mxu0 0.0
  %2062 = vmatpush.xpose.msra.mxu0 0.0
  %2063 = vmatpush.xpose.msra.mxu0 0.0
  %2064 = vmatpush.xpose.msra.mxu0 0.0
  %2065 = vmatpush.xpose.msra.mxu0 0.0
  %2066 = vmatpush.xpose.msra.mxu0 0.0
  %2067 = vmatpush.xpose.msra.mxu0 0.0
  %2068 = vmatpush.xpose.msra.mxu0 0.0
  %2069 = vmatpush.xpose.msra.mxu0 0.0
  %2070 = vmatpush.xpose.msra.mxu0 0.0
  %2071 = vmatpush.xpose.msra.mxu0 0.0
  %2072 = vmatpush.xpose.msra.mxu0 0.0
  %2073 = vmatpush.xpose.msra.mxu0 0.0
  %2074 = vmatpush.xpose.msra.mxu0 0.0
  %2075 = vmatpush.xpose.msra.mxu0 0.0
  %2076 = vmatpush.xpose.msra.mxu0 %v2059
  %2077 = vmatmul.f32.gmra.mxu0 %v2057
  %v2078 = vpop.f32.mrf.mxu0
  %v2079 = vadd.f32 0.0, %v2078
  %2080 = vdwg.mxu0
  %v2081 = vmul.f32 %v2079, 0.5
  %v2082 = vadd.f32 %v2081, %v159
  %v2083 = vsel %vm162, %v2082, -inf
  %2084 = vmax.xlane.f32.xlu0 %v2083
  %v2085 = vpop.xlane.xlu0 %2084
  %v2086 = vsub.f32 %v2082, %v2085
  %v2087 = vmul.f32 %v2086, 1.442695
  %v2088 = vpow.pop %v2087
  %v2089 = vsel %vm162, %v2088, 0.0
  %2090 = vadd.xlane.f32.xlu0 %v2089
  %v2091 = vpop.xlane.xlu0 %2090
  %v2092 = vrcp.pop %v2091
  %v2093 = vmul.f32 %v2088, %v2092
  %2094 = vrot.lane.b32.xlu0 %v1305, 116
  %v2095 = vpop.permute.xlu0 %2094
  %v2097 = vsel %vm176, %v2093, 0
  %v2099 = vsel %vm180, %v2095, 0
  %2101 = vmatpush.msra.mxu0 0.0
  %2102 = vmatpush.msra.mxu0 0.0
  %2103 = vmatpush.msra.mxu0 0.0
  %2104 = vmatpush.msra.mxu0 0.0
  %2105 = vmatpush.msra.mxu0 0.0
  %2106 = vmatpush.msra.mxu0 0.0
  %2107 = vmatpush.msra.mxu0 0.0
  %2108 = vmatpush.msra.mxu0 0.0
  %2109 = vmatpush.msra.mxu0 0.0
  %2110 = vmatpush.msra.mxu0 0.0
  %2111 = vmatpush.msra.mxu0 0.0
  %2112 = vmatpush.msra.mxu0 0.0
  %2113 = vmatpush.msra.mxu0 0.0
  %2114 = vmatpush.msra.mxu0 0.0
  %2115 = vmatpush.msra.mxu0 0.0
  %2116 = vmatpush.msra.mxu0 %v2099
  %2117 = vmatmul.f32.gmra.mxu0 %v2097
  %v2118 = vpop.f32.mrf.mxu0
  %v2119 = vadd.f32 0.0, %v2118
  %2120 = vdwg.mxu0
  %2122 = vrot.lane.b32.xlu0 %v1440, 4
  %v2123 = vpop.permute.xlu0 %2122
  %2126 = vrot.lane.b32.xlu0 %v1508, 8
  %v2127 = vpop.permute.xlu0 %2126
  %2130 = vrot.lane.b32.xlu0 %v1576, 12
  %v2131 = vpop.permute.xlu0 %2130
  %2134 = vrot.lane.b32.xlu0 %v1644, 16
  %v2135 = vpop.permute.xlu0 %2134
  %2138 = vrot.lane.b32.xlu0 %v1712, 20
  %v2139 = vpop.permute.xlu0 %2138
  %2142 = vrot.lane.b32.xlu0 %v1780, 24
  %v2143 = vpop.permute.xlu0 %2142
  %2146 = vrot.lane.b32.xlu0 %v1848, 28
  %v2147 = vpop.permute.xlu0 %2146
  %2150 = vrot.lane.b32.xlu0 %v1915, 32
  %v2151 = vpop.permute.xlu0 %2150
  %2154 = vrot.lane.b32.xlu0 %v1983, 36
  %v2155 = vpop.permute.xlu0 %2154
  %2158 = vrot.lane.b32.xlu0 %v2051, 40
  %v2159 = vpop.permute.xlu0 %2158
  %2162 = vrot.lane.b32.xlu0 %v2119, 44
  %v2163 = vpop.permute.xlu0 %2162
  %v2165 = vsel %vm128, %v1372, %v2123
  %v2166 = vsel %vm995, %v2165, %v2127
  %v2167 = vsel %vm997, %v2166, %v2131
  %v2168 = vsel %vm999, %v2167, %v2135
  %v2169 = vsel %vm1001, %v2168, %v2139
  %v2170 = vsel %vm1003, %v2169, %v2143
  %v2171 = vsel %vm1005, %v2170, %v2147
  %v2172 = vsel %vm1007, %v2171, %v2151
  %v2173 = vsel %vm1009, %v2172, %v2155
  %v2174 = vsel %vm1011, %v2173, %v2159
  %v2175 = vsel %vm1013, %v2174, %v2163
  %s2176 = scalar_lea.vmem %s1, 240
  %v2177 = vld [vmem:[%s2176] sm:$0xff]
  %v2178 = vld [vmem:[%s2176 + $0x8] sm:$0xff]
  %v2179 = vld [vmem:[%s2176 + $0x10] sm:$0xff]
  %v2180 = vld [vmem:[%s2176 + $0x18] sm:$0xff]
  %v2181 = vld [vmem:[%s2176 + $0x20] sm:$0xff]
  %v2182 = vld [vmem:[%s2176 + $0x28] sm:$0xff]
  %v2183 = vld [vmem:[%s4 + $0xd] sm:$0x1]
  %v2184 = vperm.slane %v2183, 0
  %v2186 = vsel %vm38, %v2175, 0
  %2188 = vmatpush.msra.mxu0 0.0
  %2189 = vmatpush.msra.mxu0 0.0
  %2190 = vmatpush.msra.mxu0 0.0
  %2191 = vmatpush.msra.mxu0 0.0
  %2192 = vmatpush.msra.mxu0 0.0
  %2193 = vmatpush.msra.mxu0 0.0
  %2194 = vmatpush.msra.mxu0 0.0
  %2195 = vmatpush.msra.mxu0 0.0
  %2196 = vmatpush.msra.mxu0 0.0
  %2197 = vmatpush.msra.mxu0 0.0
  %2198 = vmatpush.msra.mxu0 %v2182
  %2199 = vmatpush.msra.mxu0 %v2181
  %2200 = vmatpush.msra.mxu0 %v2180
  %2201 = vmatpush.msra.mxu0 %v2179
  %2202 = vmatpush.msra.mxu0 %v2178
  %2203 = vmatpush.msra.mxu0 %v2177
  %2204 = vmatmul.f32.gmra.mxu0 %v2186
  %v2205 = vpop.f32.mrf.mxu0
  %v2206 = vadd.f32 %v2184, %v2205
  %2207 = vdwg.mxu0
  %v2208 = vadd.f32 %v1243, %v2206
  %v2209 = vld [vmem:[%s4 + $0x10] sm:$0x1]
  %v2210 = vld [vmem:[%s4 + $0x11] sm:$0x1]
  %v2212 = vsel %vm38, %v2208, 0
  %2214 = vmatpush.msra.mxu0 0.0
  %2215 = vmatpush.msra.mxu0 0.0
  %2216 = vmatpush.msra.mxu0 0.0
  %2217 = vmatpush.msra.mxu0 0.0
  %2218 = vmatpush.msra.mxu0 0.0
  %2219 = vmatpush.msra.mxu0 0.0
  %2220 = vmatpush.msra.mxu0 0.0
  %2221 = vmatpush.msra.mxu0 0.0
  %2222 = vmatpush.msra.mxu0 0.0
  %2223 = vmatpush.msra.mxu0 0.0
  %2224 = vmatpush.msra.mxu0 %v29
  %2225 = vmatpush.msra.mxu0 %v28
  %2226 = vmatpush.msra.mxu0 %v27
  %2227 = vmatpush.msra.mxu0 %v26
  %2228 = vmatpush.msra.mxu0 %v25
  %2229 = vmatpush.msra.mxu0 %v24
  %2230 = vmatmul.f32.gmra.mxu0 %v2212
  %v2231 = vpop.f32.mrf.mxu0
  %v2232 = vadd.f32 0.0, %v2231
  %2233 = vdwg.mxu0
  %v2234 = vsub.f32 %v2208, %v2232
  %v2235 = vmul.f32 %v2234, %v2234
  %v2237 = vsel %vm38, %v2235, 0
  %2239 = vmatpush.msra.mxu0 0.0
  %2240 = vmatpush.msra.mxu0 0.0
  %2241 = vmatpush.msra.mxu0 0.0
  %2242 = vmatpush.msra.mxu0 0.0
  %2243 = vmatpush.msra.mxu0 0.0
  %2244 = vmatpush.msra.mxu0 0.0
  %2245 = vmatpush.msra.mxu0 0.0
  %2246 = vmatpush.msra.mxu0 0.0
  %2247 = vmatpush.msra.mxu0 0.0
  %2248 = vmatpush.msra.mxu0 0.0
  %2249 = vmatpush.msra.mxu0 %v29
  %2250 = vmatpush.msra.mxu0 %v28
  %2251 = vmatpush.msra.mxu0 %v27
  %2252 = vmatpush.msra.mxu0 %v26
  %2253 = vmatpush.msra.mxu0 %v25
  %2254 = vmatpush.msra.mxu0 %v24
  %2255 = vmatmul.f32.gmra.mxu0 %v2237
  %v2256 = vpop.f32.mrf.mxu0
  %v2257 = vadd.f32 1e-05, %v2256
  %2258 = vdwg.mxu0
  %v2259 = vrsqrt.pop %v2257
  %v2260 = vmul.f32 %v2259, %v2257
  %v2261 = vmul.f32 %v2260, %v2259
  %v2262 = vmul.f32 0.5, %v2261
  %v2263 = vsub.f32 1.5, %v2262
  %v2264 = vmul.f32 %v2259, %v2263
  %vm2265 = vweird.f32 %v2257
  %vm2266 = vweird.f32 %v2259
  %vm2267 = vmor %vm2265, %vm2266
  %v2268 = vsel %vm2267, %v2259, %v2264
  %v2269 = vmul.f32 %v2234, %v2268
  %v2270 = vperm.slane %v2209, 0
  %v2271 = vmul.f32 %v2269, %v2270
  %v2272 = vperm.slane %v2210, 0
  %v2273 = vadd.f32 %v2271, %v2272
  %s2274 = scalar_lea.vmem %s1, 288
  %v2275 = vld [vmem:[%s2274] sm:$0xff]
  %v2276 = vld [vmem:[%s2274 + $0x8] sm:$0xff]
  %v2277 = vld [vmem:[%s2274 + $0x10] sm:$0xff]
  %v2278 = vld [vmem:[%s2274 + $0x18] sm:$0xff]
  %v2279 = vld [vmem:[%s2274 + $0x20] sm:$0xff]
  %v2280 = vld [vmem:[%s2274 + $0x28] sm:$0xff]
  %v2281 = vld [vmem:[%s4 + $0xe] sm:$0x1]
  %v2282 = vperm.slane %v2281, 0
  %v2284 = vsel %vm38, %v2273, 0
  %2286 = vmatpush.msra.mxu0 0.0
  %2287 = vmatpush.msra.mxu0 0.0
  %2288 = vmatpush.msra.mxu0 0.0
  %2289 = vmatpush.msra.mxu0 0.0
  %2290 = vmatpush.msra.mxu0 0.0
  %2291 = vmatpush.msra.mxu0 0.0
  %2292 = vmatpush.msra.mxu0 0.0
  %2293 = vmatpush.msra.mxu0 0.0
  %2294 = vmatpush.msra.mxu0 0.0
  %2295 = vmatpush.msra.mxu0 0.0
  %2296 = vmatpush.msra.mxu0 %v2280
  %2297 = vmatpush.msra.mxu0 %v2279
  %2298 = vmatpush.msra.mxu0 %v2278
  %2299 = vmatpush.msra.mxu0 %v2277
  %2300 = vmatpush.msra.mxu0 %v2276
  %2301 = vmatpush.msra.mxu0 %v2275
  %2302 = vmatmul.f32.gmra.mxu0 %v2284
  %v2303 = vpop.f32.mrf.mxu0
  %v2304 = vadd.f32 %v2282, %v2303
  %2305 = vdwg.mxu0
  %v2306 = vmax.f32 %v2304, 0.0
  %s2307 = scalar_lea.vmem %s1, 336
  %v2308 = vld [vmem:[%s2307] sm:$0xff]
  %v2309 = vld [vmem:[%s2307 + $0x8] sm:$0xff]
  %v2310 = vld [vmem:[%s2307 + $0x10] sm:$0xff]
  %v2311 = vld [vmem:[%s2307 + $0x18] sm:$0xff]
  %v2312 = vld [vmem:[%s2307 + $0x20] sm:$0xff]
  %v2313 = vld [vmem:[%s2307 + $0x28] sm:$0xff]
  %v2314 = vld [vmem:[%s4 + $0xf] sm:$0x1]
  %v2315 = vperm.slane %v2314, 0
  %v2317 = vsel %vm38, %v2306, 0
  %2319 = vmatpush.msra.mxu0 0.0
  %2320 = vmatpush.msra.mxu0 0.0
  %2321 = vmatpush.msra.mxu0 0.0
  %2322 = vmatpush.msra.mxu0 0.0
  %2323 = vmatpush.msra.mxu0 0.0
  %2324 = vmatpush.msra.mxu0 0.0
  %2325 = vmatpush.msra.mxu0 0.0
  %2326 = vmatpush.msra.mxu0 0.0
  %2327 = vmatpush.msra.mxu0 0.0
  %2328 = vmatpush.msra.mxu0 0.0
  %2329 = vmatpush.msra.mxu0 %v2313
  %2330 = vmatpush.msra.mxu0 %v2312
  %2331 = vmatpush.msra.mxu0 %v2311
  %2332 = vmatpush.msra.mxu0 %v2310
  %2333 = vmatpush.msra.mxu0 %v2309
  %2334 = vmatpush.msra.mxu0 %v2308
  %2335 = vmatmul.f32.gmra.mxu0 %v2317
  %v2336 = vpop.f32.mrf.mxu0
  %v2337 = vadd.f32 %v2315, %v2336
  %2338 = vdwg.mxu0
  %v2339 = vadd.f32 %v2273, %v2337
  %v2340 = vld [vmem:[%s4 + $0x12] sm:$0x1]
  %v2341 = vld [vmem:[%s4 + $0x13] sm:$0x1]
  %v2343 = vsel %vm38, %v2339, 0
  %2345 = vmatpush.msra.mxu0 0.0
  %2346 = vmatpush.msra.mxu0 0.0
  %2347 = vmatpush.msra.mxu0 0.0
  %2348 = vmatpush.msra.mxu0 0.0
  %2349 = vmatpush.msra.mxu0 0.0
  %2350 = vmatpush.msra.mxu0 0.0
  %2351 = vmatpush.msra.mxu0 0.0
  %2352 = vmatpush.msra.mxu0 0.0
  %2353 = vmatpush.msra.mxu0 0.0
  %2354 = vmatpush.msra.mxu0 0.0
  %2355 = vmatpush.msra.mxu0 %v29
  %2356 = vmatpush.msra.mxu0 %v28
  %2357 = vmatpush.msra.mxu0 %v27
  %2358 = vmatpush.msra.mxu0 %v26
  %2359 = vmatpush.msra.mxu0 %v25
  %2360 = vmatpush.msra.mxu0 %v24
  %2361 = vmatmul.f32.gmra.mxu0 %v2343
  %v2362 = vpop.f32.mrf.mxu0
  %v2363 = vadd.f32 0.0, %v2362
  %2364 = vdwg.mxu0
  %v2365 = vsub.f32 %v2339, %v2363
  %v2366 = vmul.f32 %v2365, %v2365
  %v2368 = vsel %vm38, %v2366, 0
  %2370 = vmatpush.msra.mxu0 0.0
  %2371 = vmatpush.msra.mxu0 0.0
  %2372 = vmatpush.msra.mxu0 0.0
  %2373 = vmatpush.msra.mxu0 0.0
  %2374 = vmatpush.msra.mxu0 0.0
  %2375 = vmatpush.msra.mxu0 0.0
  %2376 = vmatpush.msra.mxu0 0.0
  %2377 = vmatpush.msra.mxu0 0.0
  %2378 = vmatpush.msra.mxu0 0.0
  %2379 = vmatpush.msra.mxu0 0.0
  %2380 = vmatpush.msra.mxu0 %v29
  %2381 = vmatpush.msra.mxu0 %v28
  %2382 = vmatpush.msra.mxu0 %v27
  %2383 = vmatpush.msra.mxu0 %v26
  %2384 = vmatpush.msra.mxu0 %v25
  %2385 = vmatpush.msra.mxu0 %v24
  %2386 = vmatmul.f32.gmra.mxu0 %v2368
  %v2387 = vpop.f32.mrf.mxu0
  %v2388 = vadd.f32 1e-05, %v2387
  %2389 = vdwg.mxu0
  %v2390 = vrsqrt.pop %v2388
  %v2391 = vmul.f32 %v2390, %v2388
  %v2392 = vmul.f32 %v2391, %v2390
  %v2393 = vmul.f32 0.5, %v2392
  %v2394 = vsub.f32 1.5, %v2393
  %v2395 = vmul.f32 %v2390, %v2394
  %vm2396 = vweird.f32 %v2388
  %vm2397 = vweird.f32 %v2390
  %vm2398 = vmor %vm2396, %vm2397
  %v2399 = vsel %vm2398, %v2390, %v2395
  %v2400 = vmul.f32 %v2365, %v2399
  %v2401 = vperm.slane %v2340, 0
  %v2402 = vmul.f32 %v2400, %v2401
  %v2403 = vperm.slane %v2341, 0
  %v2404 = vadd.f32 %v2402, %v2403
  %s2405 = scalar_lea.vmem %s5, 2
  %v2406 = vld [vmem:[%s2405] ss:$8 sm:$0x3]
  %v2407 = vld [vmem:[%s3] sm:$0xff]
  %v2408 = vld [vmem:[%s3 + $0x8] sm:$0xff]
  %v2409 = vld [vmem:[%s3 + $0x10] sm:$0xff]
  %v2410 = vld [vmem:[%s3 + $0x18] sm:$0xff]
  %v2411 = vld [vmem:[%s3 + $0x20] sm:$0xff]
  %v2412 = vld [vmem:[%s3 + $0x28] sm:$0xff]
  %v2414 = vsel %vm38, %v2404, 0
  %2416 = vmatpush.msra.mxu0 0.0
  %2417 = vmatpush.msra.mxu0 0.0
  %2418 = vmatpush.msra.mxu0 0.0
  %2419 = vmatpush.msra.mxu0 0.0
  %2420 = vmatpush.msra.mxu0 0.0
  %2421 = vmatpush.msra.mxu0 0.0
  %2422 = vmatpush.msra.mxu0 0.0
  %2423 = vmatpush.msra.mxu0 0.0
  %2424 = vmatpush.msra.mxu0 0.0
  %2425 = vmatpush.msra.mxu0 0.0
  %2426 = vmatpush.msra.mxu0 %v2412
  %2427 = vmatpush.msra.mxu0 %v2411
  %2428 = vmatpush.msra.mxu0 %v2410
  %2429 = vmatpush.msra.mxu0 %v2409
  %2430 = vmatpush.msra.mxu0 %v2408
  %2431 = vmatpush.msra.mxu0 %v2407
  %2432 = vmatmul.f32.gmra.mxu0 %v2414
  %v2433 = vpop.f32.mrf.mxu0
  %v2434 = vadd.f32 0.0, %v2433
  %2435 = vdwg.mxu0
  %v2437 = vperm.slane %v2406, 0
  %v2439 = vadd.f32 %v2437, %v2434
  %s2440 = scalar_lea.vmem %s3, 48
  %v2441 = vld [vmem:[%s2440] sm:$0xff]
  %v2442 = vld [vmem:[%s2440 + $0x8] sm:$0xff]
  %v2443 = vld [vmem:[%s2440 + $0x10] sm:$0xff]
  %v2444 = vld [vmem:[%s2440 + $0x18] sm:$0xff]
  %v2445 = vld [vmem:[%s2440 + $0x20] sm:$0xff]
  %v2446 = vld [vmem:[%s2440 + $0x28] sm:$0xff]
  %v2447 = vrot.slane %v2404, 2
  %v2448 = vsel %vm38, %v2447, 0
  %2450 = vmatpush.msra.mxu0 0.0
  %2451 = vmatpush.msra.mxu0 0.0
  %2452 = vmatpush.msra.mxu0 0.0
  %2453 = vmatpush.msra.mxu0 0.0
  %2454 = vmatpush.msra.mxu0 0.0
  %2455 = vmatpush.msra.mxu0 0.0
  %2456 = vmatpush.msra.mxu0 0.0
  %2457 = vmatpush.msra.mxu0 0.0
  %2458 = vmatpush.msra.mxu0 0.0
  %2459 = vmatpush.msra.mxu0 0.0
  %2460 = vmatpush.msra.mxu0 %v2446
  %2461 = vmatpush.msra.mxu0 %v2445
  %2462 = vmatpush.msra.mxu0 %v2444
  %2463 = vmatpush.msra.mxu0 %v2443
  %2464 = vmatpush.msra.mxu0 %v2442
  %2465 = vmatpush.msra.mxu0 %v2441
  %2466 = vmatmul.f32.gmra.mxu0 %v2448
  %v2467 = vpop.f32.mrf.mxu0
  %v2468 = vadd.f32 0.0, %v2467
  %2469 = vdwg.mxu0
  %v2470 = vadd.f32 %v2439, %v2468
  %s2471 = scalar_lea.vmem %s3, 96
  %v2472 = vld [vmem:[%s2471] sm:$0xff]
  %v2473 = vld [vmem:[%s2471 + $0x8] sm:$0xff]
  %v2474 = vld [vmem:[%s2471 + $0x10] sm:$0xff]
  %v2475 = vld [vmem:[%s2471 + $0x18] sm:$0xff]
  %v2476 = vld [vmem:[%s2471 + $0x20] sm:$0xff]
  %v2477 = vld [vmem:[%s2471 + $0x28] sm:$0xff]
  %v2478 = vrot.slane %v2404, 4
  %v2479 = vsel %vm38, %v2478, 0
  %2481 = vmatpush.msra.mxu0 0.0
  %2482 = vmatpush.msra.mxu0 0.0
  %2483 = vmatpush.msra.mxu0 0.0
  %2484 = vmatpush.msra.mxu0 0.0
  %2485 = vmatpush.msra.mxu0 0.0
  %2486 = vmatpush.msra.mxu0 0.0
  %2487 = vmatpush.msra.mxu0 0.0
  %2488 = vmatpush.msra.mxu0 0.0
  %2489 = vmatpush.msra.mxu0 0.0
  %2490 = vmatpush.msra.mxu0 0.0
  %2491 = vmatpush.msra.mxu0 %v2477
  %2492 = vmatpush.msra.mxu0 %v2476
  %2493 = vmatpush.msra.mxu0 %v2475
  %2494 = vmatpush.msra.mxu0 %v2474
  %2495 = vmatpush.msra.mxu0 %v2473
  %2496 = vmatpush.msra.mxu0 %v2472
  %2497 = vmatmul.f32.gmra.mxu0 %v2479
  %v2498 = vpop.f32.mrf.mxu0
  %v2499 = vadd.f32 0.0, %v2498
  %2500 = vdwg.mxu0
  %v2501 = vadd.f32 %v2470, %v2499
  %vm2502 = vcmask 779264
  %2503 = vst.msk [vmem:[%s6] sm:$0x3] %vm2502, %v2501
  // Predicated region
  $region26: #{forward.1} parent=0 // pred_check
    _
  $region27: #{forward.1} parent=0 // pred_check_branch
    %2505 = sbr.rel (0) target = $region29
  $region28: #{forward.1} parent=0 // pred_region
    _
  $region29: #{forward.1} parent=0 // pred_fallthru
    _
  // Predicated region
  $region30: #{forward.1} parent=0 // pred_check
    _
  $region31: #{forward.1} parent=0 // pred_check_branch
    %2507 = sbr.rel (0) target = $region33
  $region32: #{forward.1} parent=0 // pred_region
    _
  $region33: #{forward.1} parent=0 // pred_fallthru
    _

</llo_original>
